<compile_context>
chip_gen: v6e
topology: v6e:2x2x1
jax: 0.10.0
libtpu: 0.0.40
codegen_flags: <defaults>
</compile_context>

<pallas_src>
import functools

import jax
import jax.numpy as jnp
from jax.experimental import pallas as pl
from jax.experimental.pallas import tpu as pltpu

EPS = 1e-5  # CLIP layer_norm_eps


def _round_up(x, m):
    return (x + m - 1) // m * m


# ---------------------------------------------------------------------------
# In-kernel helpers
# ---------------------------------------------------------------------------

def _layernorm(x, g, b):
    # x: (rows, D) f32, g/b: (1, D) f32 -> f32
    mean = jnp.mean(x, axis=-1, keepdims=True)
    var = jnp.mean(jnp.square(x - mean), axis=-1, keepdims=True)
    return (x - mean) * jax.lax.rsqrt(var + EPS) * g + b


# ---------------------------------------------------------------------------
# The single fused kernel: grid = (B // Bt, num_layers)
#   l == 0        : patch matmul + cls/pos add + pre-LN  -> residual scratch
#   every l       : LN1 -> fused QKV -> per-head attention (+ per-head out-proj
#                   accumulation) -> residual -> LN2 -> FC1 -> QuickGELU -> FC2 -> residual
#   l == L - 1    : post-LN of the final residual -> output
# ---------------------------------------------------------------------------

def _clip_kernel(mask_ref, patches_ref, pw_ref, poscls_ref, pre_g_ref, pre_b_ref,
                 ln1_g_ref, ln1_b_ref, wqkv_ref, bqkv_ref, wo_ref, bo_ref,
                 ln2_g_ref, ln2_b_ref, w1_ref, b1_ref, w2_ref, b2_ref,
                 post_g_ref, post_b_ref,
                 o_ref,
                 resid_ref, qkv_ref,
                 *, num_heads, head_dim, batch_tile, s_pad):
    d = num_heads * head_dim
    l = pl.program_id(1)

    # ---- embedding + pre-LN (only on the first layer iteration) ----
    @pl.when(l == 0)
    def _():
        p = patches_ref[...].reshape(batch_tile * s_pad, -1)
        x0 = jnp.dot(p.astype(jnp.bfloat16), pw_ref[...],
                     preferred_element_type=jnp.float32)
        x0 = (x0.reshape(batch_tile, s_pad, d) + poscls_ref[...][None]
              ).reshape(batch_tile * s_pad, d)
        resid_ref[...] = _layernorm(x0, pre_g_ref[...], pre_b_ref[...])

    x = resid_ref[...]                                   # (Bt*S_pad, D) f32 residual

    # ---- attention block: LN1 + fused QKV projection (scale folded into wqkv) ----
    h = _layernorm(x, ln1_g_ref[...], ln1_b_ref[...])
    qkv = jnp.dot(h.astype(jnp.bfloat16), wqkv_ref[...],
                  preferred_element_type=jnp.float32) + bqkv_ref[...]
    qkv_ref[...] = qkv.astype(jnp.bfloat16)              # bf16 scratch, cast once

    mask = mask_ref[...]                                  # (1, S_pad) additive key mask
    attn_parts = []
    for i in range(batch_tile):                           # attention is per-image
        r0 = i * s_pad
        acc = jnp.zeros((s_pad, d), jnp.float32)
        for hh in range(num_heads):
            lo = hh * head_dim
            q = qkv_ref[r0:r0 + s_pad, lo:lo + head_dim]                  # bf16
            k = qkv_ref[r0:r0 + s_pad, d + lo:d + lo + head_dim]
            v = qkv_ref[r0:r0 + s_pad, 2 * d + lo:2 * d + lo + head_dim]

            s = jax.lax.dot_general(q, k, (((1,), (1,)), ((), ())),
                                    preferred_element_type=jnp.float32)   # (S_pad,S_pad)
            s = s + mask
            m = jnp.max(s, axis=-1, keepdims=True)
            p = jnp.exp(s - m)
            inv_l = pl.reciprocal(jnp.sum(p, axis=-1, keepdims=True), approx=True)
            o_h = jnp.dot(p.astype(jnp.bfloat16), v,
                          preferred_element_type=jnp.float32) * inv_l
            # per-head output projection -> lane-dense (S_pad, D) accumulation
            acc = acc + jnp.dot(o_h.astype(jnp.bfloat16),
                                wo_ref[lo:lo + head_dim, :],
                                preferred_element_type=jnp.float32)
        attn_parts.append(acc)
    attn = attn_parts[0] if batch_tile == 1 else jnp.concatenate(attn_parts, axis=0)
    x = x + attn + bo_ref[...]                            # residual

    # ---- MLP block: LN2 + FC1 + QuickGELU + FC2 ----
    h2 = _layernorm(x, ln2_g_ref[...], ln2_b_ref[...])
    f = jnp.dot(h2.astype(jnp.bfloat16), w1_ref[...],
                preferred_element_type=jnp.float32) + b1_ref[...]
    f = f * jax.nn.sigmoid(1.702 * f)                     # QuickGELU (f32, EUP)
    f = jnp.dot(f.astype(jnp.bfloat16), w2_ref[...],
                preferred_element_type=jnp.float32) + b2_ref[...]
    x = x + f                                             # residual
    resid_ref[...] = x

    # ---- post_layernorm(last_hidden_state) on the final layer iteration ----
    @pl.when(l == pl.num_programs(1) - 1)
    def _():
        o_ref[...] = _layernorm(x, post_g_ref[...], post_b_ref[...]).reshape(
            batch_tile, s_pad, d)


# ---------------------------------------------------------------------------
# Deterministic synthetic CLIP vision parameters (lane-dense sizes)
# ---------------------------------------------------------------------------

CFG = dict(channels=3, image=32, patch=8, hidden=128, heads=4, intermediate=512, layers=2)


def init_params(key, cfg):
    C, P, D, I = cfg['channels'], cfg['patch'], cfg['hidden'], cfg['intermediate']
    n_pos = (cfg['image'] // P) ** 2 + 1
    keys = iter(jax.random.split(key, 64))

    def rnd(shape, scale=0.02):
        return scale * jax.random.normal(next(keys), shape, dtype=jnp.float32)

    params = dict(
        patch_w=rnd((C * P * P, D)),              # conv-as-matmul weight (bias-free in CLIP)
        class_emb=rnd((D,)),
        pos_emb=rnd((n_pos, D)),
        pre_ln_g=jnp.ones((1, D), jnp.float32), pre_ln_b=jnp.zeros((1, D), jnp.float32),
        post_ln_g=jnp.ones((1, D), jnp.float32), post_ln_b=jnp.zeros((1, D), jnp.float32),
        layers=[],
    )
    for _ in range(cfg['layers']):
        params['layers'].append(dict(
            ln1_g=jnp.ones((1, D), jnp.float32), ln1_b=jnp.zeros((1, D), jnp.float32),
            wqkv=rnd((D, 3 * D)), bqkv=rnd((1, 3 * D)),     # fused q|k|v projection
            o_w=rnd((D, D)), o_b=rnd((1, D)),
            ln2_g=jnp.ones((1, D), jnp.float32), ln2_b=jnp.zeros((1, D), jnp.float32),
            fc1_w=rnd((D, I)), fc1_b=rnd((1, I)),
            fc2_w=rnd((I, D)), fc2_b=rnd((1, D)),
        ))
    return params


def _prepare_stacked_params(params, cfg):
    """Stack per-layer weights along a leading L axis; fold the attention scale into Q."""
    D, nH = cfg['hidden'], cfg['heads']
    scale = (D // nH) ** -0.5

    def stack(name):
        return jnp.stack([lyr[name] for lyr in params['layers']])

    wqkv = stack('wqkv')                           # (L, D, 3D) f32
    bqkv = stack('bqkv')                           # (L, 1, 3D) f32
    wqkv = wqkv.at[:, :, :D].multiply(scale)       # fold 1/sqrt(Dh) into Q (in f32)
    bqkv = bqkv.at[:, :, :D].multiply(scale)

    return dict(
        ln1_g=stack('ln1_g'), ln1_b=stack('ln1_b'),
        wqkv=wqkv.astype(jnp.bfloat16), bqkv=bqkv,
        wo=stack('o_w').astype(jnp.bfloat16), bo=stack('o_b'),
        ln2_g=stack('ln2_g'), ln2_b=stack('ln2_b'),
        w1=stack('fc1_w').astype(jnp.bfloat16), b1=stack('fc1_b'),
        w2=stack('fc2_w').astype(jnp.bfloat16), b2=stack('fc2_b'),
    )


def _pick_batch_tile(batch, s_pad):
    # Enough rows per grid step to feed the MXU (target >=128 LHS rows) while keeping
    # at least 2 grid steps on the batch axis so v7x megacore can still split work.
    target = max(1, -(-128 // s_pad))
    bt = min(target, batch)
    while bt > 1 and (batch % bt != 0 or batch // bt < 2):
        bt -= 1
    return bt


# ---------------------------------------------------------------------------
# Forward pass == CLIP_Image_Extractor.forward:
#   post_layernorm(vision_model(image).last_hidden_state)
# ---------------------------------------------------------------------------

def clip_image_extractor_forward(image, params, cfg, batch_tile=None):
    B, C, H, W = image.shape
    P, D, nH, I, L = cfg['patch'], cfg['hidden'], cfg['heads'], cfg['intermediate'], cfg['layers']
    Dh = D // nH
    nph, npw = H // P, W // P
    nP = nph * npw
    S = nP + 1
    S_pad = _round_up(S, 8)
    CPP = C * P * P

    bt = batch_tile or _pick_batch_tile(B, S_pad)
    assert B % bt == 0

    # --- one-time im2col of the NCHW image (tiny vs transformer work) ---
    patches = image.reshape(B, C, nph, P, npw, P)
    patches = patches.transpose(0, 2, 4, 1, 3, 5).reshape(B, nP, CPP)
    # row 0 (class token slot) and padded rows stay zero
    patches_padded = jnp.zeros((B, S_pad, CPP), jnp.float32).at[:, 1:1 + nP].set(patches)

    # class embedding folded into row 0 of a padded position embedding
    poscls = jnp.zeros((S_pad, D), jnp.float32).at[:S].set(params['pos_emb'])
    poscls = poscls.at[0].add(params['class_emb'])

    # additive key mask: 0 for valid keys, -1e30 for padded key positions
    mask_row = jnp.where(jnp.arange(S_pad)[None, :] < S, 0.0, -1e30).astype(jnp.float32)

    stk = _prepare_stacked_params(params, cfg)

    def shared(shape):                 # weights shared by every grid step
        nd = len(shape)
        return pl.BlockSpec(shape, lambda b, l, _nd=nd: (0,) * _nd)

    def per_layer(shape):              # stacked (L, ...) weights, one slab per layer
        nd = len(shape)
        return pl.BlockSpec((None,) + shape, lambda b, l, _nd=nd: (l,) + (0,) * _nd)

    kernel = functools.partial(_clip_kernel, num_heads=nH, head_dim=Dh,
                               batch_tile=bt, s_pad=S_pad)

    out = pl.pallas_call(
        kernel,
        out_shape=jax.ShapeDtypeStruct((B, S_pad, D), jnp.float32),
        grid=(B // bt, L),
        in_specs=[
            shared((1, S_pad)),                                       # key mask row
            pl.BlockSpec((bt, S_pad, CPP), lambda b, l: (b, 0, 0)),   # patches
            shared((CPP, D)),                                         # patch weight
            shared((S_pad, D)),                                       # pos+cls embedding
            shared((1, D)), shared((1, D)),                           # pre-LN
            per_layer((1, D)), per_layer((1, D)),                     # ln1
            per_layer((D, 3 * D)), per_layer((1, 3 * D)),             # fused qkv
            per_layer((D, D)), per_layer((1, D)),                     # out proj
            per_layer((1, D)), per_layer((1, D)),                     # ln2
            per_layer((D, I)), per_layer((1, I)),                     # fc1
            per_layer((I, D)), per_layer((1, D)),                     # fc2
            shared((1, D)), shared((1, D)),                           # post-LN
        ],
        out_specs=pl.BlockSpec((bt, S_pad, D), lambda b, l: (b, 0, 0)),
        scratch_shapes=[pltpu.VMEM((bt * S_pad, D), jnp.float32),        # residual stream
                        pltpu.VMEM((bt * S_pad, 3 * D), jnp.bfloat16)],  # fused qkv
        compiler_params=pltpu.CompilerParams(
            dimension_semantics=("parallel", "arbitrary")),
    )(mask_row, patches_padded, params['patch_w'].astype(jnp.bfloat16), poscls,
      params['pre_ln_g'], params['pre_ln_b'],
      stk['ln1_g'], stk['ln1_b'], stk['wqkv'], stk['bqkv'],
      stk['wo'], stk['bo'], stk['ln2_g'], stk['ln2_b'],
      stk['w1'], stk['b1'], stk['w2'], stk['b2'],
      params['post_ln_g'], params['post_ln_b'])

    # drop the sequence padding (tiny XLA slice copy)
    return out[:, :S, :]


if __name__ == "__main__":
    key = jax.random.PRNGKey(0)
    k_img, k_par = jax.random.split(key)

    B = 4  # exercises batch_tile=2 (rows batched for the MXU) with 2 megacore grid steps
    image = jax.random.normal(k_img, (B, CFG['channels'], CFG['image'], CFG['image']),
                              dtype=jnp.float32)
    params = init_params(k_par, CFG)

    fwd = jax.jit(functools.partial(clip_image_extractor_forward, cfg=CFG))
    out = jax.block_until_ready(fwd(image, params))

    expected_seq = (CFG['image'] // CFG['patch']) ** 2 + 1
    assert out.shape == (B, expected_seq, CFG['hidden']), out.shape
    assert bool(jnp.all(jnp.isfinite(out)))
    print("KERNEL_OK")
</pallas_src>

<mosaic_0001>
module attributes {stable_mosaic.version = 11 : i64} {
  func.func @_clip_kernel(%arg0: i32, %arg1: i32, %arg2: memref<1x24xf32, #tpu.memory_space<vmem>>, %arg3: memref<2x24x192xf32, #tpu.memory_space<vmem>>, %arg4: memref<192x128xbf16, #tpu.memory_space<vmem>>, %arg5: memref<24x128xf32, #tpu.memory_space<vmem>>, %arg6: memref<1x128xf32, #tpu.memory_space<vmem>>, %arg7: memref<1x128xf32, #tpu.memory_space<vmem>>, %arg8: memref<1x1x128xf32, #tpu.memory_space<vmem>>, %arg9: memref<1x1x128xf32, #tpu.memory_space<vmem>>, %arg10: memref<1x128x384xbf16, #tpu.memory_space<vmem>>, %arg11: memref<1x1x384xf32, #tpu.memory_space<vmem>>, %arg12: memref<1x128x128xbf16, #tpu.memory_space<vmem>>, %arg13: memref<1x1x128xf32, #tpu.memory_space<vmem>>, %arg14: memref<1x1x128xf32, #tpu.memory_space<vmem>>, %arg15: memref<1x1x128xf32, #tpu.memory_space<vmem>>, %arg16: memref<1x128x512xbf16, #tpu.memory_space<vmem>>, %arg17: memref<1x1x512xf32, #tpu.memory_space<vmem>>, %arg18: memref<1x512x128xbf16, #tpu.memory_space<vmem>>, %arg19: memref<1x1x128xf32, #tpu.memory_space<vmem>>, %arg20: memref<1x128xf32, #tpu.memory_space<vmem>>, %arg21: memref<1x128xf32, #tpu.memory_space<vmem>>, %arg22: memref<2x24x128xf32, #tpu.memory_space<vmem>>, %arg23: memref<48x128xf32, #tpu.memory_space<vmem>>, %arg24: memref<48x384xbf16, #tpu.memory_space<vmem>>) attributes {dimension_semantics = [#tpu.dimension_semantics<parallel>, #tpu.dimension_semantics<arbitrary>], iteration_bounds = array<i64: 2, 2>, scalar_prefetch = 0 : i64, scratch_operands = 2 : i64, tpu.core_type = #tpu.core_type<tc>, window_params = [{pipeline_mode = #tpu.pipeline_mode<synchronous>, transform_indices = @transform_0, window_bounds = array<i64: 1, 24>}, {transform_indices = @transform_1, window_bounds = array<i64: 2, 24, 192>}, {pipeline_mode = #tpu.pipeline_mode<synchronous>, transform_indices = @transform_2, window_bounds = array<i64: 192, 128>}, {pipeline_mode = #tpu.pipeline_mode<synchronous>, transform_indices = @transform_3, window_bounds = array<i64: 24, 128>}, {pipeline_mode = #tpu.pipeline_mode<synchronous>, transform_indices = @transform_4, window_bounds = array<i64: 1, 128>}, {pipeline_mode = #tpu.pipeline_mode<synchronous>, transform_indices = @transform_5, window_bounds = array<i64: 1, 128>}, {transform_indices = @transform_6, window_bounds = array<i64: 1, 1, 128>}, {transform_indices = @transform_7, window_bounds = array<i64: 1, 1, 128>}, {transform_indices = @transform_8, window_bounds = array<i64: 1, 128, 384>}, {transform_indices = @transform_9, window_bounds = array<i64: 1, 1, 384>}, {transform_indices = @transform_10, window_bounds = array<i64: 1, 128, 128>}, {transform_indices = @transform_11, window_bounds = array<i64: 1, 1, 128>}, {transform_indices = @transform_12, window_bounds = array<i64: 1, 1, 128>}, {transform_indices = @transform_13, window_bounds = array<i64: 1, 1, 128>}, {transform_indices = @transform_14, window_bounds = array<i64: 1, 128, 512>}, {transform_indices = @transform_15, window_bounds = array<i64: 1, 1, 512>}, {transform_indices = @transform_16, window_bounds = array<i64: 1, 512, 128>}, {transform_indices = @transform_17, window_bounds = array<i64: 1, 1, 128>}, {pipeline_mode = #tpu.pipeline_mode<synchronous>, transform_indices = @transform_18, window_bounds = array<i64: 1, 128>}, {pipeline_mode = #tpu.pipeline_mode<synchronous>, transform_indices = @transform_19, window_bounds = array<i64: 1, 128>}, {transform_indices = @transform_20, window_bounds = array<i64: 2, 24, 128>}]} {
    %c0_i32 = arith.constant 0 : i32
    %0 = arith.cmpi eq, %arg1, %c0_i32 : i32
    %1 = arith.extui %0 : i1 to i32
    %c0_i32_0 = arith.constant 0 : i32
    %2 = arith.cmpi ne, %1, %c0_i32_0 : i32
    scf.if %2 {
      %c0_158 = arith.constant 0 : index
      %c0_159 = arith.constant 0 : index
      %c0_160 = arith.constant 0 : index
      %288 = vector.load %arg3[%c0_158, %c0_159, %c0_160] : memref<2x24x192xf32, #tpu.memory_space<vmem>>, vector<2x24x192xf32>
      %289 = vector.shape_cast %288 : vector<2x24x192xf32> to vector<48x192xf32>
      %290 = arith.truncf %289 : vector<48x192xf32> to vector<48x192xbf16>
      %c0_161 = arith.constant 0 : index
      %c0_162 = arith.constant 0 : index
      %291 = vector.load %arg4[%c0_161, %c0_162] : memref<192x128xbf16, #tpu.memory_space<vmem>>, vector<192x128xbf16>
      %cst_163 = arith.constant dense<0.000000e+00> : vector<48x128xf32>
      %292 = tpu.matmul %290, %291, %cst_163 {dimension_numbers = #tpu.dot_dimension_numbers<[1], [0], [0], [1], [0, 0, 1, 1], [], []>} : vector<48x192xbf16>, vector<192x128xbf16>, vector<48x128xf32> -> vector<48x128xf32>
      %293 = vector.shape_cast %292 : vector<48x128xf32> to vector<2x24x128xf32>
      %c0_164 = arith.constant 0 : index
      %c0_165 = arith.constant 0 : index
      %294 = vector.load %arg5[%c0_164, %c0_165] : memref<24x128xf32, #tpu.memory_space<vmem>>, vector<24x128xf32>
      %295 = vector.shape_cast %294 : vector<24x128xf32> to vector<1x24x128xf32>
      %296 = vector.broadcast %295 : vector<1x24x128xf32> to vector<2x24x128xf32>
      %297 = arith.addf %293, %296 : vector<2x24x128xf32>
      %298 = vector.shape_cast %297 : vector<2x24x128xf32> to vector<48x128xf32>
      %c0_166 = arith.constant 0 : index
      %c0_167 = arith.constant 0 : index
      %299 = vector.load %arg6[%c0_166, %c0_167] : memref<1x128xf32, #tpu.memory_space<vmem>>, vector<1x128xf32>
      %c0_168 = arith.constant 0 : index
      %c0_169 = arith.constant 0 : index
      %300 = vector.load %arg7[%c0_168, %c0_169] : memref<1x128xf32, #tpu.memory_space<vmem>>, vector<1x128xf32>
      %cst_170 = arith.constant dense<0.000000e+00> : vector<48xf32>
      %301 = vector.multi_reduction <add>, %298, %cst_170 [1] : vector<48x128xf32> to vector<48xf32>
      %302 = vector.shape_cast %301 : vector<48xf32> to vector<48x1xf32>
      %cst_171 = arith.constant 1.280000e+02 : f32
      %303 = vector.broadcast %cst_171 : f32 to vector<48x1xf32>
      %304 = arith.divf %302, %303 : vector<48x1xf32>
      %305 = vector.broadcast %304 : vector<48x1xf32> to vector<48x128xf32>
      %306 = arith.subf %298, %305 : vector<48x128xf32>
      %307 = arith.mulf %306, %306 : vector<48x128xf32>
      %cst_172 = arith.constant dense<0.000000e+00> : vector<48xf32>
      %308 = vector.multi_reduction <add>, %307, %cst_172 [1] : vector<48x128xf32> to vector<48xf32>
      %309 = vector.shape_cast %308 : vector<48xf32> to vector<48x1xf32>
      %cst_173 = arith.constant 1.280000e+02 : f32
      %310 = vector.broadcast %cst_173 : f32 to vector<48x1xf32>
      %311 = arith.divf %309, %310 : vector<48x1xf32>
      %312 = vector.broadcast %304 : vector<48x1xf32> to vector<48x128xf32>
      %313 = arith.subf %298, %312 : vector<48x128xf32>
      %cst_174 = arith.constant 9.99999974E-6 : f32
      %314 = vector.broadcast %cst_174 : f32 to vector<48x1xf32>
      %315 = arith.addf %311, %314 : vector<48x1xf32>
      %316 = math.rsqrt %315 : vector<48x1xf32>
      %317 = vector.broadcast %316 : vector<48x1xf32> to vector<48x128xf32>
      %318 = arith.mulf %313, %317 : vector<48x128xf32>
      %319 = vector.broadcast %299 : vector<1x128xf32> to vector<48x128xf32>
      %320 = arith.mulf %318, %319 : vector<48x128xf32>
      %321 = vector.broadcast %300 : vector<1x128xf32> to vector<48x128xf32>
      %322 = arith.addf %320, %321 : vector<48x128xf32>
      %c0_175 = arith.constant 0 : index
      %c0_176 = arith.constant 0 : index
      %323 = vector.load %arg23[%c0_175, %c0_176] : memref<48x128xf32, #tpu.memory_space<vmem>>, vector<48x128xf32>
      tpu.vector_store %arg23[%c0_175, %c0_176], %322 {strides = array<i32>} : memref<48x128xf32, #tpu.memory_space<vmem>>, vector<48x128xf32>,
    } else {
    }
    %c0 = arith.constant 0 : index
    %c0_1 = arith.constant 0 : index
    %3 = vector.load %arg23[%c0, %c0_1] : memref<48x128xf32, #tpu.memory_space<vmem>>, vector<48x128xf32>
    %c0_2 = arith.constant 0 : index
    %c0_3 = arith.constant 0 : index
    %c0_4 = arith.constant 0 : index
    %4 = vector.load %arg8[%c0_2, %c0_3, %c0_4] : memref<1x1x128xf32, #tpu.memory_space<vmem>>, vector<1x1x128xf32>
    %5 = vector.shape_cast %4 : vector<1x1x128xf32> to vector<1x128xf32>
    %c0_5 = arith.constant 0 : index
    %c0_6 = arith.constant 0 : index
    %c0_7 = arith.constant 0 : index
    %6 = vector.load %arg9[%c0_5, %c0_6, %c0_7] : memref<1x1x128xf32, #tpu.memory_space<vmem>>, vector<1x1x128xf32>
    %7 = vector.shape_cast %6 : vector<1x1x128xf32> to vector<1x128xf32>
    %cst = arith.constant dense<0.000000e+00> : vector<48xf32>
    %8 = vector.multi_reduction <add>, %3, %cst [1] : vector<48x128xf32> to vector<48xf32>
    %9 = vector.shape_cast %8 : vector<48xf32> to vector<48x1xf32>
    %cst_8 = arith.constant 1.280000e+02 : f32
    %10 = vector.broadcast %cst_8 : f32 to vector<48x1xf32>
    %11 = arith.divf %9, %10 : vector<48x1xf32>
    %12 = vector.broadcast %11 : vector<48x1xf32> to vector<48x128xf32>
    %13 = arith.subf %3, %12 : vector<48x128xf32>
    %14 = arith.mulf %13, %13 : vector<48x128xf32>
    %cst_9 = arith.constant dense<0.000000e+00> : vector<48xf32>
    %15 = vector.multi_reduction <add>, %14, %cst_9 [1] : vector<48x128xf32> to vector<48xf32>
    %16 = vector.shape_cast %15 : vector<48xf32> to vector<48x1xf32>
    %cst_10 = arith.constant 1.280000e+02 : f32
    %17 = vector.broadcast %cst_10 : f32 to vector<48x1xf32>
    %18 = arith.divf %16, %17 : vector<48x1xf32>
    %19 = vector.broadcast %11 : vector<48x1xf32> to vector<48x128xf32>
    %20 = arith.subf %3, %19 : vector<48x128xf32>
    %cst_11 = arith.constant 9.99999974E-6 : f32
    %21 = vector.broadcast %cst_11 : f32 to vector<48x1xf32>
    %22 = arith.addf %18, %21 : vector<48x1xf32>
    %23 = math.rsqrt %22 : vector<48x1xf32>
    %24 = vector.broadcast %23 : vector<48x1xf32> to vector<48x128xf32>
    %25 = arith.mulf %20, %24 : vector<48x128xf32>
    %26 = vector.broadcast %5 : vector<1x128xf32> to vector<48x128xf32>
    %27 = arith.mulf %25, %26 : vector<48x128xf32>
    %28 = vector.broadcast %7 : vector<1x128xf32> to vector<48x128xf32>
    %29 = arith.addf %27, %28 : vector<48x128xf32>
    %30 = arith.truncf %29 : vector<48x128xf32> to vector<48x128xbf16>
    %c0_12 = arith.constant 0 : index
    %c0_13 = arith.constant 0 : index
    %c0_14 = arith.constant 0 : index
    %31 = vector.load %arg10[%c0_12, %c0_13, %c0_14] : memref<1x128x384xbf16, #tpu.memory_space<vmem>>, vector<1x128x384xbf16>
    %32 = vector.shape_cast %31 : vector<1x128x384xbf16> to vector<128x384xbf16>
    %cst_15 = arith.constant dense<0.000000e+00> : vector<48x384xf32>
    %33 = tpu.matmul %30, %32, %cst_15 {dimension_numbers = #tpu.dot_dimension_numbers<[1], [0], [0], [1], [0, 0, 1, 1], [], []>} : vector<48x128xbf16>, vector<128x384xbf16>, vector<48x384xf32> -> vector<48x384xf32>
    %c0_16 = arith.constant 0 : index
    %c0_17 = arith.constant 0 : index
    %c0_18 = arith.constant 0 : index
    %34 = vector.load %arg11[%c0_16, %c0_17, %c0_18] : memref<1x1x384xf32, #tpu.memory_space<vmem>>, vector<1x1x384xf32>
    %35 = vector.shape_cast %34 : vector<1x1x384xf32> to vector<1x384xf32>
    %36 = vector.broadcast %35 : vector<1x384xf32> to vector<48x384xf32>
    %37 = arith.addf %33, %36 : vector<48x384xf32>
    %38 = arith.truncf %37 : vector<48x384xf32> to vector<48x384xbf16>
    %c0_19 = arith.constant 0 : index
    %c0_20 = arith.constant 0 : index
    %39 = vector.load %arg24[%c0_19, %c0_20] : memref<48x384xbf16, #tpu.memory_space<vmem>>, vector<48x384xbf16>
    tpu.vector_store %arg24[%c0_19, %c0_20], %38 {strides = array<i32>} : memref<48x384xbf16, #tpu.memory_space<vmem>>, vector<48x384xbf16>,
    %c0_21 = arith.constant 0 : index
    %c0_22 = arith.constant 0 : index
    %40 = vector.load %arg2[%c0_21, %c0_22] : memref<1x24xf32, #tpu.memory_space<vmem>>, vector<1x24xf32>
    %cst_23 = arith.constant 0.000000e+00 : f32
    %41 = vector.broadcast %cst_23 : f32 to vector<24x128xf32>
    %c0_24 = arith.constant 0 : index
    %c0_25 = arith.constant 0 : index
    %42 = vector.load %arg24[%c0_24, %c0_25] : memref<48x384xbf16, #tpu.memory_space<vmem>>, vector<24x32xbf16>
    %c0_26 = arith.constant 0 : index
    %c128 = arith.constant 128 : index
    %43 = vector.load %arg24[%c0_26, %c128] : memref<48x384xbf16, #tpu.memory_space<vmem>>, vector<24x32xbf16>
    %c0_27 = arith.constant 0 : index
    %c256 = arith.constant 256 : index
    %44 = vector.load %arg24[%c0_27, %c256] : memref<48x384xbf16, #tpu.memory_space<vmem>>, vector<24x32xbf16>
    %cst_28 = arith.constant dense<0.000000e+00> : vector<24x24xf32>
    %45 = tpu.matmul %42, %43, %cst_28 {dimension_numbers = #tpu.dot_dimension_numbers<[1], [1], [0], [0], [0, 0, 1, 0], [], []>} : vector<24x32xbf16>, vector<24x32xbf16>, vector<24x24xf32> -> vector<24x24xf32>
    %46 = vector.broadcast %40 : vector<1x24xf32> to vector<24x24xf32>
    %47 = arith.addf %45, %46 : vector<24x24xf32>
    %cst_29 = arith.constant dense<0xFF800000> : vector<24xf32>
    %48 = vector.multi_reduction <maximumf>, %47, %cst_29 [1] : vector<24x24xf32> to vector<24xf32>
    %49 = vector.shape_cast %48 : vector<24xf32> to vector<24x1xf32>
    %50 = vector.broadcast %49 : vector<24x1xf32> to vector<24x24xf32>
    %51 = arith.subf %47, %50 : vector<24x24xf32>
    %52 = math.exp %51 : vector<24x24xf32>
    %cst_30 = arith.constant dense<0.000000e+00> : vector<24xf32>
    %53 = vector.multi_reduction <add>, %52, %cst_30 [1] : vector<24x24xf32> to vector<24xf32>
    %54 = vector.shape_cast %53 : vector<24xf32> to vector<24x1xf32>
    %55 = tpu.reciprocal %54 {approx = true} : vector<24x1xf32> -> vector<24x1xf32>
    %56 = arith.truncf %52 : vector<24x24xf32> to vector<24x24xbf16>
    %cst_31 = arith.constant dense<0.000000e+00> : vector<24x32xf32>
    %57 = tpu.matmul %56, %44, %cst_31 {dimension_numbers = #tpu.dot_dimension_numbers<[1], [0], [0], [1], [0, 0, 1, 1], [], []>} : vector<24x24xbf16>, vector<24x32xbf16>, vector<24x32xf32> -> vector<24x32xf32>
    %58 = vector.broadcast %55 : vector<24x1xf32> to vector<24x32xf32>
    %59 = arith.mulf %57, %58 : vector<24x32xf32>
    %60 = arith.truncf %59 : vector<24x32xf32> to vector<24x32xbf16>
    %c0_32 = arith.constant 0 : index
    %c0_33 = arith.constant 0 : index
    %c0_34 = arith.constant 0 : index
    %61 = vector.load %arg12[%c0_32, %c0_33, %c0_34] : memref<1x128x128xbf16, #tpu.memory_space<vmem>>, vector<1x32x128xbf16>
    %62 = vector.shape_cast %61 : vector<1x32x128xbf16> to vector<32x128xbf16>
    %cst_35 = arith.constant dense<0.000000e+00> : vector<24x128xf32>
    %63 = tpu.matmul %60, %62, %cst_35 {dimension_numbers = #tpu.dot_dimension_numbers<[1], [0], [0], [1], [0, 0, 1, 1], [], []>} : vector<24x32xbf16>, vector<32x128xbf16>, vector<24x128xf32> -> vector<24x128xf32>
    %64 = arith.addf %41, %63 : vector<24x128xf32>
    %c0_36 = arith.constant 0 : index
    %c32 = arith.constant 32 : index
    %65 = vector.load %arg24[%c0_36, %c32] : memref<48x384xbf16, #tpu.memory_space<vmem>>, vector<24x32xbf16>
    %c0_37 = arith.constant 0 : index
    %c160 = arith.constant 160 : index
    %66 = vector.load %arg24[%c0_37, %c160] : memref<48x384xbf16, #tpu.memory_space<vmem>>, vector<24x32xbf16>
    %c0_38 = arith.constant 0 : index
    %c288 = arith.constant 288 : index
    %67 = vector.load %arg24[%c0_38, %c288] : memref<48x384xbf16, #tpu.memory_space<vmem>>, vector<24x32xbf16>
    %cst_39 = arith.constant dense<0.000000e+00> : vector<24x24xf32>
    %68 = tpu.matmul %65, %66, %cst_39 {dimension_numbers = #tpu.dot_dimension_numbers<[1], [1], [0], [0], [0, 0, 1, 0], [], []>} : vector<24x32xbf16>, vector<24x32xbf16>, vector<24x24xf32> -> vector<24x24xf32>
    %69 = vector.broadcast %40 : vector<1x24xf32> to vector<24x24xf32>
    %70 = arith.addf %68, %69 : vector<24x24xf32>
    %cst_40 = arith.constant dense<0xFF800000> : vector<24xf32>
    %71 = vector.multi_reduction <maximumf>, %70, %cst_40 [1] : vector<24x24xf32> to vector<24xf32>
    %72 = vector.shape_cast %71 : vector<24xf32> to vector<24x1xf32>
    %73 = vector.broadcast %72 : vector<24x1xf32> to vector<24x24xf32>
    %74 = arith.subf %70, %73 : vector<24x24xf32>
    %75 = math.exp %74 : vector<24x24xf32>
    %cst_41 = arith.constant dense<0.000000e+00> : vector<24xf32>
    %76 = vector.multi_reduction <add>, %75, %cst_41 [1] : vector<24x24xf32> to vector<24xf32>
    %77 = vector.shape_cast %76 : vector<24xf32> to vector<24x1xf32>
    %78 = tpu.reciprocal %77 {approx = true} : vector<24x1xf32> -> vector<24x1xf32>
    %79 = arith.truncf %75 : vector<24x24xf32> to vector<24x24xbf16>
    %cst_42 = arith.constant dense<0.000000e+00> : vector<24x32xf32>
    %80 = tpu.matmul %79, %67, %cst_42 {dimension_numbers = #tpu.dot_dimension_numbers<[1], [0], [0], [1], [0, 0, 1, 1], [], []>} : vector<24x24xbf16>, vector<24x32xbf16>, vector<24x32xf32> -> vector<24x32xf32>
    %81 = vector.broadcast %78 : vector<24x1xf32> to vector<24x32xf32>
    %82 = arith.mulf %80, %81 : vector<24x32xf32>
    %83 = arith.truncf %82 : vector<24x32xf32> to vector<24x32xbf16>
    %c0_43 = arith.constant 0 : index
    %c32_44 = arith.constant 32 : index
    %c0_45 = arith.constant 0 : index
    %84 = vector.load %arg12[%c0_43, %c32_44, %c0_45] : memref<1x128x128xbf16, #tpu.memory_space<vmem>>, vector<1x32x128xbf16>
    %85 = vector.shape_cast %84 : vector<1x32x128xbf16> to vector<32x128xbf16>
    %cst_46 = arith.constant dense<0.000000e+00> : vector<24x128xf32>
    %86 = tpu.matmul %83, %85, %cst_46 {dimension_numbers = #tpu.dot_dimension_numbers<[1], [0], [0], [1], [0, 0, 1, 1], [], []>} : vector<24x32xbf16>, vector<32x128xbf16>, vector<24x128xf32> -> vector<24x128xf32>
    %87 = arith.addf %64, %86 : vector<24x128xf32>
    %c0_47 = arith.constant 0 : index
    %c64 = arith.constant 64 : index
    %88 = vector.load %arg24[%c0_47, %c64] : memref<48x384xbf16, #tpu.memory_space<vmem>>, vector<24x32xbf16>
    %c0_48 = arith.constant 0 : index
    %c192 = arith.constant 192 : index
    %89 = vector.load %arg24[%c0_48, %c192] : memref<48x384xbf16, #tpu.memory_space<vmem>>, vector<24x32xbf16>
    %c0_49 = arith.constant 0 : index
    %c320 = arith.constant 320 : index
    %90 = vector.load %arg24[%c0_49, %c320] : memref<48x384xbf16, #tpu.memory_space<vmem>>, vector<24x32xbf16>
    %cst_50 = arith.constant dense<0.000000e+00> : vector<24x24xf32>
    %91 = tpu.matmul %88, %89, %cst_50 {dimension_numbers = #tpu.dot_dimension_numbers<[1], [1], [0], [0], [0, 0, 1, 0], [], []>} : vector<24x32xbf16>, vector<24x32xbf16>, vector<24x24xf32> -> vector<24x24xf32>
    %92 = vector.broadcast %40 : vector<1x24xf32> to vector<24x24xf32>
    %93 = arith.addf %91, %92 : vector<24x24xf32>
    %cst_51 = arith.constant dense<0xFF800000> : vector<24xf32>
    %94 = vector.multi_reduction <maximumf>, %93, %cst_51 [1] : vector<24x24xf32> to vector<24xf32>
    %95 = vector.shape_cast %94 : vector<24xf32> to vector<24x1xf32>
    %96 = vector.broadcast %95 : vector<24x1xf32> to vector<24x24xf32>
    %97 = arith.subf %93, %96 : vector<24x24xf32>
    %98 = math.exp %97 : vector<24x24xf32>
    %cst_52 = arith.constant dense<0.000000e+00> : vector<24xf32>
    %99 = vector.multi_reduction <add>, %98, %cst_52 [1] : vector<24x24xf32> to vector<24xf32>
    %100 = vector.shape_cast %99 : vector<24xf32> to vector<24x1xf32>
    %101 = tpu.reciprocal %100 {approx = true} : vector<24x1xf32> -> vector<24x1xf32>
    %102 = arith.truncf %98 : vector<24x24xf32> to vector<24x24xbf16>
    %cst_53 = arith.constant dense<0.000000e+00> : vector<24x32xf32>
    %103 = tpu.matmul %102, %90, %cst_53 {dimension_numbers = #tpu.dot_dimension_numbers<[1], [0], [0], [1], [0, 0, 1, 1], [], []>} : vector<24x24xbf16>, vector<24x32xbf16>, vector<24x32xf32> -> vector<24x32xf32>
    %104 = vector.broadcast %101 : vector<24x1xf32> to vector<24x32xf32>
    %105 = arith.mulf %103, %104 : vector<24x32xf32>
    %106 = arith.truncf %105 : vector<24x32xf32> to vector<24x32xbf16>
    %c0_54 = arith.constant 0 : index
    %c64_55 = arith.constant 64 : index
    %c0_56 = arith.constant 0 : index
    %107 = vector.load %arg12[%c0_54, %c64_55, %c0_56] : memref<1x128x128xbf16, #tpu.memory_space<vmem>>, vector<1x32x128xbf16>
    %108 = vector.shape_cast %107 : vector<1x32x128xbf16> to vector<32x128xbf16>
    %cst_57 = arith.constant dense<0.000000e+00> : vector<24x128xf32>
    %109 = tpu.matmul %106, %108, %cst_57 {dimension_numbers = #tpu.dot_dimension_numbers<[1], [0], [0], [1], [0, 0, 1, 1], [], []>} : vector<24x32xbf16>, vector<32x128xbf16>, vector<24x128xf32> -> vector<24x128xf32>
    %110 = arith.addf %87, %109 : vector<24x128xf32>
    %c0_58 = arith.constant 0 : index
    %c96 = arith.constant 96 : index
    %111 = vector.load %arg24[%c0_58, %c96] : memref<48x384xbf16, #tpu.memory_space<vmem>>, vector<24x32xbf16>
    %c0_59 = arith.constant 0 : index
    %c224 = arith.constant 224 : index
    %112 = vector.load %arg24[%c0_59, %c224] : memref<48x384xbf16, #tpu.memory_space<vmem>>, vector<24x32xbf16>
    %c0_60 = arith.constant 0 : index
    %c352 = arith.constant 352 : index
    %113 = vector.load %arg24[%c0_60, %c352] : memref<48x384xbf16, #tpu.memory_space<vmem>>, vector<24x32xbf16>
    %cst_61 = arith.constant dense<0.000000e+00> : vector<24x24xf32>
    %114 = tpu.matmul %111, %112, %cst_61 {dimension_numbers = #tpu.dot_dimension_numbers<[1], [1], [0], [0], [0, 0, 1, 0], [], []>} : vector<24x32xbf16>, vector<24x32xbf16>, vector<24x24xf32> -> vector<24x24xf32>
    %115 = vector.broadcast %40 : vector<1x24xf32> to vector<24x24xf32>
    %116 = arith.addf %114, %115 : vector<24x24xf32>
    %cst_62 = arith.constant dense<0xFF800000> : vector<24xf32>
    %117 = vector.multi_reduction <maximumf>, %116, %cst_62 [1] : vector<24x24xf32> to vector<24xf32>
    %118 = vector.shape_cast %117 : vector<24xf32> to vector<24x1xf32>
    %119 = vector.broadcast %118 : vector<24x1xf32> to vector<24x24xf32>
    %120 = arith.subf %116, %119 : vector<24x24xf32>
    %121 = math.exp %120 : vector<24x24xf32>
    %cst_63 = arith.constant dense<0.000000e+00> : vector<24xf32>
    %122 = vector.multi_reduction <add>, %121, %cst_63 [1] : vector<24x24xf32> to vector<24xf32>
    %123 = vector.shape_cast %122 : vector<24xf32> to vector<24x1xf32>
    %124 = tpu.reciprocal %123 {approx = true} : vector<24x1xf32> -> vector<24x1xf32>
    %125 = arith.truncf %121 : vector<24x24xf32> to vector<24x24xbf16>
    %cst_64 = arith.constant dense<0.000000e+00> : vector<24x32xf32>
    %126 = tpu.matmul %125, %113, %cst_64 {dimension_numbers = #tpu.dot_dimension_numbers<[1], [0], [0], [1], [0, 0, 1, 1], [], []>} : vector<24x24xbf16>, vector<24x32xbf16>, vector<24x32xf32> -> vector<24x32xf32>
    %127 = vector.broadcast %124 : vector<24x1xf32> to vector<24x32xf32>
    %128 = arith.mulf %126, %127 : vector<24x32xf32>
    %129 = arith.truncf %128 : vector<24x32xf32> to vector<24x32xbf16>
    %c0_65 = arith.constant 0 : index
    %c96_66 = arith.constant 96 : index
    %c0_67 = arith.constant 0 : index
    %130 = vector.load %arg12[%c0_65, %c96_66, %c0_67] : memref<1x128x128xbf16, #tpu.memory_space<vmem>>, vector<1x32x128xbf16>
    %131 = vector.shape_cast %130 : vector<1x32x128xbf16> to vector<32x128xbf16>
    %cst_68 = arith.constant dense<0.000000e+00> : vector<24x128xf32>
    %132 = tpu.matmul %129, %131, %cst_68 {dimension_numbers = #tpu.dot_dimension_numbers<[1], [0], [0], [1], [0, 0, 1, 1], [], []>} : vector<24x32xbf16>, vector<32x128xbf16>, vector<24x128xf32> -> vector<24x128xf32>
    %133 = arith.addf %110, %132 : vector<24x128xf32>
    %cst_69 = arith.constant 0.000000e+00 : f32
    %134 = vector.broadcast %cst_69 : f32 to vector<24x128xf32>
    %c24 = arith.constant 24 : index
    %c0_70 = arith.constant 0 : index
    %135 = vector.load %arg24[%c24, %c0_70] : memref<48x384xbf16, #tpu.memory_space<vmem>>, vector<24x32xbf16>
    %c24_71 = arith.constant 24 : index
    %c128_72 = arith.constant 128 : index
    %136 = vector.load %arg24[%c24_71, %c128_72] : memref<48x384xbf16, #tpu.memory_space<vmem>>, vector<24x32xbf16>
    %c24_73 = arith.constant 24 : index
    %c256_74 = arith.constant 256 : index
    %137 = vector.load %arg24[%c24_73, %c256_74] : memref<48x384xbf16, #tpu.memory_space<vmem>>, vector<24x32xbf16>
    %cst_75 = arith.constant dense<0.000000e+00> : vector<24x24xf32>
    %138 = tpu.matmul %135, %136, %cst_75 {dimension_numbers = #tpu.dot_dimension_numbers<[1], [1], [0], [0], [0, 0, 1, 0], [], []>} : vector<24x32xbf16>, vector<24x32xbf16>, vector<24x24xf32> -> vector<24x24xf32>
    %139 = vector.broadcast %40 : vector<1x24xf32> to vector<24x24xf32>
    %140 = arith.addf %138, %139 : vector<24x24xf32>
    %cst_76 = arith.constant dense<0xFF800000> : vector<24xf32>
    %141 = vector.multi_reduction <maximumf>, %140, %cst_76 [1] : vector<24x24xf32> to vector<24xf32>
    %142 = vector.shape_cast %141 : vector<24xf32> to vector<24x1xf32>
    %143 = vector.broadcast %142 : vector<24x1xf32> to vector<24x24xf32>
    %144 = arith.subf %140, %143 : vector<24x24xf32>
    %145 = math.exp %144 : vector<24x24xf32>
    %cst_77 = arith.constant dense<0.000000e+00> : vector<24xf32>
    %146 = vector.multi_reduction <add>, %145, %cst_77 [1] : vector<24x24xf32> to vector<24xf32>
    %147 = vector.shape_cast %146 : vector<24xf32> to vector<24x1xf32>
    %148 = tpu.reciprocal %147 {approx = true} : vector<24x1xf32> -> vector<24x1xf32>
    %149 = arith.truncf %145 : vector<24x24xf32> to vector<24x24xbf16>
    %cst_78 = arith.constant dense<0.000000e+00> : vector<24x32xf32>
    %150 = tpu.matmul %149, %137, %cst_78 {dimension_numbers = #tpu.dot_dimension_numbers<[1], [0], [0], [1], [0, 0, 1, 1], [], []>} : vector<24x24xbf16>, vector<24x32xbf16>, vector<24x32xf32> -> vector<24x32xf32>
    %151 = vector.broadcast %148 : vector<24x1xf32> to vector<24x32xf32>
    %152 = arith.mulf %150, %151 : vector<24x32xf32>
    %153 = arith.truncf %152 : vector<24x32xf32> to vector<24x32xbf16>
    %c0_79 = arith.constant 0 : index
    %c0_80 = arith.constant 0 : index
    %c0_81 = arith.constant 0 : index
    %154 = vector.load %arg12[%c0_79, %c0_80, %c0_81] : memref<1x128x128xbf16, #tpu.memory_space<vmem>>, vector<1x32x128xbf16>
    %155 = vector.shape_cast %154 : vector<1x32x128xbf16> to vector<32x128xbf16>
    %cst_82 = arith.constant dense<0.000000e+00> : vector<24x128xf32>
    %156 = tpu.matmul %153, %155, %cst_82 {dimension_numbers = #tpu.dot_dimension_numbers<[1], [0], [0], [1], [0, 0, 1, 1], [], []>} : vector<24x32xbf16>, vector<32x128xbf16>, vector<24x128xf32> -> vector<24x128xf32>
    %157 = arith.addf %134, %156 : vector<24x128xf32>
    %c24_83 = arith.constant 24 : index
    %c32_84 = arith.constant 32 : index
    %158 = vector.load %arg24[%c24_83, %c32_84] : memref<48x384xbf16, #tpu.memory_space<vmem>>, vector<24x32xbf16>
    %c24_85 = arith.constant 24 : index
    %c160_86 = arith.constant 160 : index
    %159 = vector.load %arg24[%c24_85, %c160_86] : memref<48x384xbf16, #tpu.memory_space<vmem>>, vector<24x32xbf16>
    %c24_87 = arith.constant 24 : index
    %c288_88 = arith.constant 288 : index
    %160 = vector.load %arg24[%c24_87, %c288_88] : memref<48x384xbf16, #tpu.memory_space<vmem>>, vector<24x32xbf16>
    %cst_89 = arith.constant dense<0.000000e+00> : vector<24x24xf32>
    %161 = tpu.matmul %158, %159, %cst_89 {dimension_numbers = #tpu.dot_dimension_numbers<[1], [1], [0], [0], [0, 0, 1, 0], [], []>} : vector<24x32xbf16>, vector<24x32xbf16>, vector<24x24xf32> -> vector<24x24xf32>
    %162 = vector.broadcast %40 : vector<1x24xf32> to vector<24x24xf32>
    %163 = arith.addf %161, %162 : vector<24x24xf32>
    %cst_90 = arith.constant dense<0xFF800000> : vector<24xf32>
    %164 = vector.multi_reduction <maximumf>, %163, %cst_90 [1] : vector<24x24xf32> to vector<24xf32>
    %165 = vector.shape_cast %164 : vector<24xf32> to vector<24x1xf32>
    %166 = vector.broadcast %165 : vector<24x1xf32> to vector<24x24xf32>
    %167 = arith.subf %163, %166 : vector<24x24xf32>
    %168 = math.exp %167 : vector<24x24xf32>
    %cst_91 = arith.constant dense<0.000000e+00> : vector<24xf32>
    %169 = vector.multi_reduction <add>, %168, %cst_91 [1] : vector<24x24xf32> to vector<24xf32>
    %170 = vector.shape_cast %169 : vector<24xf32> to vector<24x1xf32>
    %171 = tpu.reciprocal %170 {approx = true} : vector<24x1xf32> -> vector<24x1xf32>
    %172 = arith.truncf %168 : vector<24x24xf32> to vector<24x24xbf16>
    %cst_92 = arith.constant dense<0.000000e+00> : vector<24x32xf32>
    %173 = tpu.matmul %172, %160, %cst_92 {dimension_numbers = #tpu.dot_dimension_numbers<[1], [0], [0], [1], [0, 0, 1, 1], [], []>} : vector<24x24xbf16>, vector<24x32xbf16>, vector<24x32xf32> -> vector<24x32xf32>
    %174 = vector.broadcast %171 : vector<24x1xf32> to vector<24x32xf32>
    %175 = arith.mulf %173, %174 : vector<24x32xf32>
    %176 = arith.truncf %175 : vector<24x32xf32> to vector<24x32xbf16>
    %c0_93 = arith.constant 0 : index
    %c32_94 = arith.constant 32 : index
    %c0_95 = arith.constant 0 : index
    %177 = vector.load %arg12[%c0_93, %c32_94, %c0_95] : memref<1x128x128xbf16, #tpu.memory_space<vmem>>, vector<1x32x128xbf16>
    %178 = vector.shape_cast %177 : vector<1x32x128xbf16> to vector<32x128xbf16>
    %cst_96 = arith.constant dense<0.000000e+00> : vector<24x128xf32>
    %179 = tpu.matmul %176, %178, %cst_96 {dimension_numbers = #tpu.dot_dimension_numbers<[1], [0], [0], [1], [0, 0, 1, 1], [], []>} : vector<24x32xbf16>, vector<32x128xbf16>, vector<24x128xf32> -> vector<24x128xf32>
    %180 = arith.addf %157, %179 : vector<24x128xf32>
    %c24_97 = arith.constant 24 : index
    %c64_98 = arith.constant 64 : index
    %181 = vector.load %arg24[%c24_97, %c64_98] : memref<48x384xbf16, #tpu.memory_space<vmem>>, vector<24x32xbf16>
    %c24_99 = arith.constant 24 : index
    %c192_100 = arith.constant 192 : index
    %182 = vector.load %arg24[%c24_99, %c192_100] : memref<48x384xbf16, #tpu.memory_space<vmem>>, vector<24x32xbf16>
    %c24_101 = arith.constant 24 : index
    %c320_102 = arith.constant 320 : index
    %183 = vector.load %arg24[%c24_101, %c320_102] : memref<48x384xbf16, #tpu.memory_space<vmem>>, vector<24x32xbf16>
    %cst_103 = arith.constant dense<0.000000e+00> : vector<24x24xf32>
    %184 = tpu.matmul %181, %182, %cst_103 {dimension_numbers = #tpu.dot_dimension_numbers<[1], [1], [0], [0], [0, 0, 1, 0], [], []>} : vector<24x32xbf16>, vector<24x32xbf16>, vector<24x24xf32> -> vector<24x24xf32>
    %185 = vector.broadcast %40 : vector<1x24xf32> to vector<24x24xf32>
    %186 = arith.addf %184, %185 : vector<24x24xf32>
    %cst_104 = arith.constant dense<0xFF800000> : vector<24xf32>
    %187 = vector.multi_reduction <maximumf>, %186, %cst_104 [1] : vector<24x24xf32> to vector<24xf32>
    %188 = vector.shape_cast %187 : vector<24xf32> to vector<24x1xf32>
    %189 = vector.broadcast %188 : vector<24x1xf32> to vector<24x24xf32>
    %190 = arith.subf %186, %189 : vector<24x24xf32>
    %191 = math.exp %190 : vector<24x24xf32>
    %cst_105 = arith.constant dense<0.000000e+00> : vector<24xf32>
    %192 = vector.multi_reduction <add>, %191, %cst_105 [1] : vector<24x24xf32> to vector<24xf32>
    %193 = vector.shape_cast %192 : vector<24xf32> to vector<24x1xf32>
    %194 = tpu.reciprocal %193 {approx = true} : vector<24x1xf32> -> vector<24x1xf32>
    %195 = arith.truncf %191 : vector<24x24xf32> to vector<24x24xbf16>
    %cst_106 = arith.constant dense<0.000000e+00> : vector<24x32xf32>
    %196 = tpu.matmul %195, %183, %cst_106 {dimension_numbers = #tpu.dot_dimension_numbers<[1], [0], [0], [1], [0, 0, 1, 1], [], []>} : vector<24x24xbf16>, vector<24x32xbf16>, vector<24x32xf32> -> vector<24x32xf32>
    %197 = vector.broadcast %194 : vector<24x1xf32> to vector<24x32xf32>
    %198 = arith.mulf %196, %197 : vector<24x32xf32>
    %199 = arith.truncf %198 : vector<24x32xf32> to vector<24x32xbf16>
    %c0_107 = arith.constant 0 : index
    %c64_108 = arith.constant 64 : index
    %c0_109 = arith.constant 0 : index
    %200 = vector.load %arg12[%c0_107, %c64_108, %c0_109] : memref<1x128x128xbf16, #tpu.memory_space<vmem>>, vector<1x32x128xbf16>
    %201 = vector.shape_cast %200 : vector<1x32x128xbf16> to vector<32x128xbf16>
    %cst_110 = arith.constant dense<0.000000e+00> : vector<24x128xf32>
    %202 = tpu.matmul %199, %201, %cst_110 {dimension_numbers = #tpu.dot_dimension_numbers<[1], [0], [0], [1], [0, 0, 1, 1], [], []>} : vector<24x32xbf16>, vector<32x128xbf16>, vector<24x128xf32> -> vector<24x128xf32>
    %203 = arith.addf %180, %202 : vector<24x128xf32>
    %c24_111 = arith.constant 24 : index
    %c96_112 = arith.constant 96 : index
    %204 = vector.load %arg24[%c24_111, %c96_112] : memref<48x384xbf16, #tpu.memory_space<vmem>>, vector<24x32xbf16>
    %c24_113 = arith.constant 24 : index
    %c224_114 = arith.constant 224 : index
    %205 = vector.load %arg24[%c24_113, %c224_114] : memref<48x384xbf16, #tpu.memory_space<vmem>>, vector<24x32xbf16>
    %c24_115 = arith.constant 24 : index
    %c352_116 = arith.constant 352 : index
    %206 = vector.load %arg24[%c24_115, %c352_116] : memref<48x384xbf16, #tpu.memory_space<vmem>>, vector<24x32xbf16>
    %cst_117 = arith.constant dense<0.000000e+00> : vector<24x24xf32>
    %207 = tpu.matmul %204, %205, %cst_117 {dimension_numbers = #tpu.dot_dimension_numbers<[1], [1], [0], [0], [0, 0, 1, 0], [], []>} : vector<24x32xbf16>, vector<24x32xbf16>, vector<24x24xf32> -> vector<24x24xf32>
    %208 = vector.broadcast %40 : vector<1x24xf32> to vector<24x24xf32>
    %209 = arith.addf %207, %208 : vector<24x24xf32>
    %cst_118 = arith.constant dense<0xFF800000> : vector<24xf32>
    %210 = vector.multi_reduction <maximumf>, %209, %cst_118 [1] : vector<24x24xf32> to vector<24xf32>
    %211 = vector.shape_cast %210 : vector<24xf32> to vector<24x1xf32>
    %212 = vector.broadcast %211 : vector<24x1xf32> to vector<24x24xf32>
    %213 = arith.subf %209, %212 : vector<24x24xf32>
    %214 = math.exp %213 : vector<24x24xf32>
    %cst_119 = arith.constant dense<0.000000e+00> : vector<24xf32>
    %215 = vector.multi_reduction <add>, %214, %cst_119 [1] : vector<24x24xf32> to vector<24xf32>
    %216 = vector.shape_cast %215 : vector<24xf32> to vector<24x1xf32>
    %217 = tpu.reciprocal %216 {approx = true} : vector<24x1xf32> -> vector<24x1xf32>
    %218 = arith.truncf %214 : vector<24x24xf32> to vector<24x24xbf16>
    %cst_120 = arith.constant dense<0.000000e+00> : vector<24x32xf32>
    %219 = tpu.matmul %218, %206, %cst_120 {dimension_numbers = #tpu.dot_dimension_numbers<[1], [0], [0], [1], [0, 0, 1, 1], [], []>} : vector<24x24xbf16>, vector<24x32xbf16>, vector<24x32xf32> -> vector<24x32xf32>
    %220 = vector.broadcast %217 : vector<24x1xf32> to vector<24x32xf32>
    %221 = arith.mulf %219, %220 : vector<24x32xf32>
    %222 = arith.truncf %221 : vector<24x32xf32> to vector<24x32xbf16>
    %c0_121 = arith.constant 0 : index
    %c96_122 = arith.constant 96 : index
    %c0_123 = arith.constant 0 : index
    %223 = vector.load %arg12[%c0_121, %c96_122, %c0_123] : memref<1x128x128xbf16, #tpu.memory_space<vmem>>, vector<1x32x128xbf16>
    %224 = vector.shape_cast %223 : vector<1x32x128xbf16> to vector<32x128xbf16>
    %cst_124 = arith.constant dense<0.000000e+00> : vector<24x128xf32>
    %225 = tpu.matmul %222, %224, %cst_124 {dimension_numbers = #tpu.dot_dimension_numbers<[1], [0], [0], [1], [0, 0, 1, 1], [], []>} : vector<24x32xbf16>, vector<32x128xbf16>, vector<24x128xf32> -> vector<24x128xf32>
    %226 = arith.addf %203, %225 : vector<24x128xf32>
    %227 = tpu.concatenate %133, %226 in 0 : vector<24x128xf32>, vector<24x128xf32> -> vector<48x128xf32>
    %228 = arith.addf %3, %227 : vector<48x128xf32>
    %c0_125 = arith.constant 0 : index
    %c0_126 = arith.constant 0 : index
    %c0_127 = arith.constant 0 : index
    %229 = vector.load %arg13[%c0_125, %c0_126, %c0_127] : memref<1x1x128xf32, #tpu.memory_space<vmem>>, vector<1x1x128xf32>
    %230 = vector.shape_cast %229 : vector<1x1x128xf32> to vector<1x128xf32>
    %231 = vector.broadcast %230 : vector<1x128xf32> to vector<48x128xf32>
    %232 = arith.addf %228, %231 : vector<48x128xf32>
    %c0_128 = arith.constant 0 : index
    %c0_129 = arith.constant 0 : index
    %c0_130 = arith.constant 0 : index
    %233 = vector.load %arg14[%c0_128, %c0_129, %c0_130] : memref<1x1x128xf32, #tpu.memory_space<vmem>>, vector<1x1x128xf32>
    %234 = vector.shape_cast %233 : vector<1x1x128xf32> to vector<1x128xf32>
    %c0_131 = arith.constant 0 : index
    %c0_132 = arith.constant 0 : index
    %c0_133 = arith.constant 0 : index
    %235 = vector.load %arg15[%c0_131, %c0_132, %c0_133] : memref<1x1x128xf32, #tpu.memory_space<vmem>>, vector<1x1x128xf32>
    %236 = vector.shape_cast %235 : vector<1x1x128xf32> to vector<1x128xf32>
    %cst_134 = arith.constant dense<0.000000e+00> : vector<48xf32>
    %237 = vector.multi_reduction <add>, %232, %cst_134 [1] : vector<48x128xf32> to vector<48xf32>
    %238 = vector.shape_cast %237 : vector<48xf32> to vector<48x1xf32>
    %cst_135 = arith.constant 1.280000e+02 : f32
    %239 = vector.broadcast %cst_135 : f32 to vector<48x1xf32>
    %240 = arith.divf %238, %239 : vector<48x1xf32>
    %241 = vector.broadcast %240 : vector<48x1xf32> to vector<48x128xf32>
    %242 = arith.subf %232, %241 : vector<48x128xf32>
    %243 = arith.mulf %242, %242 : vector<48x128xf32>
    %cst_136 = arith.constant dense<0.000000e+00> : vector<48xf32>
    %244 = vector.multi_reduction <add>, %243, %cst_136 [1] : vector<48x128xf32> to vector<48xf32>
    %245 = vector.shape_cast %244 : vector<48xf32> to vector<48x1xf32>
    %cst_137 = arith.constant 1.280000e+02 : f32
    %246 = vector.broadcast %cst_137 : f32 to vector<48x1xf32>
    %247 = arith.divf %245, %246 : vector<48x1xf32>
    %248 = vector.broadcast %240 : vector<48x1xf32> to vector<48x128xf32>
    %249 = arith.subf %232, %248 : vector<48x128xf32>
    %cst_138 = arith.constant 9.99999974E-6 : f32
    %250 = vector.broadcast %cst_138 : f32 to vector<48x1xf32>
    %251 = arith.addf %247, %250 : vector<48x1xf32>
    %252 = math.rsqrt %251 : vector<48x1xf32>
    %253 = vector.broadcast %252 : vector<48x1xf32> to vector<48x128xf32>
    %254 = arith.mulf %249, %253 : vector<48x128xf32>
    %255 = vector.broadcast %234 : vector<1x128xf32> to vector<48x128xf32>
    %256 = arith.mulf %254, %255 : vector<48x128xf32>
    %257 = vector.broadcast %236 : vector<1x128xf32> to vector<48x128xf32>
    %258 = arith.addf %256, %257 : vector<48x128xf32>
    %259 = arith.truncf %258 : vector<48x128xf32> to vector<48x128xbf16>
    %c0_139 = arith.constant 0 : index
    %c0_140 = arith.constant 0 : index
    %c0_141 = arith.constant 0 : index
    %260 = vector.load %arg16[%c0_139, %c0_140, %c0_141] : memref<1x128x512xbf16, #tpu.memory_space<vmem>>, vector<1x128x512xbf16>
    %261 = vector.shape_cast %260 : vector<1x128x512xbf16> to vector<128x512xbf16>
    %cst_142 = arith.constant dense<0.000000e+00> : vector<48x512xf32>
    %262 = tpu.matmul %259, %261, %cst_142 {dimension_numbers = #tpu.dot_dimension_numbers<[1], [0], [0], [1], [0, 0, 1, 1], [], []>} : vector<48x128xbf16>, vector<128x512xbf16>, vector<48x512xf32> -> vector<48x512xf32>
    %c0_143 = arith.constant 0 : index
    %c0_144 = arith.constant 0 : index
    %c0_145 = arith.constant 0 : index
    %263 = vector.load %arg17[%c0_143, %c0_144, %c0_145] : memref<1x1x512xf32, #tpu.memory_space<vmem>>, vector<1x1x512xf32>
    %264 = vector.shape_cast %263 : vector<1x1x512xf32> to vector<1x512xf32>
    %265 = vector.broadcast %264 : vector<1x512xf32> to vector<48x512xf32>
    %266 = arith.addf %262, %265 : vector<48x512xf32>
    %cst_146 = arith.constant 1.702000e+00 : f32
    %267 = vector.broadcast %cst_146 : f32 to vector<48x512xf32>
    %268 = arith.mulf %267, %266 : vector<48x512xf32>
    %269 = arith.negf %268 : vector<48x512xf32>
    %270 = math.exp %269 : vector<48x512xf32>
    %cst_147 = arith.constant 1.000000e+00 : f32
    %271 = vector.broadcast %cst_147 : f32 to vector<48x512xf32>
    %272 = arith.addf %271, %270 : vector<48x512xf32>
    %273 = arith.divf %271, %272 : vector<48x512xf32>
    %274 = arith.mulf %266, %273 : vector<48x512xf32>
    %275 = arith.truncf %274 : vector<48x512xf32> to vector<48x512xbf16>
    %c0_148 = arith.constant 0 : index
    %c0_149 = arith.constant 0 : index
    %c0_150 = arith.constant 0 : index
    %276 = vector.load %arg18[%c0_148, %c0_149, %c0_150] : memref<1x512x128xbf16, #tpu.memory_space<vmem>>, vector<1x512x128xbf16>
    %277 = vector.shape_cast %276 : vector<1x512x128xbf16> to vector<512x128xbf16>
    %cst_151 = arith.constant dense<0.000000e+00> : vector<48x128xf32>
    %278 = tpu.matmul %275, %277, %cst_151 {dimension_numbers = #tpu.dot_dimension_numbers<[1], [0], [0], [1], [0, 0, 1, 1], [], []>} : vector<48x512xbf16>, vector<512x128xbf16>, vector<48x128xf32> -> vector<48x128xf32>
    %c0_152 = arith.constant 0 : index
    %c0_153 = arith.constant 0 : index
    %c0_154 = arith.constant 0 : index
    %279 = vector.load %arg19[%c0_152, %c0_153, %c0_154] : memref<1x1x128xf32, #tpu.memory_space<vmem>>, vector<1x1x128xf32>
    %280 = vector.shape_cast %279 : vector<1x1x128xf32> to vector<1x128xf32>
    %281 = vector.broadcast %280 : vector<1x128xf32> to vector<48x128xf32>
    %282 = arith.addf %278, %281 : vector<48x128xf32>
    %283 = arith.addf %232, %282 : vector<48x128xf32>
    %c0_155 = arith.constant 0 : index
    %c0_156 = arith.constant 0 : index
    %284 = vector.load %arg23[%c0_155, %c0_156] : memref<48x128xf32, #tpu.memory_space<vmem>>, vector<48x128xf32>
    tpu.vector_store %arg23[%c0_155, %c0_156], %283 {strides = array<i32>} : memref<48x128xf32, #tpu.memory_space<vmem>>, vector<48x128xf32>,
    %c1_i32 = arith.constant 1 : i32
    %285 = arith.cmpi eq, %arg1, %c1_i32 : i32
    %286 = arith.extui %285 : i1 to i32
    %c0_i32_157 = arith.constant 0 : i32
    %287 = arith.cmpi ne, %286, %c0_i32_157 : i32
    scf.if %287 {
      %c0_158 = arith.constant 0 : index
      %c0_159 = arith.constant 0 : index
      %288 = vector.load %arg20[%c0_158, %c0_159] : memref<1x128xf32, #tpu.memory_space<vmem>>, vector<1x128xf32>
      %c0_160 = arith.constant 0 : index
      %c0_161 = arith.constant 0 : index
      %289 = vector.load %arg21[%c0_160, %c0_161] : memref<1x128xf32, #tpu.memory_space<vmem>>, vector<1x128xf32>
      %cst_162 = arith.constant dense<0.000000e+00> : vector<48xf32>
      %290 = vector.multi_reduction <add>, %283, %cst_162 [1] : vector<48x128xf32> to vector<48xf32>
      %291 = vector.shape_cast %290 : vector<48xf32> to vector<48x1xf32>
      %cst_163 = arith.constant 1.280000e+02 : f32
      %292 = vector.broadcast %cst_163 : f32 to vector<48x1xf32>
      %293 = arith.divf %291, %292 : vector<48x1xf32>
      %294 = vector.broadcast %293 : vector<48x1xf32> to vector<48x128xf32>
      %295 = arith.subf %283, %294 : vector<48x128xf32>
      %296 = arith.mulf %295, %295 : vector<48x128xf32>
      %cst_164 = arith.constant dense<0.000000e+00> : vector<48xf32>
      %297 = vector.multi_reduction <add>, %296, %cst_164 [1] : vector<48x128xf32> to vector<48xf32>
      %298 = vector.shape_cast %297 : vector<48xf32> to vector<48x1xf32>
      %cst_165 = arith.constant 1.280000e+02 : f32
      %299 = vector.broadcast %cst_165 : f32 to vector<48x1xf32>
      %300 = arith.divf %298, %299 : vector<48x1xf32>
      %301 = vector.broadcast %293 : vector<48x1xf32> to vector<48x128xf32>
      %302 = arith.subf %283, %301 : vector<48x128xf32>
      %cst_166 = arith.constant 9.99999974E-6 : f32
      %303 = vector.broadcast %cst_166 : f32 to vector<48x1xf32>
      %304 = arith.addf %300, %303 : vector<48x1xf32>
      %305 = math.rsqrt %304 : vector<48x1xf32>
      %306 = vector.broadcast %305 : vector<48x1xf32> to vector<48x128xf32>
      %307 = arith.mulf %302, %306 : vector<48x128xf32>
      %308 = vector.broadcast %288 : vector<1x128xf32> to vector<48x128xf32>
      %309 = arith.mulf %307, %308 : vector<48x128xf32>
      %310 = vector.broadcast %289 : vector<1x128xf32> to vector<48x128xf32>
      %311 = arith.addf %309, %310 : vector<48x128xf32>
      %312 = vector.shape_cast %311 : vector<48x128xf32> to vector<2x24x128xf32>
      %c0_167 = arith.constant 0 : index
      %c0_168 = arith.constant 0 : index
      %c0_169 = arith.constant 0 : index
      %313 = vector.load %arg22[%c0_167, %c0_168, %c0_169] : memref<2x24x128xf32, #tpu.memory_space<vmem>>, vector<2x24x128xf32>
      tpu.vector_store %arg22[%c0_167, %c0_168, %c0_169], %312 {strides = array<i32>} : memref<2x24x128xf32, #tpu.memory_space<vmem>>, vector<2x24x128xf32>,
    } else {
    }
    return
  }
  func.func @transform_0(%arg0: i32, %arg1: i32) -> (i32, i32) {
    %c0_i32 = arith.constant 0 : i32
    %c0_i32_0 = arith.constant 0 : i32
    %c0_i32_1 = arith.constant 0 : i32
    return %c0_i32, %c0_i32_0 : i32, i32
  }
  func.func @transform_1(%arg0: i32, %arg1: i32) -> (i32, i32, i32) {
    %c0_i32 = arith.constant 0 : i32
    %c0_i32_0 = arith.constant 0 : i32
    %c0_i32_1 = arith.constant 0 : i32
    return %arg0, %c0_i32, %c0_i32_0 : i32, i32, i32
  }
  func.func @transform_2(%arg0: i32, %arg1: i32) -> (i32, i32) {
    %c0_i32 = arith.constant 0 : i32
    %c0_i32_0 = arith.constant 0 : i32
    %c0_i32_1 = arith.constant 0 : i32
    return %c0_i32, %c0_i32_0 : i32, i32
  }
  func.func @transform_3(%arg0: i32, %arg1: i32) -> (i32, i32) {
    %c0_i32 = arith.constant 0 : i32
    %c0_i32_0 = arith.constant 0 : i32
    %c0_i32_1 = arith.constant 0 : i32
    return %c0_i32, %c0_i32_0 : i32, i32
  }
  func.func @transform_4(%arg0: i32, %arg1: i32) -> (i32, i32) {
    %c0_i32 = arith.constant 0 : i32
    %c0_i32_0 = arith.constant 0 : i32
    %c0_i32_1 = arith.constant 0 : i32
    return %c0_i32, %c0_i32_0 : i32, i32
  }
  func.func @transform_5(%arg0: i32, %arg1: i32) -> (i32, i32) {
    %c0_i32 = arith.constant 0 : i32
    %c0_i32_0 = arith.constant 0 : i32
    %c0_i32_1 = arith.constant 0 : i32
    return %c0_i32, %c0_i32_0 : i32, i32
  }
  func.func @transform_6(%arg0: i32, %arg1: i32) -> (i32, i32, i32) {
    %c0_i32 = arith.constant 0 : i32
    %c0_i32_0 = arith.constant 0 : i32
    %c0_i32_1 = arith.constant 0 : i32
    return %arg1, %c0_i32, %c0_i32_0 : i32, i32, i32
  }
  func.func @transform_7(%arg0: i32, %arg1: i32) -> (i32, i32, i32) {
    %c0_i32 = arith.constant 0 : i32
    %c0_i32_0 = arith.constant 0 : i32
    %c0_i32_1 = arith.constant 0 : i32
    return %arg1, %c0_i32, %c0_i32_0 : i32, i32, i32
  }
  func.func @transform_8(%arg0: i32, %arg1: i32) -> (i32, i32, i32) {
    %c0_i32 = arith.constant 0 : i32
    %c0_i32_0 = arith.constant 0 : i32
    %c0_i32_1 = arith.constant 0 : i32
    return %arg1, %c0_i32, %c0_i32_0 : i32, i32, i32
  }
  func.func @transform_9(%arg0: i32, %arg1: i32) -> (i32, i32, i32) {
    %c0_i32 = arith.constant 0 : i32
    %c0_i32_0 = arith.constant 0 : i32
    %c0_i32_1 = arith.constant 0 : i32
    return %arg1, %c0_i32, %c0_i32_0 : i32, i32, i32
  }
  func.func @transform_10(%arg0: i32, %arg1: i32) -> (i32, i32, i32) {
    %c0_i32 = arith.constant 0 : i32
    %c0_i32_0 = arith.constant 0 : i32
    %c0_i32_1 = arith.constant 0 : i32
    return %arg1, %c0_i32, %c0_i32_0 : i32, i32, i32
  }
  func.func @transform_11(%arg0: i32, %arg1: i32) -> (i32, i32, i32) {
    %c0_i32 = arith.constant 0 : i32
    %c0_i32_0 = arith.constant 0 : i32
    %c0_i32_1 = arith.constant 0 : i32
    return %arg1, %c0_i32, %c0_i32_0 : i32, i32, i32
  }
  func.func @transform_12(%arg0: i32, %arg1: i32) -> (i32, i32, i32) {
    %c0_i32 = arith.constant 0 : i32
    %c0_i32_0 = arith.constant 0 : i32
    %c0_i32_1 = arith.constant 0 : i32
    return %arg1, %c0_i32, %c0_i32_0 : i32, i32, i32
  }
  func.func @transform_13(%arg0: i32, %arg1: i32) -> (i32, i32, i32) {
    %c0_i32 = arith.constant 0 : i32
    %c0_i32_0 = arith.constant 0 : i32
    %c0_i32_1 = arith.constant 0 : i32
    return %arg1, %c0_i32, %c0_i32_0 : i32, i32, i32
  }
  func.func @transform_14(%arg0: i32, %arg1: i32) -> (i32, i32, i32) {
    %c0_i32 = arith.constant 0 : i32
    %c0_i32_0 = arith.constant 0 : i32
    %c0_i32_1 = arith.constant 0 : i32
    return %arg1, %c0_i32, %c0_i32_0 : i32, i32, i32
  }
  func.func @transform_15(%arg0: i32, %arg1: i32) -> (i32, i32, i32) {
    %c0_i32 = arith.constant 0 : i32
    %c0_i32_0 = arith.constant 0 : i32
    %c0_i32_1 = arith.constant 0 : i32
    return %arg1, %c0_i32, %c0_i32_0 : i32, i32, i32
  }
  func.func @transform_16(%arg0: i32, %arg1: i32) -> (i32, i32, i32) {
    %c0_i32 = arith.constant 0 : i32
    %c0_i32_0 = arith.constant 0 : i32
    %c0_i32_1 = arith.constant 0 : i32
    return %arg1, %c0_i32, %c0_i32_0 : i32, i32, i32
  }
  func.func @transform_17(%arg0: i32, %arg1: i32) -> (i32, i32, i32) {
    %c0_i32 = arith.constant 0 : i32
    %c0_i32_0 = arith.constant 0 : i32
    %c0_i32_1 = arith.constant 0 : i32
    return %arg1, %c0_i32, %c0_i32_0 : i32, i32, i32
  }
  func.func @transform_18(%arg0: i32, %arg1: i32) -> (i32, i32) {
    %c0_i32 = arith.constant 0 : i32
    %c0_i32_0 = arith.constant 0 : i32
    %c0_i32_1 = arith.constant 0 : i32
    return %c0_i32, %c0_i32_0 : i32, i32
  }
  func.func @transform_19(%arg0: i32, %arg1: i32) -> (i32, i32) {
    %c0_i32 = arith.constant 0 : i32
    %c0_i32_0 = arith.constant 0 : i32
    %c0_i32_1 = arith.constant 0 : i32
    return %c0_i32, %c0_i32_0 : i32, i32
  }
  func.func @transform_20(%arg0: i32, %arg1: i32) -> (i32, i32, i32) {
    %c0_i32 = arith.constant 0 : i32
    %c0_i32_0 = arith.constant 0 : i32
    %c0_i32_1 = arith.constant 0 : i32
    return %arg0, %c0_i32, %c0_i32_0 : i32, i32, i32
  }
}

</mosaic_0001>

<llo_original>
// kernel: clip_image_extractor_forward.1
$region0: #{clip_image_extractor_forward.1}
  #allocation0 [shape = 'u32[]', space=smem, size = 0x4, offset = 0x4, fixed_abs, tag = 'smem constant byte address 0x4 - core index']
  #allocation1 [shape = 'u32[144,128]{1,0:T(1,128)}', space=vmem, size = 0x12000, scoped, tag = 'internal scratch']
  #allocation2 [shape = 'f32[48,128]{1,0:T(8,128)}', space=vmem, size = 0x6000, scoped, tag = 'scratch operand']
  #allocation3 [shape = 'bf16[48,384]{1,0:T(8,128)(2,1)}', space=vmem, size = 0x9000, scoped, tag = 'scratch operand']
  %s0 = inlined_call_operand.vmem [shape: f32[1,24], index: 0, kind: input, shape index: {}]
  %s1 = inlined_call_operand.vmem [shape: f32[4,24,192], index: 1, kind: input, shape index: {}]
  %s2 = inlined_call_operand.vmem [shape: bf16[192,128], index: 2, kind: input, shape index: {}]
  %s3 = inlined_call_operand.vmem [shape: f32[24,128], index: 3, kind: input, shape index: {}]
  %s4 = inlined_call_operand.vmem [shape: f32[1,128], index: 4, kind: input, shape index: {}]
  %s5 = inlined_call_operand.vmem [shape: f32[1,128], index: 5, kind: input, shape index: {}]
  %s6 = inlined_call_operand.vmem [shape: f32[2,1,128], index: 6, kind: input, shape index: {}]
  %s7 = inlined_call_operand.vmem [shape: f32[2,1,128], index: 7, kind: input, shape index: {}]
  %s8 = inlined_call_operand.vmem [shape: bf16[2,128,384], index: 8, kind: input, shape index: {}]
  %s9 = inlined_call_operand.vmem [shape: f32[2,1,384], index: 9, kind: input, shape index: {}]
  %s10 = inlined_call_operand.vmem [shape: bf16[2,128,128], index: 10, kind: input, shape index: {}]
  %s11 = inlined_call_operand.vmem [shape: f32[2,1,128], index: 11, kind: input, shape index: {}]
  %s12 = inlined_call_operand.vmem [shape: f32[2,1,128], index: 12, kind: input, shape index: {}]
  %s13 = inlined_call_operand.vmem [shape: f32[2,1,128], index: 13, kind: input, shape index: {}]
  %s14 = inlined_call_operand.vmem [shape: bf16[2,128,512], index: 14, kind: input, shape index: {}]
  %s15 = inlined_call_operand.vmem [shape: f32[2,1,512], index: 15, kind: input, shape index: {}]
  %s16 = inlined_call_operand.vmem [shape: bf16[2,512,128], index: 16, kind: input, shape index: {}]
  %s17 = inlined_call_operand.vmem [shape: f32[2,1,128], index: 17, kind: input, shape index: {}]
  %s18 = inlined_call_operand.vmem [shape: f32[1,128], index: 18, kind: input, shape index: {}]
  %s19 = inlined_call_operand.vmem [shape: f32[1,128], index: 19, kind: input, shape index: {}]
  %s20 = inlined_call_operand.vmem [shape: f32[4,24,128], index: 20, kind: output, shape index: {}]
  %s21 = sld [smem:[#allocation0]]
  $region121: #{clip_image_extractor_forward.1} parent=0
    _
  %s23 = ssub.s32 1, %s21
  %s24 = scalar_select 0, %s23, %s21
  loop: start=0, step=1, limit=6
  $region2: #{clip_image_extractor_forward.1} parent=0 // loop_pre_header
    _
  $region3: #{clip_image_extractor_forward.1} parent=0 // loop_header
    %s26 = sphi 0, %s30
    %p27 = scmp.ge.s32.totalorder %s26, 6
    %s33 = sphi 0, %s45
    %s34 = sphi 0, %s41
    %s35 = sphi 0, %s33
    %s36 = sphi 0, %s34
    %s37 = sphi 0, %s35
    %s38 = sphi 0, %s36
    %s46 = sphi 0, %s46
    %s48 = sphi 0, %s46
    %s49 = sphi 0, %s48
    %s63 = sphi 0, %s49
    %s69 = sphi 0, %s71
    %s72 = sphi 0, %s69
    %s73 = sphi 0, %s72
    %s89 = sphi 0, %s73
    %s93 = sphi 0, %s93
    %s95 = sphi 0, %s93
    %s96 = sphi 0, %s95
    %s110 = sphi 0, %s96
    %s114 = sphi 0, %s114
    %s116 = sphi 0, %s114
    %s117 = sphi 0, %s116
    %s131 = sphi 0, %s117
    %s135 = sphi 0, %s135
    %s137 = sphi 0, %s135
    %s138 = sphi 0, %s137
    %s152 = sphi 0, %s138
    %s156 = sphi 0, %s156
    %s158 = sphi 0, %s156
    %s159 = sphi 0, %s158
    %s173 = sphi 0, %s159
    %s179 = sphi 0, %s181
    %s182 = sphi 0, %s179
    %s183 = sphi 0, %s182
    %s199 = sphi 0, %s183
    %s205 = sphi 0, %s207
    %s208 = sphi 0, %s205
    %s209 = sphi 0, %s208
    %s225 = sphi 0, %s209
    %s231 = sphi 0, %s233
    %s234 = sphi 0, %s231
    %s235 = sphi 0, %s234
    %s251 = sphi 0, %s235
    %s257 = sphi 0, %s259
    %s260 = sphi 0, %s257
    %s261 = sphi 0, %s260
    %s277 = sphi 0, %s261
    %s283 = sphi 0, %s285
    %s286 = sphi 0, %s283
    %s287 = sphi 0, %s286
    %s303 = sphi 0, %s287
    %s309 = sphi 0, %s311
    %s312 = sphi 0, %s309
    %s313 = sphi 0, %s312
    %s329 = sphi 0, %s313
    %s335 = sphi 0, %s337
    %s338 = sphi 0, %s335
    %s339 = sphi 0, %s338
    %s355 = sphi 0, %s339
    %s361 = sphi 0, %s363
    %s364 = sphi 0, %s361
    %s365 = sphi 0, %s364
    %s381 = sphi 0, %s365
    %s387 = sphi 0, %s389
    %s390 = sphi 0, %s387
    %s391 = sphi 0, %s390
    %s407 = sphi 0, %s391
    %s413 = sphi 0, %s415
    %s416 = sphi 0, %s413
    %s417 = sphi 0, %s416
    %s433 = sphi 0, %s417
    %s439 = sphi 0, %s441
    %s442 = sphi 0, %s439
    %s443 = sphi 0, %s442
    %s459 = sphi 0, %s443
    %s465 = sphi 0, %s467
    %s468 = sphi 0, %s465
    %s469 = sphi 0, %s468
    %s485 = sphi 0, %s469
    %s489 = sphi 0, %s489
    %s491 = sphi 0, %s489
    %s492 = sphi 0, %s491
    %s506 = sphi 0, %s492
    %s510 = sphi 0, %s510
    %s512 = sphi 0, %s510
    %s513 = sphi 0, %s512
    %s527 = sphi 0, %s513
    %s533 = sphi 0, %s535
    %s536 = sphi 0, %s533
    %s537 = sphi 0, %s536
    %s553 = sphi 0, %s537
  $region4: #{clip_image_extractor_forward.1} parent=0 // loop_header_branch
    %29 = sbr.rel (%p27) target = $region8
  $region5: #{clip_image_extractor_forward.1} parent=0 // loop_body
    %s31 = ssub.s32 %s26, 1
    %s32 = ssub.s32 %s26, 2
    %s39 = sadd.s32 1, %s34
    %p40 = scmp.ge.s32.totalorder %s39, 2
    %s41 = scalar_select %p40, 0, %s39
    %s42 = sadd.s32 1, %s33
    %s43 = scalar_select %p40, %s42, %s33
    %p44 = scmp.ge.s32.totalorder %s43, 2
    %s45 = scalar_select %p44, 0, %s43
    %s47 = sadd.s32 %s46, 1
    %p50 = scmp.eq.s32.totalorder %s26, 3
    %p51 = scmp.ne.s32.totalorder %s46, %s48
    %p52 = scmp.eq.s32.totalorder %s26, 0
    %p53 = por %p51, %p52
    %p54 = scmp.ne.s32.totalorder %s46, %s48
    %p55 = scmp.eq.s32.totalorder %s31, 3
    %p56 = por %p54, %p55
    %p57 = scmp.ne.s32.totalorder %s48, %s49
    %p58 = scmp.eq.s32.totalorder %s31, 0
    %p59 = por %p57, %p58
    %p60 = scmp.ne.s32.totalorder %s48, %s49
    %p61 = scmp.eq.s32.totalorder %s32, 3
    %p62 = por %p60, %p61
    %p64 = scmp.ne.s32.totalorder %s49, %s63
    %p65 = scmp.eq.s32.totalorder %s32, 0
    %p66 = por %p64, %p65
    %s67 = ssub.s32 %s33, %s45
    %p68 = scmp.eq.s32.totalorder %s67, 0
    %s70 = sadd.s32 %s69, 1
    %s71 = scalar_select %p68, %s69, %s70
    %p74 = pneg %p68
    %p75 = scmp.eq.s32.totalorder %s26, 3
    %p76 = por %p74, %p75
    %p77 = scmp.ne.s32.totalorder %s69, %s72
    %p78 = scmp.eq.s32.totalorder %s26, 0
    %p79 = por %p77, %p78
    %p80 = scmp.ne.s32.totalorder %s69, %s72
    %p81 = scmp.eq.s32.totalorder %s31, 3
    %p82 = por %p80, %p81
    %p83 = scmp.ne.s32.totalorder %s72, %s73
    %p84 = scmp.eq.s32.totalorder %s31, 0
    %p85 = por %p83, %p84
    %p86 = scmp.ne.s32.totalorder %s72, %s73
    %p87 = scmp.eq.s32.totalorder %s32, 3
    %p88 = por %p86, %p87
    %p90 = scmp.ne.s32.totalorder %s73, %s89
    %p91 = scmp.eq.s32.totalorder %s32, 0
    %p92 = por %p90, %p91
    %s94 = sadd.s32 %s93, 1
    %p97 = scmp.eq.s32.totalorder %s26, 3
    %p98 = scmp.ne.s32.totalorder %s93, %s95
    %p99 = scmp.eq.s32.totalorder %s26, 0
    %p100 = por %p98, %p99
    %p101 = scmp.ne.s32.totalorder %s93, %s95
    %p102 = scmp.eq.s32.totalorder %s31, 3
    %p103 = por %p101, %p102
    %p104 = scmp.ne.s32.totalorder %s95, %s96
    %p105 = scmp.eq.s32.totalorder %s31, 0
    %p106 = por %p104, %p105
    %p107 = scmp.ne.s32.totalorder %s95, %s96
    %p108 = scmp.eq.s32.totalorder %s32, 3
    %p109 = por %p107, %p108
    %p111 = scmp.ne.s32.totalorder %s96, %s110
    %p112 = scmp.eq.s32.totalorder %s32, 0
    %p113 = por %p111, %p112
    %s115 = sadd.s32 %s114, 1
    %p118 = scmp.eq.s32.totalorder %s26, 3
    %p119 = scmp.ne.s32.totalorder %s114, %s116
    %p120 = scmp.eq.s32.totalorder %s26, 0
    %p121 = por %p119, %p120
    %p122 = scmp.ne.s32.totalorder %s114, %s116
    %p123 = scmp.eq.s32.totalorder %s31, 3
    %p124 = por %p122, %p123
    %p125 = scmp.ne.s32.totalorder %s116, %s117
    %p126 = scmp.eq.s32.totalorder %s31, 0
    %p127 = por %p125, %p126
    %p128 = scmp.ne.s32.totalorder %s116, %s117
    %p129 = scmp.eq.s32.totalorder %s32, 3
    %p130 = por %p128, %p129
    %p132 = scmp.ne.s32.totalorder %s117, %s131
    %p133 = scmp.eq.s32.totalorder %s32, 0
    %p134 = por %p132, %p133
    %s136 = sadd.s32 %s135, 1
    %p139 = scmp.eq.s32.totalorder %s26, 3
    %p140 = scmp.ne.s32.totalorder %s135, %s137
    %p141 = scmp.eq.s32.totalorder %s26, 0
    %p142 = por %p140, %p141
    %p143 = scmp.ne.s32.totalorder %s135, %s137
    %p144 = scmp.eq.s32.totalorder %s31, 3
    %p145 = por %p143, %p144
    %p146 = scmp.ne.s32.totalorder %s137, %s138
    %p147 = scmp.eq.s32.totalorder %s31, 0
    %p148 = por %p146, %p147
    %p149 = scmp.ne.s32.totalorder %s137, %s138
    %p150 = scmp.eq.s32.totalorder %s32, 3
    %p151 = por %p149, %p150
    %p153 = scmp.ne.s32.totalorder %s138, %s152
    %p154 = scmp.eq.s32.totalorder %s32, 0
    %p155 = por %p153, %p154
    %s157 = sadd.s32 %s156, 1
    %p160 = scmp.eq.s32.totalorder %s26, 3
    %p161 = scmp.ne.s32.totalorder %s156, %s158
    %p162 = scmp.eq.s32.totalorder %s26, 0
    %p163 = por %p161, %p162
    %p164 = scmp.ne.s32.totalorder %s156, %s158
    %p165 = scmp.eq.s32.totalorder %s31, 3
    %p166 = por %p164, %p165
    %p167 = scmp.ne.s32.totalorder %s158, %s159
    %p168 = scmp.eq.s32.totalorder %s31, 0
    %p169 = por %p167, %p168
    %p170 = scmp.ne.s32.totalorder %s158, %s159
    %p171 = scmp.eq.s32.totalorder %s32, 3
    %p172 = por %p170, %p171
    %p174 = scmp.ne.s32.totalorder %s159, %s173
    %p175 = scmp.eq.s32.totalorder %s32, 0
    %p176 = por %p174, %p175
    %s177 = ssub.s32 %s34, %s41
    %p178 = scmp.eq.s32.totalorder %s177, 0
    %s180 = sadd.s32 %s179, 1
    %s181 = scalar_select %p178, %s179, %s180
    %p184 = pneg %p178
    %p185 = scmp.eq.s32.totalorder %s26, 3
    %p186 = por %p184, %p185
    %p187 = scmp.ne.s32.totalorder %s179, %s182
    %p188 = scmp.eq.s32.totalorder %s26, 0
    %p189 = por %p187, %p188
    %p190 = scmp.ne.s32.totalorder %s179, %s182
    %p191 = scmp.eq.s32.totalorder %s31, 3
    %p192 = por %p190, %p191
    %p193 = scmp.ne.s32.totalorder %s182, %s183
    %p194 = scmp.eq.s32.totalorder %s31, 0
    %p195 = por %p193, %p194
    %p196 = scmp.ne.s32.totalorder %s182, %s183
    %p197 = scmp.eq.s32.totalorder %s32, 3
    %p198 = por %p196, %p197
    %p200 = scmp.ne.s32.totalorder %s183, %s199
    %p201 = scmp.eq.s32.totalorder %s32, 0
    %p202 = por %p200, %p201
    %s203 = ssub.s32 %s34, %s41
    %p204 = scmp.eq.s32.totalorder %s203, 0
    %s206 = sadd.s32 %s205, 1
    %s207 = scalar_select %p204, %s205, %s206
    %p210 = pneg %p204
    %p211 = scmp.eq.s32.totalorder %s26, 3
    %p212 = por %p210, %p211
    %p213 = scmp.ne.s32.totalorder %s205, %s208
    %p214 = scmp.eq.s32.totalorder %s26, 0
    %p215 = por %p213, %p214
    %p216 = scmp.ne.s32.totalorder %s205, %s208
    %p217 = scmp.eq.s32.totalorder %s31, 3
    %p218 = por %p216, %p217
    %p219 = scmp.ne.s32.totalorder %s208, %s209
    %p220 = scmp.eq.s32.totalorder %s31, 0
    %p221 = por %p219, %p220
    %p222 = scmp.ne.s32.totalorder %s208, %s209
    %p223 = scmp.eq.s32.totalorder %s32, 3
    %p224 = por %p222, %p223
    %p226 = scmp.ne.s32.totalorder %s209, %s225
    %p227 = scmp.eq.s32.totalorder %s32, 0
    %p228 = por %p226, %p227
    %s229 = ssub.s32 %s34, %s41
    %p230 = scmp.eq.s32.totalorder %s229, 0
    %s232 = sadd.s32 %s231, 1
    %s233 = scalar_select %p230, %s231, %s232
    %p236 = pneg %p230
    %p237 = scmp.eq.s32.totalorder %s26, 3
    %p238 = por %p236, %p237
    %p239 = scmp.ne.s32.totalorder %s231, %s234
    %p240 = scmp.eq.s32.totalorder %s26, 0
    %p241 = por %p239, %p240
    %p242 = scmp.ne.s32.totalorder %s231, %s234
    %p243 = scmp.eq.s32.totalorder %s31, 3
    %p244 = por %p242, %p243
    %p245 = scmp.ne.s32.totalorder %s234, %s235
    %p246 = scmp.eq.s32.totalorder %s31, 0
    %p247 = por %p245, %p246
    %p248 = scmp.ne.s32.totalorder %s234, %s235
    %p249 = scmp.eq.s32.totalorder %s32, 3
    %p250 = por %p248, %p249
    %p252 = scmp.ne.s32.totalorder %s235, %s251
    %p253 = scmp.eq.s32.totalorder %s32, 0
    %p254 = por %p252, %p253
    %s255 = ssub.s32 %s34, %s41
    %p256 = scmp.eq.s32.totalorder %s255, 0
    %s258 = sadd.s32 %s257, 1
    %s259 = scalar_select %p256, %s257, %s258
    %p262 = pneg %p256
    %p263 = scmp.eq.s32.totalorder %s26, 3
    %p264 = por %p262, %p263
    %p265 = scmp.ne.s32.totalorder %s257, %s260
    %p266 = scmp.eq.s32.totalorder %s26, 0
    %p267 = por %p265, %p266
    %p268 = scmp.ne.s32.totalorder %s257, %s260
    %p269 = scmp.eq.s32.totalorder %s31, 3
    %p270 = por %p268, %p269
    %p271 = scmp.ne.s32.totalorder %s260, %s261
    %p272 = scmp.eq.s32.totalorder %s31, 0
    %p273 = por %p271, %p272
    %p274 = scmp.ne.s32.totalorder %s260, %s261
    %p275 = scmp.eq.s32.totalorder %s32, 3
    %p276 = por %p274, %p275
    %p278 = scmp.ne.s32.totalorder %s261, %s277
    %p279 = scmp.eq.s32.totalorder %s32, 0
    %p280 = por %p278, %p279
    %s281 = ssub.s32 %s34, %s41
    %p282 = scmp.eq.s32.totalorder %s281, 0
    %s284 = sadd.s32 %s283, 1
    %s285 = scalar_select %p282, %s283, %s284
    %p288 = pneg %p282
    %p289 = scmp.eq.s32.totalorder %s26, 3
    %p290 = por %p288, %p289
    %p291 = scmp.ne.s32.totalorder %s283, %s286
    %p292 = scmp.eq.s32.totalorder %s26, 0
    %p293 = por %p291, %p292
    %p294 = scmp.ne.s32.totalorder %s283, %s286
    %p295 = scmp.eq.s32.totalorder %s31, 3
    %p296 = por %p294, %p295
    %p297 = scmp.ne.s32.totalorder %s286, %s287
    %p298 = scmp.eq.s32.totalorder %s31, 0
    %p299 = por %p297, %p298
    %p300 = scmp.ne.s32.totalorder %s286, %s287
    %p301 = scmp.eq.s32.totalorder %s32, 3
    %p302 = por %p300, %p301
    %p304 = scmp.ne.s32.totalorder %s287, %s303
    %p305 = scmp.eq.s32.totalorder %s32, 0
    %p306 = por %p304, %p305
    %s307 = ssub.s32 %s34, %s41
    %p308 = scmp.eq.s32.totalorder %s307, 0
    %s310 = sadd.s32 %s309, 1
    %s311 = scalar_select %p308, %s309, %s310
    %p314 = pneg %p308
    %p315 = scmp.eq.s32.totalorder %s26, 3
    %p316 = por %p314, %p315
    %p317 = scmp.ne.s32.totalorder %s309, %s312
    %p318 = scmp.eq.s32.totalorder %s26, 0
    %p319 = por %p317, %p318
    %p320 = scmp.ne.s32.totalorder %s309, %s312
    %p321 = scmp.eq.s32.totalorder %s31, 3
    %p322 = por %p320, %p321
    %p323 = scmp.ne.s32.totalorder %s312, %s313
    %p324 = scmp.eq.s32.totalorder %s31, 0
    %p325 = por %p323, %p324
    %p326 = scmp.ne.s32.totalorder %s312, %s313
    %p327 = scmp.eq.s32.totalorder %s32, 3
    %p328 = por %p326, %p327
    %p330 = scmp.ne.s32.totalorder %s313, %s329
    %p331 = scmp.eq.s32.totalorder %s32, 0
    %p332 = por %p330, %p331
    %s333 = ssub.s32 %s34, %s41
    %p334 = scmp.eq.s32.totalorder %s333, 0
    %s336 = sadd.s32 %s335, 1
    %s337 = scalar_select %p334, %s335, %s336
    %p340 = pneg %p334
    %p341 = scmp.eq.s32.totalorder %s26, 3
    %p342 = por %p340, %p341
    %p343 = scmp.ne.s32.totalorder %s335, %s338
    %p344 = scmp.eq.s32.totalorder %s26, 0
    %p345 = por %p343, %p344
    %p346 = scmp.ne.s32.totalorder %s335, %s338
    %p347 = scmp.eq.s32.totalorder %s31, 3
    %p348 = por %p346, %p347
    %p349 = scmp.ne.s32.totalorder %s338, %s339
    %p350 = scmp.eq.s32.totalorder %s31, 0
    %p351 = por %p349, %p350
    %p352 = scmp.ne.s32.totalorder %s338, %s339
    %p353 = scmp.eq.s32.totalorder %s32, 3
    %p354 = por %p352, %p353
    %p356 = scmp.ne.s32.totalorder %s339, %s355
    %p357 = scmp.eq.s32.totalorder %s32, 0
    %p358 = por %p356, %p357
    %s359 = ssub.s32 %s34, %s41
    %p360 = scmp.eq.s32.totalorder %s359, 0
    %s362 = sadd.s32 %s361, 1
    %s363 = scalar_select %p360, %s361, %s362
    %p366 = pneg %p360
    %p367 = scmp.eq.s32.totalorder %s26, 3
    %p368 = por %p366, %p367
    %p369 = scmp.ne.s32.totalorder %s361, %s364
    %p370 = scmp.eq.s32.totalorder %s26, 0
    %p371 = por %p369, %p370
    %p372 = scmp.ne.s32.totalorder %s361, %s364
    %p373 = scmp.eq.s32.totalorder %s31, 3
    %p374 = por %p372, %p373
    %p375 = scmp.ne.s32.totalorder %s364, %s365
    %p376 = scmp.eq.s32.totalorder %s31, 0
    %p377 = por %p375, %p376
    %p378 = scmp.ne.s32.totalorder %s364, %s365
    %p379 = scmp.eq.s32.totalorder %s32, 3
    %p380 = por %p378, %p379
    %p382 = scmp.ne.s32.totalorder %s365, %s381
    %p383 = scmp.eq.s32.totalorder %s32, 0
    %p384 = por %p382, %p383
    %s385 = ssub.s32 %s34, %s41
    %p386 = scmp.eq.s32.totalorder %s385, 0
    %s388 = sadd.s32 %s387, 1
    %s389 = scalar_select %p386, %s387, %s388
    %p392 = pneg %p386
    %p393 = scmp.eq.s32.totalorder %s26, 3
    %p394 = por %p392, %p393
    %p395 = scmp.ne.s32.totalorder %s387, %s390
    %p396 = scmp.eq.s32.totalorder %s26, 0
    %p397 = por %p395, %p396
    %p398 = scmp.ne.s32.totalorder %s387, %s390
    %p399 = scmp.eq.s32.totalorder %s31, 3
    %p400 = por %p398, %p399
    %p401 = scmp.ne.s32.totalorder %s390, %s391
    %p402 = scmp.eq.s32.totalorder %s31, 0
    %p403 = por %p401, %p402
    %p404 = scmp.ne.s32.totalorder %s390, %s391
    %p405 = scmp.eq.s32.totalorder %s32, 3
    %p406 = por %p404, %p405
    %p408 = scmp.ne.s32.totalorder %s391, %s407
    %p409 = scmp.eq.s32.totalorder %s32, 0
    %p410 = por %p408, %p409
    %s411 = ssub.s32 %s34, %s41
    %p412 = scmp.eq.s32.totalorder %s411, 0
    %s414 = sadd.s32 %s413, 1
    %s415 = scalar_select %p412, %s413, %s414
    %p418 = pneg %p412
    %p419 = scmp.eq.s32.totalorder %s26, 3
    %p420 = por %p418, %p419
    %p421 = scmp.ne.s32.totalorder %s413, %s416
    %p422 = scmp.eq.s32.totalorder %s26, 0
    %p423 = por %p421, %p422
    %p424 = scmp.ne.s32.totalorder %s413, %s416
    %p425 = scmp.eq.s32.totalorder %s31, 3
    %p426 = por %p424, %p425
    %p427 = scmp.ne.s32.totalorder %s416, %s417
    %p428 = scmp.eq.s32.totalorder %s31, 0
    %p429 = por %p427, %p428
    %p430 = scmp.ne.s32.totalorder %s416, %s417
    %p431 = scmp.eq.s32.totalorder %s32, 3
    %p432 = por %p430, %p431
    %p434 = scmp.ne.s32.totalorder %s417, %s433
    %p435 = scmp.eq.s32.totalorder %s32, 0
    %p436 = por %p434, %p435
    %s437 = ssub.s32 %s34, %s41
    %p438 = scmp.eq.s32.totalorder %s437, 0
    %s440 = sadd.s32 %s439, 1
    %s441 = scalar_select %p438, %s439, %s440
    %p444 = pneg %p438
    %p445 = scmp.eq.s32.totalorder %s26, 3
    %p446 = por %p444, %p445
    %p447 = scmp.ne.s32.totalorder %s439, %s442
    %p448 = scmp.eq.s32.totalorder %s26, 0
    %p449 = por %p447, %p448
    %p450 = scmp.ne.s32.totalorder %s439, %s442
    %p451 = scmp.eq.s32.totalorder %s31, 3
    %p452 = por %p450, %p451
    %p453 = scmp.ne.s32.totalorder %s442, %s443
    %p454 = scmp.eq.s32.totalorder %s31, 0
    %p455 = por %p453, %p454
    %p456 = scmp.ne.s32.totalorder %s442, %s443
    %p457 = scmp.eq.s32.totalorder %s32, 3
    %p458 = por %p456, %p457
    %p460 = scmp.ne.s32.totalorder %s443, %s459
    %p461 = scmp.eq.s32.totalorder %s32, 0
    %p462 = por %p460, %p461
    %s463 = ssub.s32 %s34, %s41
    %p464 = scmp.eq.s32.totalorder %s463, 0
    %s466 = sadd.s32 %s465, 1
    %s467 = scalar_select %p464, %s465, %s466
    %p470 = pneg %p464
    %p471 = scmp.eq.s32.totalorder %s26, 3
    %p472 = por %p470, %p471
    %p473 = scmp.ne.s32.totalorder %s465, %s468
    %p474 = scmp.eq.s32.totalorder %s26, 0
    %p475 = por %p473, %p474
    %p476 = scmp.ne.s32.totalorder %s465, %s468
    %p477 = scmp.eq.s32.totalorder %s31, 3
    %p478 = por %p476, %p477
    %p479 = scmp.ne.s32.totalorder %s468, %s469
    %p480 = scmp.eq.s32.totalorder %s31, 0
    %p481 = por %p479, %p480
    %p482 = scmp.ne.s32.totalorder %s468, %s469
    %p483 = scmp.eq.s32.totalorder %s32, 3
    %p484 = por %p482, %p483
    %p486 = scmp.ne.s32.totalorder %s469, %s485
    %p487 = scmp.eq.s32.totalorder %s32, 0
    %p488 = por %p486, %p487
    %s490 = sadd.s32 %s489, 1
    %p493 = scmp.eq.s32.totalorder %s26, 3
    %p494 = scmp.ne.s32.totalorder %s489, %s491
    %p495 = scmp.eq.s32.totalorder %s26, 0
    %p496 = por %p494, %p495
    %p497 = scmp.ne.s32.totalorder %s489, %s491
    %p498 = scmp.eq.s32.totalorder %s31, 3
    %p499 = por %p497, %p498
    %p500 = scmp.ne.s32.totalorder %s491, %s492
    %p501 = scmp.eq.s32.totalorder %s31, 0
    %p502 = por %p500, %p501
    %p503 = scmp.ne.s32.totalorder %s491, %s492
    %p504 = scmp.eq.s32.totalorder %s32, 3
    %p505 = por %p503, %p504
    %p507 = scmp.ne.s32.totalorder %s492, %s506
    %p508 = scmp.eq.s32.totalorder %s32, 0
    %p509 = por %p507, %p508
    %s511 = sadd.s32 %s510, 1
    %p514 = scmp.eq.s32.totalorder %s26, 3
    %p515 = scmp.ne.s32.totalorder %s510, %s512
    %p516 = scmp.eq.s32.totalorder %s26, 0
    %p517 = por %p515, %p516
    %p518 = scmp.ne.s32.totalorder %s510, %s512
    %p519 = scmp.eq.s32.totalorder %s31, 3
    %p520 = por %p518, %p519
    %p521 = scmp.ne.s32.totalorder %s512, %s513
    %p522 = scmp.eq.s32.totalorder %s31, 0
    %p523 = por %p521, %p522
    %p524 = scmp.ne.s32.totalorder %s512, %s513
    %p525 = scmp.eq.s32.totalorder %s32, 3
    %p526 = por %p524, %p525
    %p528 = scmp.ne.s32.totalorder %s513, %s527
    %p529 = scmp.eq.s32.totalorder %s32, 0
    %p530 = por %p528, %p529
    %s531 = ssub.s32 %s33, %s45
    %p532 = scmp.eq.s32.totalorder %s531, 0
    %s534 = sadd.s32 %s533, 1
    %s535 = scalar_select %p532, %s533, %s534
    %p538 = pneg %p532
    %p539 = scmp.eq.s32.totalorder %s26, 3
    %p540 = por %p538, %p539
    %p541 = scmp.ne.s32.totalorder %s533, %s536
    %p542 = scmp.eq.s32.totalorder %s26, 0
    %p543 = por %p541, %p542
    %p544 = scmp.ne.s32.totalorder %s533, %s536
    %p545 = scmp.eq.s32.totalorder %s31, 3
    %p546 = por %p544, %p545
    %p547 = scmp.ne.s32.totalorder %s536, %s537
    %p548 = scmp.eq.s32.totalorder %s31, 0
    %p549 = por %p547, %p548
    %p550 = scmp.ne.s32.totalorder %s536, %s537
    %p551 = scmp.eq.s32.totalorder %s32, 3
    %p552 = por %p550, %p551
    %p554 = scmp.ne.s32.totalorder %s537, %s553
    %p555 = scmp.eq.s32.totalorder %s32, 0
    %p556 = por %p554, %p555
    %p557 = scmp.le.s32.totalorder 1, %s26
    %p558 = scmp.lt.s32.totalorder %s26, 5
    %p559 = pnand %p557, %p558
    %p560 = pneg %p559
    // Predicated region
    $region9: #{clip_image_extractor_forward.1} parent=5 // pred_check
      _
    $region10: #{clip_image_extractor_forward.1} parent=5 // pred_check_branch
      %562 = sbr.rel (%p559) target = $region12
    $region11: #{clip_image_extractor_forward.1} parent=5 // pred_region
      %s563 = ssub.s32 %s26, 1
      // Predicated region
      $region13: #{clip_image_extractor_forward.1} parent=11 // pred_check
        %p564 = pneg %p59
      $region14: #{clip_image_extractor_forward.1} parent=11 // pred_check_branch
        %566 = sbr.rel (%p564) target = $region16
      $region15: #{clip_image_extractor_forward.1} parent=11 // pred_region
        _
      $region16: #{clip_image_extractor_forward.1} parent=11 // pred_fallthru
        _
      // Predicated region
      $region17: #{clip_image_extractor_forward.1} parent=11 // pred_check
        %p567 = pneg %p106
      $region18: #{clip_image_extractor_forward.1} parent=11 // pred_check_branch
        %569 = sbr.rel (%p567) target = $region20
      $region19: #{clip_image_extractor_forward.1} parent=11 // pred_region
        _
      $region20: #{clip_image_extractor_forward.1} parent=11 // pred_fallthru
        _
      // Predicated region
      $region21: #{clip_image_extractor_forward.1} parent=11 // pred_check
        %p570 = pneg %p127
      $region22: #{clip_image_extractor_forward.1} parent=11 // pred_check_branch
        %572 = sbr.rel (%p570) target = $region24
      $region23: #{clip_image_extractor_forward.1} parent=11 // pred_region
        _
      $region24: #{clip_image_extractor_forward.1} parent=11 // pred_fallthru
        _
      // Predicated region
      $region25: #{clip_image_extractor_forward.1} parent=11 // pred_check
        %p573 = pneg %p148
      $region26: #{clip_image_extractor_forward.1} parent=11 // pred_check_branch
        %575 = sbr.rel (%p573) target = $region28
      $region27: #{clip_image_extractor_forward.1} parent=11 // pred_region
        _
      $region28: #{clip_image_extractor_forward.1} parent=11 // pred_fallthru
        _
      // Predicated region
      $region29: #{clip_image_extractor_forward.1} parent=11 // pred_check
        %p576 = pneg %p169
      $region30: #{clip_image_extractor_forward.1} parent=11 // pred_check_branch
        %578 = sbr.rel (%p576) target = $region32
      $region31: #{clip_image_extractor_forward.1} parent=11 // pred_region
        _
      $region32: #{clip_image_extractor_forward.1} parent=11 // pred_fallthru
        _
      // Predicated region
      $region33: #{clip_image_extractor_forward.1} parent=11 // pred_check
        %p579 = pneg %p502
      $region34: #{clip_image_extractor_forward.1} parent=11 // pred_check_branch
        %581 = sbr.rel (%p579) target = $region36
      $region35: #{clip_image_extractor_forward.1} parent=11 // pred_region
        _
      $region36: #{clip_image_extractor_forward.1} parent=11 // pred_fallthru
        _
      // Predicated region
      $region37: #{clip_image_extractor_forward.1} parent=11 // pred_check
        %p582 = pneg %p523
      $region38: #{clip_image_extractor_forward.1} parent=11 // pred_check_branch
        %584 = sbr.rel (%p582) target = $region40
      $region39: #{clip_image_extractor_forward.1} parent=11 // pred_region
        _
      $region40: #{clip_image_extractor_forward.1} parent=11 // pred_fallthru
        _
    $region12: #{clip_image_extractor_forward.1} parent=5 // pred_fallthru
      _
    %p585 = scmp.lt.s32.totalorder %s26, 4
    // Predicated region
    $region41: #{clip_image_extractor_forward.1} parent=5 // pred_check
      %p586 = pneg %p585
    $region42: #{clip_image_extractor_forward.1} parent=5 // pred_check_branch
      %588 = sbr.rel (%p586) target = $region44
    $region43: #{clip_image_extractor_forward.1} parent=5 // pred_region
      // Predicated region
      $region45: #{clip_image_extractor_forward.1} parent=43 // pred_check
        %p589 = pneg %p79
      $region46: #{clip_image_extractor_forward.1} parent=43 // pred_check_branch
        %591 = sbr.rel (%p589) target = $region48
      $region47: #{clip_image_extractor_forward.1} parent=43 // pred_region
        %s592 = smul.u32 2, %s33
        %p593 = scmp.lt.s32.totalorder %s592, 3
        %s594 = scalar_select %p593, %s592, 3
        %s595 = smul.addr %s594, 6
        %s596 = smul.addr %s595, 8
        %s597 = scalar_lea.vmem %s1, %s596
        %s598 = smul.u32 2, %s33
      $region48: #{clip_image_extractor_forward.1} parent=43 // pred_fallthru
        _
      // Predicated region
      $region49: #{clip_image_extractor_forward.1} parent=43 // pred_check
        %p599 = pneg %p189
      $region50: #{clip_image_extractor_forward.1} parent=43 // pred_check_branch
        %601 = sbr.rel (%p599) target = $region52
      $region51: #{clip_image_extractor_forward.1} parent=43 // pred_region
        %p602 = scmp.lt.s32.totalorder %s34, 1
        %s603 = scalar_select %p602, %s34, 1
        %s604 = scalar_lea.vmem %s6, %s603
      $region52: #{clip_image_extractor_forward.1} parent=43 // pred_fallthru
        _
      // Predicated region
      $region53: #{clip_image_extractor_forward.1} parent=43 // pred_check
        %p605 = pneg %p215
      $region54: #{clip_image_extractor_forward.1} parent=43 // pred_check_branch
        %607 = sbr.rel (%p605) target = $region56
      $region55: #{clip_image_extractor_forward.1} parent=43 // pred_region
        %p608 = scmp.lt.s32.totalorder %s34, 1
        %s609 = scalar_select %p608, %s34, 1
        %s610 = scalar_lea.vmem %s7, %s609
      $region56: #{clip_image_extractor_forward.1} parent=43 // pred_fallthru
        _
      // Predicated region
      $region57: #{clip_image_extractor_forward.1} parent=43 // pred_check
        %p611 = pneg %p241
      $region58: #{clip_image_extractor_forward.1} parent=43 // pred_check_branch
        %613 = sbr.rel (%p611) target = $region60
      $region59: #{clip_image_extractor_forward.1} parent=43 // pred_region
        %p614 = scmp.lt.s32.totalorder %s34, 1
        %s615 = scalar_select %p614, %s34, 1
        %s616 = smul.addr %s615, 48
        %s617 = smul.addr %s616, 4
        %s618 = scalar_lea.vmem %s8, %s617
      $region60: #{clip_image_extractor_forward.1} parent=43 // pred_fallthru
        _
      // Predicated region
      $region61: #{clip_image_extractor_forward.1} parent=43 // pred_check
        %p619 = pneg %p267
      $region62: #{clip_image_extractor_forward.1} parent=43 // pred_check_branch
        %621 = sbr.rel (%p619) target = $region64
      $region63: #{clip_image_extractor_forward.1} parent=43 // pred_region
        %p622 = scmp.lt.s32.totalorder %s34, 1
        %s623 = scalar_select %p622, %s34, 1
        %s624 = smul.addr %s623, 3
        %s625 = scalar_lea.vmem %s9, %s624
      $region64: #{clip_image_extractor_forward.1} parent=43 // pred_fallthru
        _
      // Predicated region
      $region65: #{clip_image_extractor_forward.1} parent=43 // pred_check
        %p626 = pneg %p293
      $region66: #{clip_image_extractor_forward.1} parent=43 // pred_check_branch
        %628 = sbr.rel (%p626) target = $region68
      $region67: #{clip_image_extractor_forward.1} parent=43 // pred_region
        %p629 = scmp.lt.s32.totalorder %s34, 1
        %s630 = scalar_select %p629, %s34, 1
        %s631 = smul.addr %s630, 16
        %s632 = smul.addr %s631, 4
        %s633 = scalar_lea.vmem %s10, %s632
      $region68: #{clip_image_extractor_forward.1} parent=43 // pred_fallthru
        _
      // Predicated region
      $region69: #{clip_image_extractor_forward.1} parent=43 // pred_check
        %p634 = pneg %p319
      $region70: #{clip_image_extractor_forward.1} parent=43 // pred_check_branch
        %636 = sbr.rel (%p634) target = $region72
      $region71: #{clip_image_extractor_forward.1} parent=43 // pred_region
        %p637 = scmp.lt.s32.totalorder %s34, 1
        %s638 = scalar_select %p637, %s34, 1
        %s639 = scalar_lea.vmem %s11, %s638
      $region72: #{clip_image_extractor_forward.1} parent=43 // pred_fallthru
        _
      // Predicated region
      $region73: #{clip_image_extractor_forward.1} parent=43 // pred_check
        %p640 = pneg %p345
      $region74: #{clip_image_extractor_forward.1} parent=43 // pred_check_branch
        %642 = sbr.rel (%p640) target = $region76
      $region75: #{clip_image_extractor_forward.1} parent=43 // pred_region
        %p643 = scmp.lt.s32.totalorder %s34, 1
        %s644 = scalar_select %p643, %s34, 1
        %s645 = scalar_lea.vmem %s12, %s644
      $region76: #{clip_image_extractor_forward.1} parent=43 // pred_fallthru
        _
      // Predicated region
      $region77: #{clip_image_extractor_forward.1} parent=43 // pred_check
        %p646 = pneg %p371
      $region78: #{clip_image_extractor_forward.1} parent=43 // pred_check_branch
        %648 = sbr.rel (%p646) target = $region80
      $region79: #{clip_image_extractor_forward.1} parent=43 // pred_region
        %p649 = scmp.lt.s32.totalorder %s34, 1
        %s650 = scalar_select %p649, %s34, 1
        %s651 = scalar_lea.vmem %s13, %s650
      $region80: #{clip_image_extractor_forward.1} parent=43 // pred_fallthru
        _
      // Predicated region
      $region81: #{clip_image_extractor_forward.1} parent=43 // pred_check
        %p652 = pneg %p397
      $region82: #{clip_image_extractor_forward.1} parent=43 // pred_check_branch
        %654 = sbr.rel (%p652) target = $region84
      $region83: #{clip_image_extractor_forward.1} parent=43 // pred_region
        %p655 = scmp.lt.s32.totalorder %s34, 1
        %s656 = scalar_select %p655, %s34, 1
        %s657 = smul.addr %s656, 64
        %s658 = smul.addr %s657, 4
        %s659 = scalar_lea.vmem %s14, %s658
      $region84: #{clip_image_extractor_forward.1} parent=43 // pred_fallthru
        _
      // Predicated region
      $region85: #{clip_image_extractor_forward.1} parent=43 // pred_check
        %p660 = pneg %p423
      $region86: #{clip_image_extractor_forward.1} parent=43 // pred_check_branch
        %662 = sbr.rel (%p660) target = $region88
      $region87: #{clip_image_extractor_forward.1} parent=43 // pred_region
        %p663 = scmp.lt.s32.totalorder %s34, 1
        %s664 = scalar_select %p663, %s34, 1
        %s665 = smul.addr %s664, 4
        %s666 = scalar_lea.vmem %s15, %s665
      $region88: #{clip_image_extractor_forward.1} parent=43 // pred_fallthru
        _
      // Predicated region
      $region89: #{clip_image_extractor_forward.1} parent=43 // pred_check
        %p667 = pneg %p449
      $region90: #{clip_image_extractor_forward.1} parent=43 // pred_check_branch
        %669 = sbr.rel (%p667) target = $region92
      $region91: #{clip_image_extractor_forward.1} parent=43 // pred_region
        %p670 = scmp.lt.s32.totalorder %s34, 1
        %s671 = scalar_select %p670, %s34, 1
        %s672 = smul.addr %s671, 64
        %s673 = smul.addr %s672, 4
        %s674 = scalar_lea.vmem %s16, %s673
      $region92: #{clip_image_extractor_forward.1} parent=43 // pred_fallthru
        _
      // Predicated region
      $region93: #{clip_image_extractor_forward.1} parent=43 // pred_check
        %p675 = pneg %p475
      $region94: #{clip_image_extractor_forward.1} parent=43 // pred_check_branch
        %677 = sbr.rel (%p675) target = $region96
      $region95: #{clip_image_extractor_forward.1} parent=43 // pred_region
        %p678 = scmp.lt.s32.totalorder %s34, 1
        %s679 = scalar_select %p678, %s34, 1
        %s680 = scalar_lea.vmem %s17, %s679
      $region96: #{clip_image_extractor_forward.1} parent=43 // pred_fallthru
        _
    $region44: #{clip_image_extractor_forward.1} parent=5 // pred_fallthru
      _
    %p681 = scmp.le.s32.totalorder 1, %s26
    %p682 = scmp.lt.s32.totalorder %s26, 5
    %p683 = pnand %p681, %p682
    %p684 = pneg %p683
    // Predicated region
    $region97: #{clip_image_extractor_forward.1} parent=5 // pred_check
      _
    $region98: #{clip_image_extractor_forward.1} parent=5 // pred_check_branch
      %686 = sbr.rel (%p683) target = $region100
    $region99: #{clip_image_extractor_forward.1} parent=5 // pred_region
      %s687 = ssub.s32 %s26, 1
      %p688 = pneg %p59
      %p689 = pneg %p56
      %s690 = smul.u32 2, %s35
      %p691 = scmp.lt.s32.totalorder %s690, 3
      %s692 = scalar_select %p691, %s690, 3
      %s693 = smul.addr %s692, 6
      %s694 = smul.addr %s693, 8
      %s695 = scalar_lea.vmem %s1, %s694
      %p696 = pneg %p85
      %p697 = pneg %p82
      %p698 = pneg %p106
      %p699 = pneg %p103
      %p700 = pneg %p127
      %p701 = pneg %p124
      %p702 = pneg %p148
      %p703 = pneg %p145
      %p704 = pneg %p169
      %p705 = pneg %p166
      %p706 = scmp.lt.s32.totalorder %s36, 1
      %s707 = scalar_select %p706, %s36, 1
      %s708 = scalar_lea.vmem %s6, %s707
      %p709 = pneg %p195
      %p710 = pneg %p192
      %p711 = scmp.lt.s32.totalorder %s36, 1
      %s712 = scalar_select %p711, %s36, 1
      %s713 = scalar_lea.vmem %s7, %s712
      %p714 = pneg %p221
      %p715 = pneg %p218
      %p716 = scmp.lt.s32.totalorder %s36, 1
      %s717 = scalar_select %p716, %s36, 1
      %s718 = smul.addr %s717, 48
      %s719 = smul.addr %s718, 4
      %s720 = scalar_lea.vmem %s8, %s719
      %p721 = pneg %p247
      %p722 = pneg %p244
      %p723 = scmp.lt.s32.totalorder %s36, 1
      %s724 = scalar_select %p723, %s36, 1
      %s725 = smul.addr %s724, 3
      %s726 = scalar_lea.vmem %s9, %s725
      %p727 = pneg %p273
      %p728 = pneg %p270
      %p729 = scmp.lt.s32.totalorder %s36, 1
      %s730 = scalar_select %p729, %s36, 1
      %s731 = smul.addr %s730, 16
      %s732 = smul.addr %s731, 4
      %s733 = scalar_lea.vmem %s10, %s732
      %p734 = pneg %p299
      %p735 = pneg %p296
      %p736 = scmp.lt.s32.totalorder %s36, 1
      %s737 = scalar_select %p736, %s36, 1
      %s738 = scalar_lea.vmem %s11, %s737
      %p739 = pneg %p325
      %p740 = pneg %p322
      %p741 = scmp.lt.s32.totalorder %s36, 1
      %s742 = scalar_select %p741, %s36, 1
      %s743 = scalar_lea.vmem %s12, %s742
      %p744 = pneg %p351
      %p745 = pneg %p348
      %p746 = scmp.lt.s32.totalorder %s36, 1
      %s747 = scalar_select %p746, %s36, 1
      %s748 = scalar_lea.vmem %s13, %s747
      %p749 = pneg %p377
      %p750 = pneg %p374
      %p751 = scmp.lt.s32.totalorder %s36, 1
      %s752 = scalar_select %p751, %s36, 1
      %s753 = smul.addr %s752, 64
      %s754 = smul.addr %s753, 4
      %s755 = scalar_lea.vmem %s14, %s754
      %p756 = pneg %p403
      %p757 = pneg %p400
      %p758 = scmp.lt.s32.totalorder %s36, 1
      %s759 = scalar_select %p758, %s36, 1
      %s760 = smul.addr %s759, 4
      %s761 = scalar_lea.vmem %s15, %s760
      %p762 = pneg %p429
      %p763 = pneg %p426
      %p764 = scmp.lt.s32.totalorder %s36, 1
      %s765 = scalar_select %p764, %s36, 1
      %s766 = smul.addr %s765, 64
      %s767 = smul.addr %s766, 4
      %s768 = scalar_lea.vmem %s16, %s767
      %p769 = pneg %p455
      %p770 = pneg %p452
      %p771 = scmp.lt.s32.totalorder %s36, 1
      %s772 = scalar_select %p771, %s36, 1
      %s773 = scalar_lea.vmem %s17, %s772
      %p774 = pneg %p481
      %p775 = pneg %p478
      %p776 = pneg %p502
      %p777 = pneg %p499
      %p778 = pneg %p523
      %p779 = pneg %p520
      %p780 = pneg %p549
      %p781 = pneg %p546
      %s782 = smul.u32 2, %s35
      %p783 = scmp.lt.s32.totalorder %s782, 3
      %s784 = scalar_select %p783, %s782, 3
      %s785 = smul.addr %s784, 3
      %s786 = smul.addr %s785, 8
      %s787 = scalar_lea.vmem %s20, %s786
      %s788 = smul.u32 2, %s35
      %p789 = scmp.lt.s32.totalorder %s788, 3
      %s790 = scalar_select %p789, %s788, 3
      %s791 = smul.addr %s790, 6
      %s792 = smul.addr %s791, 8
      %s793 = scalar_lea.vmem %s1, %s792
      %s794 = smul.u32 2, %s35
      %p795 = scmp.lt.s32.totalorder %s36, 1
      %s796 = scalar_select %p795, %s36, 1
      %s797 = scalar_lea.vmem %s6, %s796
      %p798 = scmp.lt.s32.totalorder %s36, 1
      %s799 = scalar_select %p798, %s36, 1
      %s800 = scalar_lea.vmem %s7, %s799
      %p801 = scmp.lt.s32.totalorder %s36, 1
      %s802 = scalar_select %p801, %s36, 1
      %s803 = smul.addr %s802, 48
      %s804 = smul.addr %s803, 4
      %s805 = scalar_lea.vmem %s8, %s804
      %p806 = scmp.lt.s32.totalorder %s36, 1
      %s807 = scalar_select %p806, %s36, 1
      %s808 = smul.addr %s807, 3
      %s809 = scalar_lea.vmem %s9, %s808
      %p810 = scmp.lt.s32.totalorder %s36, 1
      %s811 = scalar_select %p810, %s36, 1
      %s812 = smul.addr %s811, 16
      %s813 = smul.addr %s812, 4
      %s814 = scalar_lea.vmem %s10, %s813
      %p815 = scmp.lt.s32.totalorder %s36, 1
      %s816 = scalar_select %p815, %s36, 1
      %s817 = scalar_lea.vmem %s11, %s816
      %p818 = scmp.lt.s32.totalorder %s36, 1
      %s819 = scalar_select %p818, %s36, 1
      %s820 = scalar_lea.vmem %s12, %s819
      %p821 = scmp.lt.s32.totalorder %s36, 1
      %s822 = scalar_select %p821, %s36, 1
      %s823 = scalar_lea.vmem %s13, %s822
      %p824 = scmp.lt.s32.totalorder %s36, 1
      %s825 = scalar_select %p824, %s36, 1
      %s826 = smul.addr %s825, 64
      %s827 = smul.addr %s826, 4
      %s828 = scalar_lea.vmem %s14, %s827
      %p829 = scmp.lt.s32.totalorder %s36, 1
      %s830 = scalar_select %p829, %s36, 1
      %s831 = smul.addr %s830, 4
      %s832 = scalar_lea.vmem %s15, %s831
      %p833 = scmp.lt.s32.totalorder %s36, 1
      %s834 = scalar_select %p833, %s36, 1
      %s835 = smul.addr %s834, 64
      %s836 = smul.addr %s835, 4
      %s837 = scalar_lea.vmem %s16, %s836
      %p838 = scmp.lt.s32.totalorder %s36, 1
      %s839 = scalar_select %p838, %s36, 1
      %s840 = scalar_lea.vmem %s17, %s839
      %s841 = smul.u32 2, %s35
      %p842 = scmp.lt.s32.totalorder %s841, 3
      %s843 = scalar_select %p842, %s841, 3
      %s844 = smul.addr %s843, 3
      %s845 = smul.addr %s844, 8
      %s846 = scalar_lea.vmem %s20, %s845
      %s847 = smul.u32 2, %s35
      %p849 = scmp.eq.s32.totalorder %s36, 0
      // Predicated region
      $region101: #{clip_image_extractor_forward.1} parent=99 // pred_check
        %p850 = pneg %p849
      $region102: #{clip_image_extractor_forward.1} parent=99 // pred_check_branch
        %852 = sbr.rel (%p850) target = $region104
      $region103: #{clip_image_extractor_forward.1} parent=99 // pred_region
        %v853 = vld [vmem:[%s793] sm:$0xff]
        %v854 = vld [vmem:[%s793 + $0x8] sm:$0xff]
        %v855 = vld [vmem:[%s793 + $0x10] sm:$0xff]
        %v856 = vld [vmem:[%s793 + $0x18] sm:$0xff]
        %v857 = vld [vmem:[%s793 + $0x20] sm:$0xff]
        %v858 = vld [vmem:[%s793 + $0x28] sm:$0xff]
        %v859 = vld [vmem:[%s793 + $0x30] sm:$0xff]
        %v860 = vld [vmem:[%s793 + $0x38] sm:$0xff]
        %v861 = vld [vmem:[%s793 + $0x40] sm:$0xff]
        %v862 = vld [vmem:[%s793 + $0x48] sm:$0xff]
        %v863 = vld [vmem:[%s793 + $0x50] sm:$0xff]
        %v864 = vld [vmem:[%s793 + $0x58] sm:$0xff]
        %v865 = vpack.c.bf16 %v855, %v853
        %v866 = vpack.c.bf16 %v856, %v854
        %v867 = vpack.c.bf16 %v859, %v857
        %v868 = vpack.c.bf16 %v860, %v858
        %v869 = vpack.c.bf16 %v863, %v861
        %v870 = vpack.c.bf16 %v864, %v862
        %v871 = vld [vmem:[%s2] sm:$0xf]
        %v872 = vld [vmem:[%s2 + $0x4] sm:$0xf]
        %v873 = vld [vmem:[%s2 + $0x8] sm:$0xf]
        %v874 = vld [vmem:[%s2 + $0xc] sm:$0xf]
        %v875 = vld [vmem:[%s2 + $0x10] sm:$0xf]
        %v876 = vld [vmem:[%s2 + $0x14] sm:$0xf]
        %v877 = vld [vmem:[%s2 + $0x18] sm:$0xf]
        %v878 = vld [vmem:[%s2 + $0x1c] sm:$0xf]
        %v879 = vld [vmem:[%s2 + $0x20] sm:$0xf]
        %v880 = vld [vmem:[%s2 + $0x24] sm:$0xf]
        %v881 = vld [vmem:[%s2 + $0x28] sm:$0xf]
        %v882 = vld [vmem:[%s2 + $0x2c] sm:$0xf]
        %v883 = vld [vmem:[%s2 + $0x30] sm:$0xf]
        %v884 = vld [vmem:[%s2 + $0x34] sm:$0xf]
        %v885 = vld [vmem:[%s2 + $0x38] sm:$0xf]
        %v886 = vld [vmem:[%s2 + $0x3c] sm:$0xf]
        %v887 = vld [vmem:[%s2 + $0x40] sm:$0xf]
        %v888 = vld [vmem:[%s2 + $0x44] sm:$0xf]
        %v889 = vld [vmem:[%s2 + $0x48] sm:$0xf]
        %v890 = vld [vmem:[%s2 + $0x4c] sm:$0xf]
        %v891 = vld [vmem:[%s2 + $0x50] sm:$0xf]
        %v892 = vld [vmem:[%s2 + $0x54] sm:$0xf]
        %v893 = vld [vmem:[%s2 + $0x58] sm:$0xf]
        %v894 = vld [vmem:[%s2 + $0x5c] sm:$0xf]
        %v919 = vunpack.c.l.b16 %v871
        %v920 = vunpack.c.l.b16 %v872
        %v921 = vunpack.c.l.b16 %v873
        %v922 = vunpack.c.l.b16 %v874
        %v923 = vunpack.c.l.b16 %v875
        %v924 = vunpack.c.l.b16 %v876
        %v925 = vunpack.c.l.b16 %v877
        %v926 = vunpack.c.l.b16 %v878
        %v927 = vunpack.c.l.b16 %v879
        %v928 = vunpack.c.l.b16 %v880
        %v929 = vunpack.c.l.b16 %v881
        %v930 = vunpack.c.l.b16 %v882
        %v931 = vunpack.c.l.b16 %v883
        %v932 = vunpack.c.l.b16 %v884
        %v933 = vunpack.c.l.b16 %v885
        %v934 = vunpack.c.l.b16 %v886
        %v935 = vunpack.c.l.b16 %v887
        %v936 = vunpack.c.l.b16 %v888
        %v937 = vunpack.c.l.b16 %v889
        %v938 = vunpack.c.l.b16 %v890
        %v939 = vunpack.c.l.b16 %v891
        %v940 = vunpack.c.l.b16 %v892
        %v941 = vunpack.c.l.b16 %v893
        %v942 = vunpack.c.l.b16 %v894
        %v943 = vpack.c.b16 %v920, %v919
        %v944 = vpack.c.b16 %v922, %v921
        %v945 = vpack.c.b16 %v924, %v923
        %v946 = vpack.c.b16 %v926, %v925
        %v947 = vpack.c.b16 %v928, %v927
        %v948 = vpack.c.b16 %v930, %v929
        %v949 = vpack.c.b16 %v932, %v931
        %v950 = vpack.c.b16 %v934, %v933
        %v951 = vpack.c.b16 %v936, %v935
        %v952 = vpack.c.b16 %v938, %v937
        %v953 = vpack.c.b16 %v940, %v939
        %v954 = vpack.c.b16 %v942, %v941
        %vm967 = vcmask 523264
        %v969 = vsel %vm967, %v866, 0
        %v972 = vsel %vm967, %v868, 0
        %v975 = vsel %vm967, %v870, 0
        %977 = vmatprep.subr.bf16.mxu0 0
        %978 = vmatpush1.bf16.msra.mxu0 %v950
        %979 = vmatprep.subr.bf16.mxu0 0
        %980 = vmatpush1.bf16.msra.mxu0 %v949
        %981 = vmatprep.subr.bf16.mxu0 0
        %982 = vmatpush1.bf16.msra.mxu0 %v948
        %983 = vmatprep.subr.bf16.mxu0 0
        %984 = vmatpush1.bf16.msra.mxu0 %v947
        %985 = vmatprep.subr.bf16.mxu0 0
        %986 = vmatpush1.bf16.msra.mxu0 %v946
        %987 = vmatprep.subr.bf16.mxu0 0
        %988 = vmatpush1.bf16.msra.mxu0 %v945
        %989 = vmatprep.subr.bf16.mxu0 0
        %990 = vmatpush1.bf16.msra.mxu0 %v944
        %991 = vmatprep.subr.bf16.mxu0 0
        %992 = vmatpush1.bf16.msra.mxu0 %v943
        %993 = vmatprep.subr.bf16.mxu0 0
        %994 = vmatpush2.bf16.msra.mxu0 0
        %995 = vmatprep.subr.bf16.mxu0 0
        %996 = vmatpush2.bf16.msra.mxu0 0
        %997 = vmatprep.subr.bf16.mxu0 0
        %998 = vmatpush2.bf16.msra.mxu0 0
        %999 = vmatprep.subr.bf16.mxu0 0
        %1000 = vmatpush2.bf16.msra.mxu0 0
        %1001 = vmatprep.subr.bf16.mxu0 0
        %1002 = vmatpush2.bf16.msra.mxu0 %v954
        %1003 = vmatprep.subr.bf16.mxu0 0
        %1004 = vmatpush2.bf16.msra.mxu0 %v953
        %1005 = vmatprep.subr.bf16.mxu0 0
        %1006 = vmatpush2.bf16.msra.mxu0 %v952
        %1007 = vmatprep.subr.bf16.mxu0 0
        %1008 = vmatpush2.bf16.msra.mxu0 %v951
        %1009 = vmatprep.mubr.bf16.mxu0 %v969
        %1010 = vmatmul.mubr.bf16.gmra.mxu0 %v865
        %v1011 = vpop.f32.mrf.mxu0
        %v1012 = vadd.f32 0.0, %v1011
        %v1013 = vpop.f32.mrf.mxu0
        %v1014 = vpop.f32.mrf.mxu0
        %v1015 = vadd.f32 0.0, %v1014
        %v1016 = vpop.f32.mrf.mxu0
        %1017 = vmatprep.mubr.bf16.mxu0 %v972
        %1018 = vmatmul.mubr.bf16.gmra.mxu0 %v867
        %v1019 = vpop.f32.mrf.mxu0
        %v1020 = vadd.f32 0.0, %v1019
        %v1021 = vpop.f32.mrf.mxu0
        %v1022 = vpop.f32.mrf.mxu0
        %v1023 = vadd.f32 0.0, %v1022
        %v1024 = vpop.f32.mrf.mxu0
        %1025 = vmatprep.mubr.bf16.mxu0 %v975
        %1026 = vmatmul.mubr.bf16.gmra.mxu0 %v869
        %v1027 = vpop.f32.mrf.mxu0
        %v1028 = vadd.f32 0.0, %v1027
        %v1029 = vpop.f32.mrf.mxu0
        %v1030 = vpop.f32.mrf.mxu0
        %v1031 = vadd.f32 0.0, %v1030
        %v1032 = vpop.f32.mrf.mxu0
        %1033 = vdwg.mxu0
        %v1034 = vld [vmem:[%s3] sm:$0xff]
        %v1035 = vld [vmem:[%s3 + $0x8] sm:$0xff]
        %v1036 = vld [vmem:[%s3 + $0x10] sm:$0xff]
        %v1037 = vadd.f32 %v1012, %v1034
        %v1038 = vadd.f32 %v1015, %v1035
        %v1039 = vadd.f32 %v1020, %v1036
        %v1040 = vadd.f32 %v1023, %v1034
        %v1041 = vadd.f32 %v1028, %v1035
        %v1042 = vadd.f32 %v1031, %v1036
        %v1043 = vld [vmem:[%s4] sm:$0x1]
        %v1044 = vld [vmem:[%s5] sm:$0x1]
        %1045 = vadd.xlane.f32.xlu0 %v1037
        %v1046 = vpop.xlane.xlu0 %1045
        %1047 = vadd.xlane.f32.xlu0 %v1038
        %v1048 = vpop.xlane.xlu0 %1047
        %1049 = vadd.xlane.f32.xlu0 %v1039
        %v1050 = vpop.xlane.xlu0 %1049
        %1051 = vadd.xlane.f32.xlu0 %v1040
        %v1052 = vpop.xlane.xlu0 %1051
        %1053 = vadd.xlane.f32.xlu0 %v1041
        %v1054 = vpop.xlane.xlu0 %1053
        %1055 = vadd.xlane.f32.xlu0 %v1042
        %v1056 = vpop.xlane.xlu0 %1055
        %v1057 = vrcp.pop 128.0
        %v1058 = vmul.f32 %v1046, %v1057
        %v1059 = vmul.f32 %v1048, %v1057
        %v1060 = vmul.f32 %v1050, %v1057
        %v1061 = vmul.f32 %v1052, %v1057
        %v1062 = vmul.f32 %v1054, %v1057
        %v1063 = vmul.f32 %v1056, %v1057
        %v1064 = vsub.f32 %v1037, %v1058
        %v1065 = vsub.f32 %v1038, %v1059
        %v1066 = vsub.f32 %v1039, %v1060
        %v1067 = vsub.f32 %v1040, %v1061
        %v1068 = vsub.f32 %v1041, %v1062
        %v1069 = vsub.f32 %v1042, %v1063
        %v1070 = vmul.f32 %v1064, %v1064
        %v1071 = vmul.f32 %v1065, %v1065
        %v1072 = vmul.f32 %v1066, %v1066
        %v1073 = vmul.f32 %v1067, %v1067
        %v1074 = vmul.f32 %v1068, %v1068
        %v1075 = vmul.f32 %v1069, %v1069
        %1076 = vadd.xlane.f32.xlu0 %v1070
        %v1077 = vpop.xlane.xlu0 %1076
        %1078 = vadd.xlane.f32.xlu0 %v1071
        %v1079 = vpop.xlane.xlu0 %1078
        %1080 = vadd.xlane.f32.xlu0 %v1072
        %v1081 = vpop.xlane.xlu0 %1080
        %1082 = vadd.xlane.f32.xlu0 %v1073
        %v1083 = vpop.xlane.xlu0 %1082
        %1084 = vadd.xlane.f32.xlu0 %v1074
        %v1085 = vpop.xlane.xlu0 %1084
        %1086 = vadd.xlane.f32.xlu0 %v1075
        %v1087 = vpop.xlane.xlu0 %1086
        %v1088 = vmul.f32 %v1077, %v1057
        %v1089 = vmul.f32 %v1079, %v1057
        %v1090 = vmul.f32 %v1081, %v1057
        %v1091 = vmul.f32 %v1083, %v1057
        %v1092 = vmul.f32 %v1085, %v1057
        %v1093 = vmul.f32 %v1087, %v1057
        %v1094 = vadd.f32 %v1088, 1e-05
        %v1095 = vadd.f32 %v1089, 1e-05
        %v1096 = vadd.f32 %v1090, 1e-05
        %v1097 = vadd.f32 %v1091, 1e-05
        %v1098 = vadd.f32 %v1092, 1e-05
        %v1099 = vadd.f32 %v1093, 1e-05
        %v1100 = vrsqrt.pop %v1094
        %v1101 = vrsqrt.pop %v1095
        %v1102 = vrsqrt.pop %v1096
        %v1103 = vrsqrt.pop %v1097
        %v1104 = vrsqrt.pop %v1098
        %v1105 = vrsqrt.pop %v1099
        %v1106 = vmul.f32 %v1064, %v1100
        %v1107 = vmul.f32 %v1065, %v1101
        %v1108 = vmul.f32 %v1066, %v1102
        %v1109 = vmul.f32 %v1067, %v1103
        %v1110 = vmul.f32 %v1068, %v1104
        %v1111 = vmul.f32 %v1069, %v1105
        %v1113 = vlaneseq
        %v1114 = vshrl.u32 %v1113, 7
        %v1115 = vsub.s32 0, %v1114
        %v1116 = vrot.slane %v1043, %v1115
        %v1118 = vmul.f32 %v1106, %v1116
        %v1119 = vmul.f32 %v1107, %v1116
        %v1120 = vmul.f32 %v1108, %v1116
        %v1121 = vmul.f32 %v1109, %v1116
        %v1122 = vmul.f32 %v1110, %v1116
        %v1123 = vmul.f32 %v1111, %v1116
        %v1125 = vlaneseq
        %v1126 = vshrl.u32 %v1125, 7
        %v1127 = vsub.s32 0, %v1126
        %v1128 = vrot.slane %v1044, %v1127
        %v1130 = vadd.f32 %v1118, %v1128
        %v1131 = vadd.f32 %v1119, %v1128
        %v1132 = vadd.f32 %v1120, %v1128
        %v1133 = vadd.f32 %v1121, %v1128
        %v1134 = vadd.f32 %v1122, %v1128
        %v1135 = vadd.f32 %v1123, %v1128
        %1136 = vst [vmem:[#allocation2] sm:$0xff] %v1130
        %1137 = vst [vmem:[#allocation2 + $0x8] sm:$0xff] %v1131
        %1138 = vst [vmem:[#allocation2 + $0x10] sm:$0xff] %v1132
        %1139 = vst [vmem:[#allocation2 + $0x18] sm:$0xff] %v1133
        %1140 = vst [vmem:[#allocation2 + $0x20] sm:$0xff] %v1134
        %1141 = vst [vmem:[#allocation2 + $0x28] sm:$0xff] %v1135
      $region104: #{clip_image_extractor_forward.1} parent=99 // pred_fallthru
        _
      %v1142 = vld [vmem:[#allocation2] sm:$0xff]
      %v1143 = vld [vmem:[#allocation2 + $0x8] sm:$0xff]
      %v1144 = vld [vmem:[#allocation2 + $0x10] sm:$0xff]
      %v1145 = vld [vmem:[#allocation2 + $0x18] sm:$0xff]
      %v1146 = vld [vmem:[#allocation2 + $0x20] sm:$0xff]
      %v1147 = vld [vmem:[#allocation2 + $0x28] sm:$0xff]
      %v1148 = vld [vmem:[%s797] sm:$0x1]
      %v1149 = vld [vmem:[%s800] sm:$0x1]
      %1150 = vadd.xlane.f32.xlu0 %v1142
      %v1151 = vpop.xlane.xlu0 %1150
      %1152 = vadd.xlane.f32.xlu0 %v1143
      %v1153 = vpop.xlane.xlu0 %1152
      %1154 = vadd.xlane.f32.xlu0 %v1144
      %v1155 = vpop.xlane.xlu0 %1154
      %1156 = vadd.xlane.f32.xlu0 %v1145
      %v1157 = vpop.xlane.xlu0 %1156
      %1158 = vadd.xlane.f32.xlu0 %v1146
      %v1159 = vpop.xlane.xlu0 %1158
      %1160 = vadd.xlane.f32.xlu0 %v1147
      %v1161 = vpop.xlane.xlu0 %1160
      %v1162 = vrcp.pop 128.0
      %v1163 = vmul.f32 %v1151, %v1162
      %v1164 = vmul.f32 %v1153, %v1162
      %v1165 = vmul.f32 %v1155, %v1162
      %v1166 = vmul.f32 %v1157, %v1162
      %v1167 = vmul.f32 %v1159, %v1162
      %v1168 = vmul.f32 %v1161, %v1162
      %v1169 = vsub.f32 %v1142, %v1163
      %v1170 = vsub.f32 %v1143, %v1164
      %v1171 = vsub.f32 %v1144, %v1165
      %v1172 = vsub.f32 %v1145, %v1166
      %v1173 = vsub.f32 %v1146, %v1167
      %v1174 = vsub.f32 %v1147, %v1168
      %v1175 = vmul.f32 %v1169, %v1169
      %v1176 = vmul.f32 %v1170, %v1170
      %v1177 = vmul.f32 %v1171, %v1171
      %v1178 = vmul.f32 %v1172, %v1172
      %v1179 = vmul.f32 %v1173, %v1173
      %v1180 = vmul.f32 %v1174, %v1174
      %1181 = vadd.xlane.f32.xlu0 %v1175
      %v1182 = vpop.xlane.xlu0 %1181
      %1183 = vadd.xlane.f32.xlu0 %v1176
      %v1184 = vpop.xlane.xlu0 %1183
      %1185 = vadd.xlane.f32.xlu0 %v1177
      %v1186 = vpop.xlane.xlu0 %1185
      %1187 = vadd.xlane.f32.xlu0 %v1178
      %v1188 = vpop.xlane.xlu0 %1187
      %1189 = vadd.xlane.f32.xlu0 %v1179
      %v1190 = vpop.xlane.xlu0 %1189
      %1191 = vadd.xlane.f32.xlu0 %v1180
      %v1192 = vpop.xlane.xlu0 %1191
      %v1193 = vmul.f32 %v1182, %v1162
      %v1194 = vmul.f32 %v1184, %v1162
      %v1195 = vmul.f32 %v1186, %v1162
      %v1196 = vmul.f32 %v1188, %v1162
      %v1197 = vmul.f32 %v1190, %v1162
      %v1198 = vmul.f32 %v1192, %v1162
      %v1199 = vadd.f32 %v1193, 1e-05
      %v1200 = vadd.f32 %v1194, 1e-05
      %v1201 = vadd.f32 %v1195, 1e-05
      %v1202 = vadd.f32 %v1196, 1e-05
      %v1203 = vadd.f32 %v1197, 1e-05
      %v1204 = vadd.f32 %v1198, 1e-05
      %v1205 = vrsqrt.pop %v1199
      %v1206 = vrsqrt.pop %v1200
      %v1207 = vrsqrt.pop %v1201
      %v1208 = vrsqrt.pop %v1202
      %v1209 = vrsqrt.pop %v1203
      %v1210 = vrsqrt.pop %v1204
      %v1211 = vmul.f32 %v1169, %v1205
      %v1212 = vmul.f32 %v1170, %v1206
      %v1213 = vmul.f32 %v1171, %v1207
      %v1214 = vmul.f32 %v1172, %v1208
      %v1215 = vmul.f32 %v1173, %v1209
      %v1216 = vmul.f32 %v1174, %v1210
      %v1218 = vlaneseq
      %v1219 = vshrl.u32 %v1218, 7
      %v1220 = vsub.s32 0, %v1219
      %v1221 = vrot.slane %v1148, %v1220
      %v1223 = vmul.f32 %v1211, %v1221
      %v1224 = vmul.f32 %v1212, %v1221
      %v1225 = vmul.f32 %v1213, %v1221
      %v1226 = vmul.f32 %v1214, %v1221
      %v1227 = vmul.f32 %v1215, %v1221
      %v1228 = vmul.f32 %v1216, %v1221
      %v1230 = vlaneseq
      %v1231 = vshrl.u32 %v1230, 7
      %v1232 = vsub.s32 0, %v1231
      %v1233 = vrot.slane %v1149, %v1232
      %v1235 = vadd.f32 %v1223, %v1233
      %v1236 = vadd.f32 %v1224, %v1233
      %v1237 = vadd.f32 %v1225, %v1233
      %v1238 = vadd.f32 %v1226, %v1233
      %v1239 = vadd.f32 %v1227, %v1233
      %v1240 = vadd.f32 %v1228, %v1233
      %v1241 = vpack.c.bf16 %v1236, %v1235
      %v1242 = vpack.c.bf16 %v1238, %v1237
      %v1243 = vpack.c.bf16 %v1240, %v1239
      %v1244 = vld [vmem:[%s805] sm:$0xff]
      %v1245 = vld [vmem:[%s805 + $0x8] sm:$0xf]
      %v1246 = vld [vmem:[%s805 + $0xc] sm:$0xff]
      %v1247 = vld [vmem:[%s805 + $0x14] sm:$0xf]
      %v1248 = vld [vmem:[%s805 + $0x18] sm:$0xff]
      %v1249 = vld [vmem:[%s805 + $0x20] sm:$0xf]
      %v1250 = vld [vmem:[%s805 + $0x24] sm:$0xff]
      %v1251 = vld [vmem:[%s805 + $0x2c] sm:$0xf]
      %v1252 = vld [vmem:[%s805 + $0x30] sm:$0xff]
      %v1253 = vld [vmem:[%s805 + $0x38] sm:$0xf]
      %v1254 = vld [vmem:[%s805 + $0x3c] sm:$0xff]
      %v1255 = vld [vmem:[%s805 + $0x44] sm:$0xf]
      %v1256 = vld [vmem:[%s805 + $0x48] sm:$0xff]
      %v1257 = vld [vmem:[%s805 + $0x50] sm:$0xf]
      %v1258 = vld [vmem:[%s805 + $0x54] sm:$0xff]
      %v1259 = vld [vmem:[%s805 + $0x5c] sm:$0xf]
      %v1260 = vld [vmem:[%s805 + $0x60] sm:$0xff]
      %v1261 = vld [vmem:[%s805 + $0x68] sm:$0xf]
      %v1262 = vld [vmem:[%s805 + $0x6c] sm:$0xff]
      %v1263 = vld [vmem:[%s805 + $0x74] sm:$0xf]
      %v1264 = vld [vmem:[%s805 + $0x78] sm:$0xff]
      %v1265 = vld [vmem:[%s805 + $0x80] sm:$0xf]
      %v1266 = vld [vmem:[%s805 + $0x84] sm:$0xff]
      %v1267 = vld [vmem:[%s805 + $0x8c] sm:$0xf]
      %v1268 = vld [vmem:[%s805 + $0x90] sm:$0xff]
      %v1269 = vld [vmem:[%s805 + $0x98] sm:$0xf]
      %v1270 = vld [vmem:[%s805 + $0x9c] sm:$0xff]
      %v1271 = vld [vmem:[%s805 + $0xa4] sm:$0xf]
      %v1272 = vld [vmem:[%s805 + $0xa8] sm:$0xff]
      %v1273 = vld [vmem:[%s805 + $0xb0] sm:$0xf]
      %v1274 = vld [vmem:[%s805 + $0xb4] sm:$0xff]
      %v1275 = vld [vmem:[%s805 + $0xbc] sm:$0xf]
      %v1276 = vld [vmem:[%s809] sm:$0x7]
      %v1278 = vlaneseq
      %v1279 = vshrl.u32 %v1278, 7
      %v1280 = vsub.s32 0, %v1279
      %v1281 = vrot.slane %v1276, %v1280
      %v1282 = vlaneseq
      %v1283 = vshrl.u32 %v1282, 7
      %v1284 = vsub.s32 1, %v1283
      %v1285 = vrot.slane %v1276, %v1284
      %v1286 = vlaneseq
      %v1287 = vshrl.u32 %v1286, 7
      %v1288 = vsub.s32 2, %v1287
      %v1289 = vrot.slane %v1276, %v1288
      %v1325 = vunpack.c.l.b16 %v1244
      %v1326 = vunpack.c.h.b16 %v1244
      %v1327 = vunpack.c.l.b16 %v1245
      %v1328 = vunpack.c.l.b16 %v1246
      %v1329 = vunpack.c.h.b16 %v1246
      %v1330 = vunpack.c.l.b16 %v1247
      %v1331 = vunpack.c.l.b16 %v1248
      %v1332 = vunpack.c.h.b16 %v1248
      %v1333 = vunpack.c.l.b16 %v1249
      %v1334 = vunpack.c.l.b16 %v1250
      %v1335 = vunpack.c.h.b16 %v1250
      %v1336 = vunpack.c.l.b16 %v1251
      %v1337 = vunpack.c.l.b16 %v1252
      %v1338 = vunpack.c.h.b16 %v1252
      %v1339 = vunpack.c.l.b16 %v1253
      %v1340 = vunpack.c.l.b16 %v1254
      %v1341 = vunpack.c.h.b16 %v1254
      %v1342 = vunpack.c.l.b16 %v1255
      %v1343 = vunpack.c.l.b16 %v1256
      %v1344 = vunpack.c.h.b16 %v1256
      %v1345 = vunpack.c.l.b16 %v1257
      %v1346 = vunpack.c.l.b16 %v1258
      %v1347 = vunpack.c.h.b16 %v1258
      %v1348 = vunpack.c.l.b16 %v1259
      %v1349 = vunpack.c.l.b16 %v1260
      %v1350 = vunpack.c.h.b16 %v1260
      %v1351 = vunpack.c.l.b16 %v1261
      %v1352 = vunpack.c.l.b16 %v1262
      %v1353 = vunpack.c.h.b16 %v1262
      %v1354 = vunpack.c.l.b16 %v1263
      %v1355 = vunpack.c.l.b16 %v1264
      %v1356 = vunpack.c.h.b16 %v1264
      %v1357 = vunpack.c.l.b16 %v1265
      %v1358 = vunpack.c.l.b16 %v1266
      %v1359 = vunpack.c.h.b16 %v1266
      %v1360 = vunpack.c.l.b16 %v1267
      %v1361 = vunpack.c.l.b16 %v1268
      %v1362 = vunpack.c.h.b16 %v1268
      %v1363 = vunpack.c.l.b16 %v1269
      %v1364 = vunpack.c.l.b16 %v1270
      %v1365 = vunpack.c.h.b16 %v1270
      %v1366 = vunpack.c.l.b16 %v1271
      %v1367 = vunpack.c.l.b16 %v1272
      %v1368 = vunpack.c.h.b16 %v1272
      %v1369 = vunpack.c.l.b16 %v1273
      %v1370 = vunpack.c.l.b16 %v1274
      %v1371 = vunpack.c.h.b16 %v1274
      %v1372 = vunpack.c.l.b16 %v1275
      %v1373 = vpack.c.b16 %v1328, %v1325
      %v1374 = vpack.c.b16 %v1329, %v1326
      %v1375 = vpack.c.b16 %v1330, %v1327
      %v1376 = vpack.c.b16 %v1334, %v1331
      %v1377 = vpack.c.b16 %v1335, %v1332
      %v1378 = vpack.c.b16 %v1336, %v1333
      %v1379 = vpack.c.b16 %v1340, %v1337
      %v1380 = vpack.c.b16 %v1341, %v1338
      %v1381 = vpack.c.b16 %v1342, %v1339
      %v1382 = vpack.c.b16 %v1346, %v1343
      %v1383 = vpack.c.b16 %v1347, %v1344
      %v1384 = vpack.c.b16 %v1348, %v1345
      %v1385 = vpack.c.b16 %v1352, %v1349
      %v1386 = vpack.c.b16 %v1353, %v1350
      %v1387 = vpack.c.b16 %v1354, %v1351
      %v1388 = vpack.c.b16 %v1358, %v1355
      %v1389 = vpack.c.b16 %v1359, %v1356
      %v1390 = vpack.c.b16 %v1360, %v1357
      %v1391 = vpack.c.b16 %v1364, %v1361
      %v1392 = vpack.c.b16 %v1365, %v1362
      %v1393 = vpack.c.b16 %v1366, %v1363
      %v1394 = vpack.c.b16 %v1370, %v1367
      %v1395 = vpack.c.b16 %v1371, %v1368
      %v1396 = vpack.c.b16 %v1372, %v1369
      %1421 = vmatprep.subr.bf16.mxu0 %v1395
      %1422 = vmatpush1.bf16.msra.mxu0 %v1394
      %1423 = vmatprep.subr.bf16.mxu0 %v1392
      %1424 = vmatpush1.bf16.msra.mxu0 %v1391
      %1425 = vmatprep.subr.bf16.mxu0 %v1389
      %1426 = vmatpush1.bf16.msra.mxu0 %v1388
      %1427 = vmatprep.subr.bf16.mxu0 %v1386
      %1428 = vmatpush1.bf16.msra.mxu0 %v1385
      %1429 = vmatprep.subr.bf16.mxu0 %v1383
      %1430 = vmatpush1.bf16.msra.mxu0 %v1382
      %1431 = vmatprep.subr.bf16.mxu0 %v1380
      %1432 = vmatpush1.bf16.msra.mxu0 %v1379
      %1433 = vmatprep.subr.bf16.mxu0 %v1377
      %1434 = vmatpush1.bf16.msra.mxu0 %v1376
      %1435 = vmatprep.subr.bf16.mxu0 %v1374
      %1436 = vmatpush1.bf16.msra.mxu0 %v1373
      %1437 = vmatprep.subr.bf16.mxu0 0
      %1438 = vmatpush2.bf16.msra.mxu0 0
      %1439 = vmatprep.subr.bf16.mxu0 0
      %1440 = vmatpush2.bf16.msra.mxu0 0
      %1441 = vmatprep.subr.bf16.mxu0 0
      %1442 = vmatpush2.bf16.msra.mxu0 0
      %1443 = vmatprep.subr.bf16.mxu0 0
      %1444 = vmatpush2.bf16.msra.mxu0 0
      %1445 = vmatprep.subr.bf16.mxu0 0
      %1446 = vmatpush2.bf16.msra.mxu0 0
      %1447 = vmatprep.subr.bf16.mxu0 0
      %1448 = vmatpush2.bf16.msra.mxu0 0
      %1449 = vmatprep.subr.bf16.mxu0 0
      %1450 = vmatpush2.bf16.msra.mxu0 0
      %1451 = vmatprep.subr.bf16.mxu0 0
      %1452 = vmatpush2.bf16.msra.mxu0 0
      %1453 = vmatprep.mubr.bf16.mxu0 0
      %1454 = vmatmul.mubr.bf16.gmra.mxu0 %v1241
      %v1455 = vpop.f32.mrf.mxu0
      %v1456 = vadd.f32 %v1281, %v1455
      %v1457 = vpop.f32.mrf.mxu0
      %v1458 = vadd.f32 %v1285, %v1457
      %v1459 = vpop.f32.mrf.mxu0
      %v1460 = vadd.f32 %v1281, %v1459
      %v1461 = vpop.f32.mrf.mxu0
      %v1462 = vadd.f32 %v1285, %v1461
      %1463 = vmatprep.mubr.bf16.mxu0 0
      %1464 = vmatmul.mubr.bf16.gmra.mxu0 %v1242
      %v1465 = vpop.f32.mrf.mxu0
      %v1466 = vadd.f32 %v1281, %v1465
      %v1467 = vpop.f32.mrf.mxu0
      %v1468 = vadd.f32 %v1285, %v1467
      %v1469 = vpop.f32.mrf.mxu0
      %v1470 = vadd.f32 %v1281, %v1469
      %v1471 = vpop.f32.mrf.mxu0
      %v1472 = vadd.f32 %v1285, %v1471
      %1473 = vmatprep.mubr.bf16.mxu0 0
      %1474 = vmatmul.mubr.bf16.gmra.mxu0 %v1243
      %v1475 = vpop.f32.mrf.mxu0
      %v1476 = vadd.f32 %v1281, %v1475
      %v1477 = vpop.f32.mrf.mxu0
      %v1478 = vadd.f32 %v1285, %v1477
      %v1479 = vpop.f32.mrf.mxu0
      %v1480 = vadd.f32 %v1281, %v1479
      %v1481 = vpop.f32.mrf.mxu0
      %v1482 = vadd.f32 %v1285, %v1481
      %1483 = vdwg.mxu0
      %1484 = vmatprep.subr.bf16.mxu0 0
      %1485 = vmatpush1.bf16.msra.mxu0 %v1396
      %1486 = vmatprep.subr.bf16.mxu0 0
      %1487 = vmatpush1.bf16.msra.mxu0 %v1393
      %1488 = vmatprep.subr.bf16.mxu0 0
      %1489 = vmatpush1.bf16.msra.mxu0 %v1390
      %1490 = vmatprep.subr.bf16.mxu0 0
      %1491 = vmatpush1.bf16.msra.mxu0 %v1387
      %1492 = vmatprep.subr.bf16.mxu0 0
      %1493 = vmatpush1.bf16.msra.mxu0 %v1384
      %1494 = vmatprep.subr.bf16.mxu0 0
      %1495 = vmatpush1.bf16.msra.mxu0 %v1381
      %1496 = vmatprep.subr.bf16.mxu0 0
      %1497 = vmatpush1.bf16.msra.mxu0 %v1378
      %1498 = vmatprep.subr.bf16.mxu0 0
      %1499 = vmatpush1.bf16.msra.mxu0 %v1375
      %1500 = vmatprep.subr.bf16.mxu0 0
      %1501 = vmatpush2.bf16.msra.mxu0 0
      %1502 = vmatprep.subr.bf16.mxu0 0
      %1503 = vmatpush2.bf16.msra.mxu0 0
      %1504 = vmatprep.subr.bf16.mxu0 0
      %1505 = vmatpush2.bf16.msra.mxu0 0
      %1506 = vmatprep.subr.bf16.mxu0 0
      %1507 = vmatpush2.bf16.msra.mxu0 0
      %1508 = vmatprep.subr.bf16.mxu0 0
      %1509 = vmatpush2.bf16.msra.mxu0 0
      %1510 = vmatprep.subr.bf16.mxu0 0
      %1511 = vmatpush2.bf16.msra.mxu0 0
      %1512 = vmatprep.subr.bf16.mxu0 0
      %1513 = vmatpush2.bf16.msra.mxu0 0
      %1514 = vmatprep.subr.bf16.mxu0 0
      %1515 = vmatpush2.bf16.msra.mxu0 0
      %1516 = vmatprep.mubr.bf16.mxu0 0
      %1517 = vmatmul.mubr.bf16.gmra.mxu0 %v1241
      %v1518 = vpop.f32.mrf.mxu0
      %v1519 = vadd.f32 %v1289, %v1518
      %v1520 = vpop.f32.mrf.mxu0
      %v1521 = vpop.f32.mrf.mxu0
      %v1522 = vadd.f32 %v1289, %v1521
      %v1523 = vpop.f32.mrf.mxu0
      %1524 = vmatprep.mubr.bf16.mxu0 0
      %1525 = vmatmul.mubr.bf16.gmra.mxu0 %v1242
      %v1526 = vpop.f32.mrf.mxu0
      %v1527 = vadd.f32 %v1289, %v1526
      %v1528 = vpop.f32.mrf.mxu0
      %v1529 = vpop.f32.mrf.mxu0
      %v1530 = vadd.f32 %v1289, %v1529
      %v1531 = vpop.f32.mrf.mxu0
      %1532 = vmatprep.mubr.bf16.mxu0 0
      %1533 = vmatmul.mubr.bf16.gmra.mxu0 %v1243
      %v1534 = vpop.f32.mrf.mxu0
      %v1535 = vadd.f32 %v1289, %v1534
      %v1536 = vpop.f32.mrf.mxu0
      %v1537 = vpop.f32.mrf.mxu0
      %v1538 = vadd.f32 %v1289, %v1537
      %v1539 = vpop.f32.mrf.mxu0
      %1540 = vdwg.mxu0
      %v1541 = vpack.c.bf16 %v1460, %v1456
      %v1542 = vpack.c.bf16 %v1462, %v1458
      %v1543 = vpack.c.bf16 %v1522, %v1519
      %v1544 = vpack.c.bf16 %v1470, %v1466
      %v1545 = vpack.c.bf16 %v1472, %v1468
      %v1546 = vpack.c.bf16 %v1530, %v1527
      %v1547 = vpack.c.bf16 %v1480, %v1476
      %v1548 = vpack.c.bf16 %v1482, %v1478
      %v1549 = vpack.c.bf16 %v1538, %v1535
      %v1559 = vunpack.c.l.b16 %v1541
      %v1560 = vunpack.c.l.b16 %v1542
      %v1561 = vunpack.c.l.b16 %v1543
      %v1562 = vunpack.c.h.b16 %v1541
      %v1563 = vunpack.c.h.b16 %v1542
      %v1564 = vunpack.c.h.b16 %v1543
      %v1565 = vunpack.c.l.b16 %v1544
      %v1566 = vunpack.c.l.b16 %v1545
      %v1567 = vunpack.c.l.b16 %v1546
      %v1568 = vunpack.c.h.b16 %v1544
      %v1569 = vunpack.c.h.b16 %v1545
      %v1570 = vunpack.c.h.b16 %v1546
      %v1571 = vunpack.c.l.b16 %v1547
      %v1572 = vunpack.c.l.b16 %v1548
      %v1573 = vunpack.c.l.b16 %v1549
      %v1574 = vunpack.c.h.b16 %v1547
      %v1575 = vunpack.c.h.b16 %v1548
      %v1576 = vunpack.c.h.b16 %v1549
      %v1577 = vpack.c.b16 %v1560, %v1559
      %v1578 = vpack.c.b16 %v1561, %v1561
      %v1579 = vpack.c.b16 %v1563, %v1562
      %v1580 = vpack.c.b16 %v1564, %v1564
      %v1581 = vpack.c.b16 %v1566, %v1565
      %v1582 = vpack.c.b16 %v1567, %v1567
      %v1583 = vpack.c.b16 %v1569, %v1568
      %v1584 = vpack.c.b16 %v1570, %v1570
      %v1585 = vpack.c.b16 %v1572, %v1571
      %v1586 = vpack.c.b16 %v1573, %v1573
      %v1587 = vpack.c.b16 %v1575, %v1574
      %v1588 = vpack.c.b16 %v1576, %v1576
      %1601 = vst [vmem:[#allocation3] sm:$0xff] %v1577
      %1602 = vst [vmem:[#allocation3 + $0x8] sm:$0xf] %v1578
      %1603 = vst [vmem:[#allocation3 + $0xc] sm:$0xff] %v1579
      %1604 = vst [vmem:[#allocation3 + $0x14] sm:$0xf] %v1580
      %1605 = vst [vmem:[#allocation3 + $0x18] sm:$0xff] %v1581
      %1606 = vst [vmem:[#allocation3 + $0x20] sm:$0xf] %v1582
      %1607 = vst [vmem:[#allocation3 + $0x24] sm:$0xff] %v1583
      %1608 = vst [vmem:[#allocation3 + $0x2c] sm:$0xf] %v1584
      %1609 = vst [vmem:[#allocation3 + $0x30] sm:$0xff] %v1585
      %1610 = vst [vmem:[#allocation3 + $0x38] sm:$0xf] %v1586
      %1611 = vst [vmem:[#allocation3 + $0x3c] sm:$0xff] %v1587
      %1612 = vst [vmem:[#allocation3 + $0x44] sm:$0xf] %v1588
      %v1613 = vld [vmem:[%s0] sm:$0x1]
      %v1614 = vld [vmem:[#allocation3] sm:$0xf]
      %v1615 = vld [vmem:[#allocation3 + $0xc] sm:$0xf]
      %v1616 = vld [vmem:[#allocation3 + $0x18] sm:$0xf]
      %v1617 = vld [vmem:[#allocation3 + $0x4] sm:$0xf]
      %v1618 = vld [vmem:[#allocation3 + $0x10] sm:$0xf]
      %v1619 = vld [vmem:[#allocation3 + $0x1c] sm:$0xf]
      %v1620 = vld [vmem:[#allocation3 + $0x8] sm:$0xf]
      %v1621 = vld [vmem:[#allocation3 + $0x14] sm:$0xf]
      %v1622 = vld [vmem:[#allocation3 + $0x20] sm:$0xf]
      %v1624 = vlaneseq
      %v1625 = vshrl.u32 %v1624, 7
      %v1626 = vsub.s32 0, %v1625
      %v1627 = vrot.slane %v1613, %v1626
      %v1632 = vunpack.c.l.b16 %v1614
      %v1633 = vunpack.c.l.b16 %v1615
      %v1634 = vunpack.c.l.b16 %v1616
      %v1635 = vpack.c.b16 %v1633, %v1632
      %v1636 = vpack.c.b16 %v1634, %v1634
      %v1640 = vunpack.c.l.b16 %v1617
      %v1641 = vunpack.c.l.b16 %v1618
      %v1642 = vunpack.c.l.b16 %v1619
      %v1643 = vpack.c.b16 %v1641, %v1640
      %v1644 = vpack.c.b16 %v1642, %v1642
      %vm1645 = vcmask 261120
      %v1647 = vsel %vm1645, %v1635, 0
      %v1650 = vsel %vm1645, %v1636, 0
      %v1653 = vsel %vm1645, %v1643, 0
      %v1656 = vsel %vm1645, %v1644, 0
      %1658 = vmatprep.subr.bf16.mxu0 0
      %1659 = vmatpush1.bf16.xpose.msra.mxu0 0
      %1660 = vmatprep.subr.bf16.mxu0 0
      %1661 = vmatpush1.bf16.xpose.msra.mxu0 0
      %1662 = vmatprep.subr.bf16.mxu0 0
      %1663 = vmatpush1.bf16.xpose.msra.mxu0 0
      %1664 = vmatprep.subr.bf16.mxu0 0
      %1665 = vmatpush1.bf16.xpose.msra.mxu0 0
      %1666 = vmatprep.subr.bf16.mxu0 0
      %1667 = vmatpush1.bf16.xpose.msra.mxu0 0
      %1668 = vmatprep.subr.bf16.mxu0 0
      %1669 = vmatpush1.bf16.xpose.msra.mxu0 0
      %1670 = vmatprep.subr.bf16.mxu0 0
      %1671 = vmatpush1.bf16.xpose.msra.mxu0 %v1656
      %1672 = vmatprep.subr.bf16.mxu0 0
      %1673 = vmatpush1.bf16.xpose.msra.mxu0 %v1653
      %1674 = vmatprep.subr.bf16.mxu0 0
      %1675 = vmatpush2.bf16.xpose.msra.mxu0 0
      %1676 = vmatprep.subr.bf16.mxu0 0
      %1677 = vmatpush2.bf16.xpose.msra.mxu0 0
      %1678 = vmatprep.subr.bf16.mxu0 0
      %1679 = vmatpush2.bf16.xpose.msra.mxu0 0
      %1680 = vmatprep.subr.bf16.mxu0 0
      %1681 = vmatpush2.bf16.xpose.msra.mxu0 0
      %1682 = vmatprep.subr.bf16.mxu0 0
      %1683 = vmatpush2.bf16.xpose.msra.mxu0 0
      %1684 = vmatprep.subr.bf16.mxu0 0
      %1685 = vmatpush2.bf16.xpose.msra.mxu0 0
      %1686 = vmatprep.subr.bf16.mxu0 0
      %1687 = vmatpush2.bf16.xpose.msra.mxu0 0
      %1688 = vmatprep.subr.bf16.mxu0 0
      %1689 = vmatpush2.bf16.xpose.msra.mxu0 0
      %1690 = vmatprep.mubr.bf16.mxu0 0
      %1691 = vmatmul.mubr.bf16.gmra.mxu0 %v1647
      %v1692 = vpop.f32.mrf.mxu0
      %v1693 = vadd.f32 %v1627, %v1692
      %v1694 = vpop.f32.mrf.mxu0
      %v1695 = vpop.f32.mrf.mxu0
      %v1696 = vadd.f32 %v1627, %v1695
      %v1697 = vpop.f32.mrf.mxu0
      %1698 = vmatprep.mubr.bf16.mxu0 0
      %1699 = vmatmul.mubr.bf16.gmra.mxu0 %v1650
      %v1700 = vpop.f32.mrf.mxu0
      %v1701 = vadd.f32 %v1627, %v1700
      %v1702 = vpop.f32.mrf.mxu0
      %v1703 = vpop.f32.mrf.mxu0
      %v1704 = vpop.f32.mrf.mxu0
      %1705 = vdwg.mxu0
      %vm1706 = vcmask 195584
      %v1707 = vsel %vm1706, %v1693, -inf
      %1708 = vmax.xlane.f32.xlu0 %v1707
      %v1709 = vpop.xlane.xlu0 %1708
      %v1710 = vsel %vm1706, %v1696, -inf
      %1711 = vmax.xlane.f32.xlu0 %v1710
      %v1712 = vpop.xlane.xlu0 %1711
      %v1713 = vsel %vm1706, %v1701, -inf
      %1714 = vmax.xlane.f32.xlu0 %v1713
      %v1715 = vpop.xlane.xlu0 %1714
      %v1716 = vsub.f32 %v1693, %v1709
      %v1717 = vsub.f32 %v1696, %v1712
      %v1718 = vsub.f32 %v1701, %v1715
      %v1719 = vmul.f32 %v1716, 1.442695
      %v1720 = vpow.pop %v1719
      %v1721 = vmul.f32 %v1717, 1.442695
      %v1722 = vpow.pop %v1721
      %v1723 = vmul.f32 %v1718, 1.442695
      %v1724 = vpow.pop %v1723
      %v1725 = vsel %vm1706, %v1720, 0.0
      %1726 = vadd.xlane.f32.xlu0 %v1725
      %v1727 = vpop.xlane.xlu0 %1726
      %v1728 = vsel %vm1706, %v1722, 0.0
      %1729 = vadd.xlane.f32.xlu0 %v1728
      %v1730 = vpop.xlane.xlu0 %1729
      %v1731 = vsel %vm1706, %v1724, 0.0
      %1732 = vadd.xlane.f32.xlu0 %v1731
      %v1733 = vpop.xlane.xlu0 %1732
      %v1734 = vrcp.pop %v1727
      %v1735 = vrcp.pop %v1730
      %v1736 = vrcp.pop %v1733
      %v1737 = vpack.c.bf16 %v1722, %v1720
      %v1738 = vpack.c.bf16 %v1724, %v1724
      %v1742 = vunpack.c.l.b16 %v1620
      %v1743 = vunpack.c.l.b16 %v1621
      %v1744 = vunpack.c.l.b16 %v1622
      %v1745 = vpack.c.b16 %v1743, %v1742
      %v1746 = vpack.c.b16 %v1744, %v1744
      %v1749 = vsel %vm1706, %v1737, 0
      %v1752 = vsel %vm1706, %v1738, 0
      %vm1754 = vcmask 1043456
      %v1756 = vsel %vm1754, %v1746, 0
      %1758 = vmatprep.subr.bf16.mxu0 0
      %1759 = vmatpush1.bf16.msra.mxu0 0
      %1760 = vmatprep.subr.bf16.mxu0 0
      %1761 = vmatpush1.bf16.msra.mxu0 0
      %1762 = vmatprep.subr.bf16.mxu0 0
      %1763 = vmatpush1.bf16.msra.mxu0 0
      %1764 = vmatprep.subr.bf16.mxu0 0
      %1765 = vmatpush1.bf16.msra.mxu0 0
      %1766 = vmatprep.subr.bf16.mxu0 0
      %1767 = vmatpush1.bf16.msra.mxu0 0
      %1768 = vmatprep.subr.bf16.mxu0 0
      %1769 = vmatpush1.bf16.msra.mxu0 0
      %1770 = vmatprep.subr.bf16.mxu0 0
      %1771 = vmatpush1.bf16.msra.mxu0 %v1756
      %1772 = vmatprep.subr.bf16.mxu0 0
      %1773 = vmatpush1.bf16.msra.mxu0 %v1745
      %1774 = vmatprep.subr.bf16.mxu0 0
      %1775 = vmatpush2.bf16.msra.mxu0 0
      %1776 = vmatprep.subr.bf16.mxu0 0
      %1777 = vmatpush2.bf16.msra.mxu0 0
      %1778 = vmatprep.subr.bf16.mxu0 0
      %1779 = vmatpush2.bf16.msra.mxu0 0
      %1780 = vmatprep.subr.bf16.mxu0 0
      %1781 = vmatpush2.bf16.msra.mxu0 0
      %1782 = vmatprep.subr.bf16.mxu0 0
      %1783 = vmatpush2.bf16.msra.mxu0 0
      %1784 = vmatprep.subr.bf16.mxu0 0
      %1785 = vmatpush2.bf16.msra.mxu0 0
      %1786 = vmatprep.subr.bf16.mxu0 0
      %1787 = vmatpush2.bf16.msra.mxu0 0
      %1788 = vmatprep.subr.bf16.mxu0 0
      %1789 = vmatpush2.bf16.msra.mxu0 0
      %1790 = vmatprep.mubr.bf16.mxu0 0
      %1791 = vmatmul.mubr.bf16.gmra.mxu0 %v1749
      %v1792 = vpop.f32.mrf.mxu0
      %v1793 = vadd.f32 0.0, %v1792
      %v1794 = vpop.f32.mrf.mxu0
      %v1795 = vpop.f32.mrf.mxu0
      %v1796 = vadd.f32 0.0, %v1795
      %v1797 = vpop.f32.mrf.mxu0
      %1798 = vmatprep.mubr.bf16.mxu0 0
      %1799 = vmatmul.mubr.bf16.gmra.mxu0 %v1752
      %v1800 = vpop.f32.mrf.mxu0
      %v1801 = vadd.f32 0.0, %v1800
      %v1802 = vpop.f32.mrf.mxu0
      %v1803 = vpop.f32.mrf.mxu0
      %v1804 = vpop.f32.mrf.mxu0
      %1805 = vdwg.mxu0
      %v1806 = vmul.f32 %v1793, %v1734
      %v1807 = vmul.f32 %v1796, %v1735
      %v1808 = vmul.f32 %v1801, %v1736
      %v1809 = vpack.c.bf16 %v1807, %v1806
      %v1810 = vpack.c.bf16 %v1808, %v1808
      %v1811 = vld [vmem:[%s814] sm:$0xf]
      %v1812 = vld [vmem:[%s814 + $0x4] sm:$0xf]
      %v1813 = vld [vmem:[%s814 + $0x8] sm:$0xf]
      %v1814 = vld [vmem:[%s814 + $0xc] sm:$0xf]
      %1815 = vrot.lane.b32.xlu0 %v1635, 96
      %v1816 = vpop.permute.xlu0 %1815
      %1817 = vrot.lane.b32.xlu0 %v1636, 96
      %v1818 = vpop.permute.xlu0 %1817
      %1819 = vrot.lane.b32.xlu0 %v1643, 96
      %v1820 = vpop.permute.xlu0 %1819
      %1821 = vrot.lane.b32.xlu0 %v1644, 96
      %v1822 = vpop.permute.xlu0 %1821
      %v1824 = vsel %vm1645, %v1816, 0
      %v1827 = vsel %vm1645, %v1818, 0
      %v1830 = vsel %vm1645, %v1820, 0
      %v1833 = vsel %vm1645, %v1822, 0
      %1835 = vmatprep.subr.bf16.mxu0 0
      %1836 = vmatpush1.bf16.xpose.msra.mxu0 0
      %1837 = vmatprep.subr.bf16.mxu0 0
      %1838 = vmatpush1.bf16.xpose.msra.mxu0 0
      %1839 = vmatprep.subr.bf16.mxu0 0
      %1840 = vmatpush1.bf16.xpose.msra.mxu0 0
      %1841 = vmatprep.subr.bf16.mxu0 0
      %1842 = vmatpush1.bf16.xpose.msra.mxu0 0
      %1843 = vmatprep.subr.bf16.mxu0 0
      %1844 = vmatpush1.bf16.xpose.msra.mxu0 0
      %1845 = vmatprep.subr.bf16.mxu0 0
      %1846 = vmatpush1.bf16.xpose.msra.mxu0 0
      %1847 = vmatprep.subr.bf16.mxu0 0
      %1848 = vmatpush1.bf16.xpose.msra.mxu0 %v1833
      %1849 = vmatprep.subr.bf16.mxu0 0
      %1850 = vmatpush1.bf16.xpose.msra.mxu0 %v1830
      %1851 = vmatprep.subr.bf16.mxu0 0
      %1852 = vmatpush2.bf16.xpose.msra.mxu0 0
      %1853 = vmatprep.subr.bf16.mxu0 0
      %1854 = vmatpush2.bf16.xpose.msra.mxu0 0
      %1855 = vmatprep.subr.bf16.mxu0 0
      %1856 = vmatpush2.bf16.xpose.msra.mxu0 0
      %1857 = vmatprep.subr.bf16.mxu0 0
      %1858 = vmatpush2.bf16.xpose.msra.mxu0 0
      %1859 = vmatprep.subr.bf16.mxu0 0
      %1860 = vmatpush2.bf16.xpose.msra.mxu0 0
      %1861 = vmatprep.subr.bf16.mxu0 0
      %1862 = vmatpush2.bf16.xpose.msra.mxu0 0
      %1863 = vmatprep.subr.bf16.mxu0 0
      %1864 = vmatpush2.bf16.xpose.msra.mxu0 0
      %1865 = vmatprep.subr.bf16.mxu0 0
      %1866 = vmatpush2.bf16.xpose.msra.mxu0 0
      %1867 = vmatprep.mubr.bf16.mxu0 0
      %1868 = vmatmul.mubr.bf16.gmra.mxu0 %v1824
      %v1869 = vpop.f32.mrf.mxu0
      %v1870 = vadd.f32 %v1627, %v1869
      %v1871 = vpop.f32.mrf.mxu0
      %v1872 = vpop.f32.mrf.mxu0
      %v1873 = vadd.f32 %v1627, %v1872
      %v1874 = vpop.f32.mrf.mxu0
      %1875 = vmatprep.mubr.bf16.mxu0 0
      %1876 = vmatmul.mubr.bf16.gmra.mxu0 %v1827
      %v1877 = vpop.f32.mrf.mxu0
      %v1878 = vadd.f32 %v1627, %v1877
      %v1879 = vpop.f32.mrf.mxu0
      %v1880 = vpop.f32.mrf.mxu0
      %v1881 = vpop.f32.mrf.mxu0
      %1882 = vdwg.mxu0
      %v1883 = vsel %vm1706, %v1870, -inf
      %1884 = vmax.xlane.f32.xlu0 %v1883
      %v1885 = vpop.xlane.xlu0 %1884
      %v1886 = vsel %vm1706, %v1873, -inf
      %1887 = vmax.xlane.f32.xlu0 %v1886
      %v1888 = vpop.xlane.xlu0 %1887
      %v1889 = vsel %vm1706, %v1878, -inf
      %1890 = vmax.xlane.f32.xlu0 %v1889
      %v1891 = vpop.xlane.xlu0 %1890
      %v1892 = vsub.f32 %v1870, %v1885
      %v1893 = vsub.f32 %v1873, %v1888
      %v1894 = vsub.f32 %v1878, %v1891
      %v1895 = vmul.f32 %v1892, 1.442695
      %v1896 = vpow.pop %v1895
      %v1897 = vmul.f32 %v1893, 1.442695
      %v1898 = vpow.pop %v1897
      %v1899 = vmul.f32 %v1894, 1.442695
      %v1900 = vpow.pop %v1899
      %v1901 = vsel %vm1706, %v1896, 0.0
      %1902 = vadd.xlane.f32.xlu0 %v1901
      %v1903 = vpop.xlane.xlu0 %1902
      %v1904 = vsel %vm1706, %v1898, 0.0
      %1905 = vadd.xlane.f32.xlu0 %v1904
      %v1906 = vpop.xlane.xlu0 %1905
      %v1907 = vsel %vm1706, %v1900, 0.0
      %1908 = vadd.xlane.f32.xlu0 %v1907
      %v1909 = vpop.xlane.xlu0 %1908
      %v1910 = vrcp.pop %v1903
      %v1911 = vrcp.pop %v1906
      %v1912 = vrcp.pop %v1909
      %v1913 = vpack.c.bf16 %v1898, %v1896
      %v1914 = vpack.c.bf16 %v1900, %v1900
      %1915 = vrot.lane.b32.xlu0 %v1745, 96
      %v1916 = vpop.permute.xlu0 %1915
      %1917 = vrot.lane.b32.xlu0 %v1746, 96
      %v1918 = vpop.permute.xlu0 %1917
      %v1921 = vsel %vm1706, %v1913, 0
      %v1924 = vsel %vm1706, %v1914, 0
      %v1927 = vsel %vm1754, %v1918, 0
      %1929 = vmatprep.subr.bf16.mxu0 0
      %1930 = vmatpush1.bf16.msra.mxu0 0
      %1931 = vmatprep.subr.bf16.mxu0 0
      %1932 = vmatpush1.bf16.msra.mxu0 0
      %1933 = vmatprep.subr.bf16.mxu0 0
      %1934 = vmatpush1.bf16.msra.mxu0 0
      %1935 = vmatprep.subr.bf16.mxu0 0
      %1936 = vmatpush1.bf16.msra.mxu0 0
      %1937 = vmatprep.subr.bf16.mxu0 0
      %1938 = vmatpush1.bf16.msra.mxu0 0
      %1939 = vmatprep.subr.bf16.mxu0 0
      %1940 = vmatpush1.bf16.msra.mxu0 0
      %1941 = vmatprep.subr.bf16.mxu0 0
      %1942 = vmatpush1.bf16.msra.mxu0 %v1927
      %1943 = vmatprep.subr.bf16.mxu0 0
      %1944 = vmatpush1.bf16.msra.mxu0 %v1916
      %1945 = vmatprep.subr.bf16.mxu0 0
      %1946 = vmatpush2.bf16.msra.mxu0 0
      %1947 = vmatprep.subr.bf16.mxu0 0
      %1948 = vmatpush2.bf16.msra.mxu0 0
      %1949 = vmatprep.subr.bf16.mxu0 0
      %1950 = vmatpush2.bf16.msra.mxu0 0
      %1951 = vmatprep.subr.bf16.mxu0 0
      %1952 = vmatpush2.bf16.msra.mxu0 0
      %1953 = vmatprep.subr.bf16.mxu0 0
      %1954 = vmatpush2.bf16.msra.mxu0 0
      %1955 = vmatprep.subr.bf16.mxu0 0
      %1956 = vmatpush2.bf16.msra.mxu0 0
      %1957 = vmatprep.subr.bf16.mxu0 0
      %1958 = vmatpush2.bf16.msra.mxu0 0
      %1959 = vmatprep.subr.bf16.mxu0 0
      %1960 = vmatpush2.bf16.msra.mxu0 0
      %1961 = vmatprep.mubr.bf16.mxu0 0
      %1962 = vmatmul.mubr.bf16.gmra.mxu0 %v1921
      %v1963 = vpop.f32.mrf.mxu0
      %v1964 = vadd.f32 0.0, %v1963
      %v1965 = vpop.f32.mrf.mxu0
      %v1966 = vpop.f32.mrf.mxu0
      %v1967 = vadd.f32 0.0, %v1966
      %v1968 = vpop.f32.mrf.mxu0
      %1969 = vmatprep.mubr.bf16.mxu0 0
      %1970 = vmatmul.mubr.bf16.gmra.mxu0 %v1924
      %v1971 = vpop.f32.mrf.mxu0
      %v1972 = vadd.f32 0.0, %v1971
      %v1973 = vpop.f32.mrf.mxu0
      %v1974 = vpop.f32.mrf.mxu0
      %v1975 = vpop.f32.mrf.mxu0
      %1976 = vdwg.mxu0
      %v1977 = vmul.f32 %v1964, %v1910
      %v1978 = vmul.f32 %v1967, %v1911
      %v1979 = vmul.f32 %v1972, %v1912
      %v1980 = vpack.c.bf16 %v1978, %v1977
      %v1981 = vpack.c.bf16 %v1979, %v1979
      %v1982 = vld [vmem:[%s814 + $0x10] sm:$0xf]
      %v1983 = vld [vmem:[%s814 + $0x14] sm:$0xf]
      %v1984 = vld [vmem:[%s814 + $0x18] sm:$0xf]
      %v1985 = vld [vmem:[%s814 + $0x1c] sm:$0xf]
      %v1990 = vunpack.c.l.b16 %v1982
      %v1991 = vunpack.c.l.b16 %v1983
      %v1992 = vunpack.c.l.b16 %v1984
      %v1993 = vunpack.c.l.b16 %v1985
      %v1994 = vpack.c.b16 %v1991, %v1990
      %v1995 = vpack.c.b16 %v1993, %v1992
      %v1999 = vsel %vm1645, %v1980, 0
      %v2002 = vsel %vm1645, %v1981, 0
      %2004 = vmatprep.subr.bf16.mxu0 0
      %2005 = vmatpush1.bf16.msra.mxu0 0
      %2006 = vmatprep.subr.bf16.mxu0 0
      %2007 = vmatpush1.bf16.msra.mxu0 0
      %2008 = vmatprep.subr.bf16.mxu0 0
      %2009 = vmatpush1.bf16.msra.mxu0 0
      %2010 = vmatprep.subr.bf16.mxu0 0
      %2011 = vmatpush1.bf16.msra.mxu0 0
      %2012 = vmatprep.subr.bf16.mxu0 0
      %2013 = vmatpush1.bf16.msra.mxu0 0
      %2014 = vmatprep.subr.bf16.mxu0 0
      %2015 = vmatpush1.bf16.msra.mxu0 0
      %2016 = vmatprep.subr.bf16.mxu0 0
      %2017 = vmatpush1.bf16.msra.mxu0 %v1995
      %2018 = vmatprep.subr.bf16.mxu0 0
      %2019 = vmatpush1.bf16.msra.mxu0 %v1994
      %2020 = vmatprep.subr.bf16.mxu0 0
      %2021 = vmatpush2.bf16.msra.mxu0 0
      %2022 = vmatprep.subr.bf16.mxu0 0
      %2023 = vmatpush2.bf16.msra.mxu0 0
      %2024 = vmatprep.subr.bf16.mxu0 0
      %2025 = vmatpush2.bf16.msra.mxu0 0
      %2026 = vmatprep.subr.bf16.mxu0 0
      %2027 = vmatpush2.bf16.msra.mxu0 0
      %2028 = vmatprep.subr.bf16.mxu0 0
      %2029 = vmatpush2.bf16.msra.mxu0 0
      %2030 = vmatprep.subr.bf16.mxu0 0
      %2031 = vmatpush2.bf16.msra.mxu0 0
      %2032 = vmatprep.subr.bf16.mxu0 0
      %2033 = vmatpush2.bf16.msra.mxu0 0
      %2034 = vmatprep.subr.bf16.mxu0 0
      %2035 = vmatpush2.bf16.msra.mxu0 0
      %2036 = vmatprep.mubr.bf16.mxu0 0
      %2037 = vmatmul.mubr.bf16.gmra.mxu0 %v1999
      %v2038 = vpop.f32.mrf.mxu0
      %v2039 = vadd.f32 0.0, %v2038
      %v2040 = vpop.f32.mrf.mxu0
      %v2041 = vpop.f32.mrf.mxu0
      %v2042 = vadd.f32 0.0, %v2041
      %v2043 = vpop.f32.mrf.mxu0
      %2044 = vmatprep.mubr.bf16.mxu0 0
      %2045 = vmatmul.mubr.bf16.gmra.mxu0 %v2002
      %v2046 = vpop.f32.mrf.mxu0
      %v2047 = vadd.f32 0.0, %v2046
      %v2048 = vpop.f32.mrf.mxu0
      %v2049 = vpop.f32.mrf.mxu0
      %v2050 = vpop.f32.mrf.mxu0
      %2051 = vdwg.mxu0
      %v2056 = vunpack.c.l.b16 %v1811
      %v2057 = vunpack.c.l.b16 %v1812
      %v2058 = vunpack.c.l.b16 %v1813
      %v2059 = vunpack.c.l.b16 %v1814
      %v2060 = vpack.c.b16 %v2057, %v2056
      %v2061 = vpack.c.b16 %v2059, %v2058
      %v2065 = vsel %vm1645, %v1809, 0
      %v2068 = vsel %vm1645, %v1810, 0
      %2070 = vmatprep.subr.bf16.mxu0 0
      %2071 = vmatpush1.bf16.msra.mxu0 0
      %2072 = vmatprep.subr.bf16.mxu0 0
      %2073 = vmatpush1.bf16.msra.mxu0 0
      %2074 = vmatprep.subr.bf16.mxu0 0
      %2075 = vmatpush1.bf16.msra.mxu0 0
      %2076 = vmatprep.subr.bf16.mxu0 0
      %2077 = vmatpush1.bf16.msra.mxu0 0
      %2078 = vmatprep.subr.bf16.mxu0 0
      %2079 = vmatpush1.bf16.msra.mxu0 0
      %2080 = vmatprep.subr.bf16.mxu0 0
      %2081 = vmatpush1.bf16.msra.mxu0 0
      %2082 = vmatprep.subr.bf16.mxu0 0
      %2083 = vmatpush1.bf16.msra.mxu0 %v2061
      %2084 = vmatprep.subr.bf16.mxu0 0
      %2085 = vmatpush1.bf16.msra.mxu0 %v2060
      %2086 = vmatprep.subr.bf16.mxu0 0
      %2087 = vmatpush2.bf16.msra.mxu0 0
      %2088 = vmatprep.subr.bf16.mxu0 0
      %2089 = vmatpush2.bf16.msra.mxu0 0
      %2090 = vmatprep.subr.bf16.mxu0 0
      %2091 = vmatpush2.bf16.msra.mxu0 0
      %2092 = vmatprep.subr.bf16.mxu0 0
      %2093 = vmatpush2.bf16.msra.mxu0 0
      %2094 = vmatprep.subr.bf16.mxu0 0
      %2095 = vmatpush2.bf16.msra.mxu0 0
      %2096 = vmatprep.subr.bf16.mxu0 0
      %2097 = vmatpush2.bf16.msra.mxu0 0
      %2098 = vmatprep.subr.bf16.mxu0 0
      %2099 = vmatpush2.bf16.msra.mxu0 0
      %2100 = vmatprep.subr.bf16.mxu0 0
      %2101 = vmatpush2.bf16.msra.mxu0 0
      %2102 = vmatprep.mubr.bf16.mxu0 0
      %2103 = vmatmul.mubr.bf16.gmra.mxu0 %v2065
      %v2104 = vpop.f32.mrf.mxu0
      %v2105 = vadd.f32 %v2039, %v2104
      %v2106 = vpop.f32.mrf.mxu0
      %v2107 = vpop.f32.mrf.mxu0
      %v2108 = vadd.f32 %v2042, %v2107
      %v2109 = vpop.f32.mrf.mxu0
      %2110 = vmatprep.mubr.bf16.mxu0 0
      %2111 = vmatmul.mubr.bf16.gmra.mxu0 %v2068
      %v2112 = vpop.f32.mrf.mxu0
      %v2113 = vadd.f32 %v2047, %v2112
      %v2114 = vpop.f32.mrf.mxu0
      %v2115 = vpop.f32.mrf.mxu0
      %v2116 = vpop.f32.mrf.mxu0
      %2117 = vdwg.mxu0
      %2118 = vrot.lane.b32.xlu0 %v1635, 64
      %v2119 = vpop.permute.xlu0 %2118
      %2120 = vrot.lane.b32.xlu0 %v1636, 64
      %v2121 = vpop.permute.xlu0 %2120
      %2122 = vrot.lane.b32.xlu0 %v1643, 64
      %v2123 = vpop.permute.xlu0 %2122
      %2124 = vrot.lane.b32.xlu0 %v1644, 64
      %v2125 = vpop.permute.xlu0 %2124
      %v2127 = vsel %vm1645, %v2119, 0
      %v2130 = vsel %vm1645, %v2121, 0
      %v2133 = vsel %vm1645, %v2123, 0
      %v2136 = vsel %vm1645, %v2125, 0
      %2138 = vmatprep.subr.bf16.mxu0 0
      %2139 = vmatpush1.bf16.xpose.msra.mxu0 0
      %2140 = vmatprep.subr.bf16.mxu0 0
      %2141 = vmatpush1.bf16.xpose.msra.mxu0 0
      %2142 = vmatprep.subr.bf16.mxu0 0
      %2143 = vmatpush1.bf16.xpose.msra.mxu0 0
      %2144 = vmatprep.subr.bf16.mxu0 0
      %2145 = vmatpush1.bf16.xpose.msra.mxu0 0
      %2146 = vmatprep.subr.bf16.mxu0 0
      %2147 = vmatpush1.bf16.xpose.msra.mxu0 0
      %2148 = vmatprep.subr.bf16.mxu0 0
      %2149 = vmatpush1.bf16.xpose.msra.mxu0 0
      %2150 = vmatprep.subr.bf16.mxu0 0
      %2151 = vmatpush1.bf16.xpose.msra.mxu0 %v2136
      %2152 = vmatprep.subr.bf16.mxu0 0
      %2153 = vmatpush1.bf16.xpose.msra.mxu0 %v2133
      %2154 = vmatprep.subr.bf16.mxu0 0
      %2155 = vmatpush2.bf16.xpose.msra.mxu0 0
      %2156 = vmatprep.subr.bf16.mxu0 0
      %2157 = vmatpush2.bf16.xpose.msra.mxu0 0
      %2158 = vmatprep.subr.bf16.mxu0 0
      %2159 = vmatpush2.bf16.xpose.msra.mxu0 0
      %2160 = vmatprep.subr.bf16.mxu0 0
      %2161 = vmatpush2.bf16.xpose.msra.mxu0 0
      %2162 = vmatprep.subr.bf16.mxu0 0
      %2163 = vmatpush2.bf16.xpose.msra.mxu0 0
      %2164 = vmatprep.subr.bf16.mxu0 0
      %2165 = vmatpush2.bf16.xpose.msra.mxu0 0
      %2166 = vmatprep.subr.bf16.mxu0 0
      %2167 = vmatpush2.bf16.xpose.msra.mxu0 0
      %2168 = vmatprep.subr.bf16.mxu0 0
      %2169 = vmatpush2.bf16.xpose.msra.mxu0 0
      %2170 = vmatprep.mubr.bf16.mxu0 0
      %2171 = vmatmul.mubr.bf16.gmra.mxu0 %v2127
      %v2172 = vpop.f32.mrf.mxu0
      %v2173 = vadd.f32 %v1627, %v2172
      %v2174 = vpop.f32.mrf.mxu0
      %v2175 = vpop.f32.mrf.mxu0
      %v2176 = vadd.f32 %v1627, %v2175
      %v2177 = vpop.f32.mrf.mxu0
      %2178 = vmatprep.mubr.bf16.mxu0 0
      %2179 = vmatmul.mubr.bf16.gmra.mxu0 %v2130
      %v2180 = vpop.f32.mrf.mxu0
      %v2181 = vadd.f32 %v1627, %v2180
      %v2182 = vpop.f32.mrf.mxu0
      %v2183 = vpop.f32.mrf.mxu0
      %v2184 = vpop.f32.mrf.mxu0
      %2185 = vdwg.mxu0
      %v2186 = vsel %vm1706, %v2173, -inf
      %2187 = vmax.xlane.f32.xlu0 %v2186
      %v2188 = vpop.xlane.xlu0 %2187
      %v2189 = vsel %vm1706, %v2176, -inf
      %2190 = vmax.xlane.f32.xlu0 %v2189
      %v2191 = vpop.xlane.xlu0 %2190
      %v2192 = vsel %vm1706, %v2181, -inf
      %2193 = vmax.xlane.f32.xlu0 %v2192
      %v2194 = vpop.xlane.xlu0 %2193
      %v2195 = vsub.f32 %v2173, %v2188
      %v2196 = vsub.f32 %v2176, %v2191
      %v2197 = vsub.f32 %v2181, %v2194
      %v2198 = vmul.f32 %v2195, 1.442695
      %v2199 = vpow.pop %v2198
      %v2200 = vmul.f32 %v2196, 1.442695
      %v2201 = vpow.pop %v2200
      %v2202 = vmul.f32 %v2197, 1.442695
      %v2203 = vpow.pop %v2202
      %v2204 = vsel %vm1706, %v2199, 0.0
      %2205 = vadd.xlane.f32.xlu0 %v2204
      %v2206 = vpop.xlane.xlu0 %2205
      %v2207 = vsel %vm1706, %v2201, 0.0
      %2208 = vadd.xlane.f32.xlu0 %v2207
      %v2209 = vpop.xlane.xlu0 %2208
      %v2210 = vsel %vm1706, %v2203, 0.0
      %2211 = vadd.xlane.f32.xlu0 %v2210
      %v2212 = vpop.xlane.xlu0 %2211
      %v2213 = vrcp.pop %v2206
      %v2214 = vrcp.pop %v2209
      %v2215 = vrcp.pop %v2212
      %v2216 = vpack.c.bf16 %v2201, %v2199
      %v2217 = vpack.c.bf16 %v2203, %v2203
      %2218 = vrot.lane.b32.xlu0 %v1745, 64
      %v2219 = vpop.permute.xlu0 %2218
      %2220 = vrot.lane.b32.xlu0 %v1746, 64
      %v2221 = vpop.permute.xlu0 %2220
      %v2224 = vsel %vm1706, %v2216, 0
      %v2227 = vsel %vm1706, %v2217, 0
      %v2230 = vsel %vm1754, %v2221, 0
      %2232 = vmatprep.subr.bf16.mxu0 0
      %2233 = vmatpush1.bf16.msra.mxu0 0
      %2234 = vmatprep.subr.bf16.mxu0 0
      %2235 = vmatpush1.bf16.msra.mxu0 0
      %2236 = vmatprep.subr.bf16.mxu0 0
      %2237 = vmatpush1.bf16.msra.mxu0 0
      %2238 = vmatprep.subr.bf16.mxu0 0
      %2239 = vmatpush1.bf16.msra.mxu0 0
      %2240 = vmatprep.subr.bf16.mxu0 0
      %2241 = vmatpush1.bf16.msra.mxu0 0
      %2242 = vmatprep.subr.bf16.mxu0 0
      %2243 = vmatpush1.bf16.msra.mxu0 0
      %2244 = vmatprep.subr.bf16.mxu0 0
      %2245 = vmatpush1.bf16.msra.mxu0 %v2230
      %2246 = vmatprep.subr.bf16.mxu0 0
      %2247 = vmatpush1.bf16.msra.mxu0 %v2219
      %2248 = vmatprep.subr.bf16.mxu0 0
      %2249 = vmatpush2.bf16.msra.mxu0 0
      %2250 = vmatprep.subr.bf16.mxu0 0
      %2251 = vmatpush2.bf16.msra.mxu0 0
      %2252 = vmatprep.subr.bf16.mxu0 0
      %2253 = vmatpush2.bf16.msra.mxu0 0
      %2254 = vmatprep.subr.bf16.mxu0 0
      %2255 = vmatpush2.bf16.msra.mxu0 0
      %2256 = vmatprep.subr.bf16.mxu0 0
      %2257 = vmatpush2.bf16.msra.mxu0 0
      %2258 = vmatprep.subr.bf16.mxu0 0
      %2259 = vmatpush2.bf16.msra.mxu0 0
      %2260 = vmatprep.subr.bf16.mxu0 0
      %2261 = vmatpush2.bf16.msra.mxu0 0
      %2262 = vmatprep.subr.bf16.mxu0 0
      %2263 = vmatpush2.bf16.msra.mxu0 0
      %2264 = vmatprep.mubr.bf16.mxu0 0
      %2265 = vmatmul.mubr.bf16.gmra.mxu0 %v2224
      %v2266 = vpop.f32.mrf.mxu0
      %v2267 = vadd.f32 0.0, %v2266
      %v2268 = vpop.f32.mrf.mxu0
      %v2269 = vpop.f32.mrf.mxu0
      %v2270 = vadd.f32 0.0, %v2269
      %v2271 = vpop.f32.mrf.mxu0
      %2272 = vmatprep.mubr.bf16.mxu0 0
      %2273 = vmatmul.mubr.bf16.gmra.mxu0 %v2227
      %v2274 = vpop.f32.mrf.mxu0
      %v2275 = vadd.f32 0.0, %v2274
      %v2276 = vpop.f32.mrf.mxu0
      %v2277 = vpop.f32.mrf.mxu0
      %v2278 = vpop.f32.mrf.mxu0
      %2279 = vdwg.mxu0
      %v2280 = vmul.f32 %v2267, %v2213
      %v2281 = vmul.f32 %v2270, %v2214
      %v2282 = vmul.f32 %v2275, %v2215
      %v2283 = vpack.c.bf16 %v2281, %v2280
      %v2284 = vpack.c.bf16 %v2282, %v2282
      %v2285 = vld [vmem:[%s814 + $0x20] sm:$0xf]
      %v2286 = vld [vmem:[%s814 + $0x24] sm:$0xf]
      %v2287 = vld [vmem:[%s814 + $0x28] sm:$0xf]
      %v2288 = vld [vmem:[%s814 + $0x2c] sm:$0xf]
      %v2293 = vunpack.c.l.b16 %v2285
      %v2294 = vunpack.c.l.b16 %v2286
      %v2295 = vunpack.c.l.b16 %v2287
      %v2296 = vunpack.c.l.b16 %v2288
      %v2297 = vpack.c.b16 %v2294, %v2293
      %v2298 = vpack.c.b16 %v2296, %v2295
      %v2302 = vsel %vm1645, %v2283, 0
      %v2305 = vsel %vm1645, %v2284, 0
      %2307 = vmatprep.subr.bf16.mxu0 0
      %2308 = vmatpush1.bf16.msra.mxu0 0
      %2309 = vmatprep.subr.bf16.mxu0 0
      %2310 = vmatpush1.bf16.msra.mxu0 0
      %2311 = vmatprep.subr.bf16.mxu0 0
      %2312 = vmatpush1.bf16.msra.mxu0 0
      %2313 = vmatprep.subr.bf16.mxu0 0
      %2314 = vmatpush1.bf16.msra.mxu0 0
      %2315 = vmatprep.subr.bf16.mxu0 0
      %2316 = vmatpush1.bf16.msra.mxu0 0
      %2317 = vmatprep.subr.bf16.mxu0 0
      %2318 = vmatpush1.bf16.msra.mxu0 0
      %2319 = vmatprep.subr.bf16.mxu0 0
      %2320 = vmatpush1.bf16.msra.mxu0 %v2298
      %2321 = vmatprep.subr.bf16.mxu0 0
      %2322 = vmatpush1.bf16.msra.mxu0 %v2297
      %2323 = vmatprep.subr.bf16.mxu0 0
      %2324 = vmatpush2.bf16.msra.mxu0 0
      %2325 = vmatprep.subr.bf16.mxu0 0
      %2326 = vmatpush2.bf16.msra.mxu0 0
      %2327 = vmatprep.subr.bf16.mxu0 0
      %2328 = vmatpush2.bf16.msra.mxu0 0
      %2329 = vmatprep.subr.bf16.mxu0 0
      %2330 = vmatpush2.bf16.msra.mxu0 0
      %2331 = vmatprep.subr.bf16.mxu0 0
      %2332 = vmatpush2.bf16.msra.mxu0 0
      %2333 = vmatprep.subr.bf16.mxu0 0
      %2334 = vmatpush2.bf16.msra.mxu0 0
      %2335 = vmatprep.subr.bf16.mxu0 0
      %2336 = vmatpush2.bf16.msra.mxu0 0
      %2337 = vmatprep.subr.bf16.mxu0 0
      %2338 = vmatpush2.bf16.msra.mxu0 0
      %2339 = vmatprep.mubr.bf16.mxu0 0
      %2340 = vmatmul.mubr.bf16.gmra.mxu0 %v2302
      %v2341 = vpop.f32.mrf.mxu0
      %v2342 = vadd.f32 0.0, %v2341
      %v2343 = vpop.f32.mrf.mxu0
      %v2344 = vpop.f32.mrf.mxu0
      %v2345 = vadd.f32 0.0, %v2344
      %v2346 = vpop.f32.mrf.mxu0
      %2347 = vmatprep.mubr.bf16.mxu0 0
      %2348 = vmatmul.mubr.bf16.gmra.mxu0 %v2305
      %v2349 = vpop.f32.mrf.mxu0
      %v2350 = vadd.f32 0.0, %v2349
      %v2351 = vpop.f32.mrf.mxu0
      %v2352 = vpop.f32.mrf.mxu0
      %v2353 = vpop.f32.mrf.mxu0
      %2354 = vdwg.mxu0
      %v2355 = vadd.f32 %v2105, %v2342
      %v2356 = vadd.f32 %v2108, %v2345
      %v2357 = vadd.f32 %v2113, %v2350
      %2358 = vrot.lane.b32.xlu0 %v1635, 32
      %v2359 = vpop.permute.xlu0 %2358
      %2360 = vrot.lane.b32.xlu0 %v1636, 32
      %v2361 = vpop.permute.xlu0 %2360
      %2362 = vrot.lane.b32.xlu0 %v1643, 32
      %v2363 = vpop.permute.xlu0 %2362
      %2364 = vrot.lane.b32.xlu0 %v1644, 32
      %v2365 = vpop.permute.xlu0 %2364
      %v2367 = vsel %vm1645, %v2359, 0
      %v2370 = vsel %vm1645, %v2361, 0
      %v2373 = vsel %vm1645, %v2363, 0
      %v2376 = vsel %vm1645, %v2365, 0
      %2378 = vmatprep.subr.bf16.mxu0 0
      %2379 = vmatpush1.bf16.xpose.msra.mxu0 0
      %2380 = vmatprep.subr.bf16.mxu0 0
      %2381 = vmatpush1.bf16.xpose.msra.mxu0 0
      %2382 = vmatprep.subr.bf16.mxu0 0
      %2383 = vmatpush1.bf16.xpose.msra.mxu0 0
      %2384 = vmatprep.subr.bf16.mxu0 0
      %2385 = vmatpush1.bf16.xpose.msra.mxu0 0
      %2386 = vmatprep.subr.bf16.mxu0 0
      %2387 = vmatpush1.bf16.xpose.msra.mxu0 0
      %2388 = vmatprep.subr.bf16.mxu0 0
      %2389 = vmatpush1.bf16.xpose.msra.mxu0 0
      %2390 = vmatprep.subr.bf16.mxu0 0
      %2391 = vmatpush1.bf16.xpose.msra.mxu0 %v2376
      %2392 = vmatprep.subr.bf16.mxu0 0
      %2393 = vmatpush1.bf16.xpose.msra.mxu0 %v2373
      %2394 = vmatprep.subr.bf16.mxu0 0
      %2395 = vmatpush2.bf16.xpose.msra.mxu0 0
      %2396 = vmatprep.subr.bf16.mxu0 0
      %2397 = vmatpush2.bf16.xpose.msra.mxu0 0
      %2398 = vmatprep.subr.bf16.mxu0 0
      %2399 = vmatpush2.bf16.xpose.msra.mxu0 0
      %2400 = vmatprep.subr.bf16.mxu0 0
      %2401 = vmatpush2.bf16.xpose.msra.mxu0 0
      %2402 = vmatprep.subr.bf16.mxu0 0
      %2403 = vmatpush2.bf16.xpose.msra.mxu0 0
      %2404 = vmatprep.subr.bf16.mxu0 0
      %2405 = vmatpush2.bf16.xpose.msra.mxu0 0
      %2406 = vmatprep.subr.bf16.mxu0 0
      %2407 = vmatpush2.bf16.xpose.msra.mxu0 0
      %2408 = vmatprep.subr.bf16.mxu0 0
      %2409 = vmatpush2.bf16.xpose.msra.mxu0 0
      %2410 = vmatprep.mubr.bf16.mxu0 0
      %2411 = vmatmul.mubr.bf16.gmra.mxu0 %v2367
      %v2412 = vpop.f32.mrf.mxu0
      %v2413 = vadd.f32 %v1627, %v2412
      %v2414 = vpop.f32.mrf.mxu0
      %v2415 = vpop.f32.mrf.mxu0
      %v2416 = vadd.f32 %v1627, %v2415
      %v2417 = vpop.f32.mrf.mxu0
      %2418 = vmatprep.mubr.bf16.mxu0 0
      %2419 = vmatmul.mubr.bf16.gmra.mxu0 %v2370
      %v2420 = vpop.f32.mrf.mxu0
      %v2421 = vadd.f32 %v1627, %v2420
      %v2422 = vpop.f32.mrf.mxu0
      %v2423 = vpop.f32.mrf.mxu0
      %v2424 = vpop.f32.mrf.mxu0
      %2425 = vdwg.mxu0
      %v2426 = vsel %vm1706, %v2413, -inf
      %2427 = vmax.xlane.f32.xlu0 %v2426
      %v2428 = vpop.xlane.xlu0 %2427
      %v2429 = vsel %vm1706, %v2416, -inf
      %2430 = vmax.xlane.f32.xlu0 %v2429
      %v2431 = vpop.xlane.xlu0 %2430
      %v2432 = vsel %vm1706, %v2421, -inf
      %2433 = vmax.xlane.f32.xlu0 %v2432
      %v2434 = vpop.xlane.xlu0 %2433
      %v2435 = vsub.f32 %v2413, %v2428
      %v2436 = vsub.f32 %v2416, %v2431
      %v2437 = vsub.f32 %v2421, %v2434
      %v2438 = vmul.f32 %v2435, 1.442695
      %v2439 = vpow.pop %v2438
      %v2440 = vmul.f32 %v2436, 1.442695
      %v2441 = vpow.pop %v2440
      %v2442 = vmul.f32 %v2437, 1.442695
      %v2443 = vpow.pop %v2442
      %v2444 = vsel %vm1706, %v2439, 0.0
      %2445 = vadd.xlane.f32.xlu0 %v2444
      %v2446 = vpop.xlane.xlu0 %2445
      %v2447 = vsel %vm1706, %v2441, 0.0
      %2448 = vadd.xlane.f32.xlu0 %v2447
      %v2449 = vpop.xlane.xlu0 %2448
      %v2450 = vsel %vm1706, %v2443, 0.0
      %2451 = vadd.xlane.f32.xlu0 %v2450
      %v2452 = vpop.xlane.xlu0 %2451
      %v2453 = vrcp.pop %v2446
      %v2454 = vrcp.pop %v2449
      %v2455 = vrcp.pop %v2452
      %v2456 = vpack.c.bf16 %v2441, %v2439
      %v2457 = vpack.c.bf16 %v2443, %v2443
      %2458 = vrot.lane.b32.xlu0 %v1745, 32
      %v2459 = vpop.permute.xlu0 %2458
      %2460 = vrot.lane.b32.xlu0 %v1746, 32
      %v2461 = vpop.permute.xlu0 %2460
      %v2464 = vsel %vm1706, %v2456, 0
      %v2467 = vsel %vm1706, %v2457, 0
      %v2470 = vsel %vm1754, %v2461, 0
      %2472 = vmatprep.subr.bf16.mxu0 0
      %2473 = vmatpush1.bf16.msra.mxu0 0
      %2474 = vmatprep.subr.bf16.mxu0 0
      %2475 = vmatpush1.bf16.msra.mxu0 0
      %2476 = vmatprep.subr.bf16.mxu0 0
      %2477 = vmatpush1.bf16.msra.mxu0 0
      %2478 = vmatprep.subr.bf16.mxu0 0
      %2479 = vmatpush1.bf16.msra.mxu0 0
      %2480 = vmatprep.subr.bf16.mxu0 0
      %2481 = vmatpush1.bf16.msra.mxu0 0
      %2482 = vmatprep.subr.bf16.mxu0 0
      %2483 = vmatpush1.bf16.msra.mxu0 0
      %2484 = vmatprep.subr.bf16.mxu0 0
      %2485 = vmatpush1.bf16.msra.mxu0 %v2470
      %2486 = vmatprep.subr.bf16.mxu0 0
      %2487 = vmatpush1.bf16.msra.mxu0 %v2459
      %2488 = vmatprep.subr.bf16.mxu0 0
      %2489 = vmatpush2.bf16.msra.mxu0 0
      %2490 = vmatprep.subr.bf16.mxu0 0
      %2491 = vmatpush2.bf16.msra.mxu0 0
      %2492 = vmatprep.subr.bf16.mxu0 0
      %2493 = vmatpush2.bf16.msra.mxu0 0
      %2494 = vmatprep.subr.bf16.mxu0 0
      %2495 = vmatpush2.bf16.msra.mxu0 0
      %2496 = vmatprep.subr.bf16.mxu0 0
      %2497 = vmatpush2.bf16.msra.mxu0 0
      %2498 = vmatprep.subr.bf16.mxu0 0
      %2499 = vmatpush2.bf16.msra.mxu0 0
      %2500 = vmatprep.subr.bf16.mxu0 0
      %2501 = vmatpush2.bf16.msra.mxu0 0
      %2502 = vmatprep.subr.bf16.mxu0 0
      %2503 = vmatpush2.bf16.msra.mxu0 0
      %2504 = vmatprep.mubr.bf16.mxu0 0
      %2505 = vmatmul.mubr.bf16.gmra.mxu0 %v2464
      %v2506 = vpop.f32.mrf.mxu0
      %v2507 = vadd.f32 0.0, %v2506
      %v2508 = vpop.f32.mrf.mxu0
      %v2509 = vpop.f32.mrf.mxu0
      %v2510 = vadd.f32 0.0, %v2509
      %v2511 = vpop.f32.mrf.mxu0
      %2512 = vmatprep.mubr.bf16.mxu0 0
      %2513 = vmatmul.mubr.bf16.gmra.mxu0 %v2467
      %v2514 = vpop.f32.mrf.mxu0
      %v2515 = vadd.f32 0.0, %v2514
      %v2516 = vpop.f32.mrf.mxu0
      %v2517 = vpop.f32.mrf.mxu0
      %v2518 = vpop.f32.mrf.mxu0
      %2519 = vdwg.mxu0
      %v2520 = vmul.f32 %v2507, %v2453
      %v2521 = vmul.f32 %v2510, %v2454
      %v2522 = vmul.f32 %v2515, %v2455
      %v2523 = vpack.c.bf16 %v2521, %v2520
      %v2524 = vpack.c.bf16 %v2522, %v2522
      %v2525 = vld [vmem:[%s814 + $0x30] sm:$0xf]
      %v2526 = vld [vmem:[%s814 + $0x34] sm:$0xf]
      %v2527 = vld [vmem:[%s814 + $0x38] sm:$0xf]
      %v2528 = vld [vmem:[%s814 + $0x3c] sm:$0xf]
      %v2533 = vunpack.c.l.b16 %v2525
      %v2534 = vunpack.c.l.b16 %v2526
      %v2535 = vunpack.c.l.b16 %v2527
      %v2536 = vunpack.c.l.b16 %v2528
      %v2537 = vpack.c.b16 %v2534, %v2533
      %v2538 = vpack.c.b16 %v2536, %v2535
      %v2542 = vsel %vm1645, %v2523, 0
      %v2545 = vsel %vm1645, %v2524, 0
      %2547 = vmatprep.subr.bf16.mxu0 0
      %2548 = vmatpush1.bf16.msra.mxu0 0
      %2549 = vmatprep.subr.bf16.mxu0 0
      %2550 = vmatpush1.bf16.msra.mxu0 0
      %2551 = vmatprep.subr.bf16.mxu0 0
      %2552 = vmatpush1.bf16.msra.mxu0 0
      %2553 = vmatprep.subr.bf16.mxu0 0
      %2554 = vmatpush1.bf16.msra.mxu0 0
      %2555 = vmatprep.subr.bf16.mxu0 0
      %2556 = vmatpush1.bf16.msra.mxu0 0
      %2557 = vmatprep.subr.bf16.mxu0 0
      %2558 = vmatpush1.bf16.msra.mxu0 0
      %2559 = vmatprep.subr.bf16.mxu0 0
      %2560 = vmatpush1.bf16.msra.mxu0 %v2538
      %2561 = vmatprep.subr.bf16.mxu0 0
      %2562 = vmatpush1.bf16.msra.mxu0 %v2537
      %2563 = vmatprep.subr.bf16.mxu0 0
      %2564 = vmatpush2.bf16.msra.mxu0 0
      %2565 = vmatprep.subr.bf16.mxu0 0
      %2566 = vmatpush2.bf16.msra.mxu0 0
      %2567 = vmatprep.subr.bf16.mxu0 0
      %2568 = vmatpush2.bf16.msra.mxu0 0
      %2569 = vmatprep.subr.bf16.mxu0 0
      %2570 = vmatpush2.bf16.msra.mxu0 0
      %2571 = vmatprep.subr.bf16.mxu0 0
      %2572 = vmatpush2.bf16.msra.mxu0 0
      %2573 = vmatprep.subr.bf16.mxu0 0
      %2574 = vmatpush2.bf16.msra.mxu0 0
      %2575 = vmatprep.subr.bf16.mxu0 0
      %2576 = vmatpush2.bf16.msra.mxu0 0
      %2577 = vmatprep.subr.bf16.mxu0 0
      %2578 = vmatpush2.bf16.msra.mxu0 0
      %2579 = vmatprep.mubr.bf16.mxu0 0
      %2580 = vmatmul.mubr.bf16.gmra.mxu0 %v2542
      %v2581 = vpop.f32.mrf.mxu0
      %v2582 = vadd.f32 0.0, %v2581
      %v2583 = vpop.f32.mrf.mxu0
      %v2584 = vpop.f32.mrf.mxu0
      %v2585 = vadd.f32 0.0, %v2584
      %v2586 = vpop.f32.mrf.mxu0
      %2587 = vmatprep.mubr.bf16.mxu0 0
      %2588 = vmatmul.mubr.bf16.gmra.mxu0 %v2545
      %v2589 = vpop.f32.mrf.mxu0
      %v2590 = vadd.f32 0.0, %v2589
      %v2591 = vpop.f32.mrf.mxu0
      %v2592 = vpop.f32.mrf.mxu0
      %v2593 = vpop.f32.mrf.mxu0
      %2594 = vdwg.mxu0
      %v2595 = vadd.f32 %v2355, %v2582
      %v2596 = vadd.f32 %v2356, %v2585
      %v2597 = vadd.f32 %v2357, %v2590
      %v2598 = vld [vmem:[#allocation3 + $0x24] sm:$0xf]
      %v2599 = vld [vmem:[#allocation3 + $0x30] sm:$0xf]
      %v2600 = vld [vmem:[#allocation3 + $0x3c] sm:$0xf]
      %v2601 = vld [vmem:[#allocation3 + $0x28] sm:$0xf]
      %v2602 = vld [vmem:[#allocation3 + $0x34] sm:$0xf]
      %v2603 = vld [vmem:[#allocation3 + $0x40] sm:$0xf]
      %v2604 = vld [vmem:[#allocation3 + $0x2c] sm:$0xf]
      %v2605 = vld [vmem:[#allocation3 + $0x38] sm:$0xf]
      %v2606 = vld [vmem:[#allocation3 + $0x44] sm:$0xf]
      %v2610 = vunpack.c.l.b16 %v2598
      %v2611 = vunpack.c.l.b16 %v2599
      %v2612 = vunpack.c.l.b16 %v2600
      %v2613 = vpack.c.b16 %v2611, %v2610
      %v2614 = vpack.c.b16 %v2612, %v2612
      %v2618 = vunpack.c.l.b16 %v2601
      %v2619 = vunpack.c.l.b16 %v2602
      %v2620 = vunpack.c.l.b16 %v2603
      %v2621 = vpack.c.b16 %v2619, %v2618
      %v2622 = vpack.c.b16 %v2620, %v2620
      %v2624 = vsel %vm1645, %v2613, 0
      %v2627 = vsel %vm1645, %v2614, 0
      %v2630 = vsel %vm1645, %v2621, 0
      %v2633 = vsel %vm1645, %v2622, 0
      %2635 = vmatprep.subr.bf16.mxu0 0
      %2636 = vmatpush1.bf16.xpose.msra.mxu0 0
      %2637 = vmatprep.subr.bf16.mxu0 0
      %2638 = vmatpush1.bf16.xpose.msra.mxu0 0
      %2639 = vmatprep.subr.bf16.mxu0 0
      %2640 = vmatpush1.bf16.xpose.msra.mxu0 0
      %2641 = vmatprep.subr.bf16.mxu0 0
      %2642 = vmatpush1.bf16.xpose.msra.mxu0 0
      %2643 = vmatprep.subr.bf16.mxu0 0
      %2644 = vmatpush1.bf16.xpose.msra.mxu0 0
      %2645 = vmatprep.subr.bf16.mxu0 0
      %2646 = vmatpush1.bf16.xpose.msra.mxu0 0
      %2647 = vmatprep.subr.bf16.mxu0 0
      %2648 = vmatpush1.bf16.xpose.msra.mxu0 %v2633
      %2649 = vmatprep.subr.bf16.mxu0 0
      %2650 = vmatpush1.bf16.xpose.msra.mxu0 %v2630
      %2651 = vmatprep.subr.bf16.mxu0 0
      %2652 = vmatpush2.bf16.xpose.msra.mxu0 0
      %2653 = vmatprep.subr.bf16.mxu0 0
      %2654 = vmatpush2.bf16.xpose.msra.mxu0 0
      %2655 = vmatprep.subr.bf16.mxu0 0
      %2656 = vmatpush2.bf16.xpose.msra.mxu0 0
      %2657 = vmatprep.subr.bf16.mxu0 0
      %2658 = vmatpush2.bf16.xpose.msra.mxu0 0
      %2659 = vmatprep.subr.bf16.mxu0 0
      %2660 = vmatpush2.bf16.xpose.msra.mxu0 0
      %2661 = vmatprep.subr.bf16.mxu0 0
      %2662 = vmatpush2.bf16.xpose.msra.mxu0 0
      %2663 = vmatprep.subr.bf16.mxu0 0
      %2664 = vmatpush2.bf16.xpose.msra.mxu0 0
      %2665 = vmatprep.subr.bf16.mxu0 0
      %2666 = vmatpush2.bf16.xpose.msra.mxu0 0
      %2667 = vmatprep.mubr.bf16.mxu0 0
      %2668 = vmatmul.mubr.bf16.gmra.mxu0 %v2624
      %v2669 = vpop.f32.mrf.mxu0
      %v2670 = vadd.f32 %v1627, %v2669
      %v2671 = vpop.f32.mrf.mxu0
      %v2672 = vpop.f32.mrf.mxu0
      %v2673 = vadd.f32 %v1627, %v2672
      %v2674 = vpop.f32.mrf.mxu0
      %2675 = vmatprep.mubr.bf16.mxu0 0
      %2676 = vmatmul.mubr.bf16.gmra.mxu0 %v2627
      %v2677 = vpop.f32.mrf.mxu0
      %v2678 = vadd.f32 %v1627, %v2677
      %v2679 = vpop.f32.mrf.mxu0
      %v2680 = vpop.f32.mrf.mxu0
      %v2681 = vpop.f32.mrf.mxu0
      %2682 = vdwg.mxu0
      %v2683 = vsel %vm1706, %v2670, -inf
      %2684 = vmax.xlane.f32.xlu0 %v2683
      %v2685 = vpop.xlane.xlu0 %2684
      %v2686 = vsel %vm1706, %v2673, -inf
      %2687 = vmax.xlane.f32.xlu0 %v2686
      %v2688 = vpop.xlane.xlu0 %2687
      %v2689 = vsel %vm1706, %v2678, -inf
      %2690 = vmax.xlane.f32.xlu0 %v2689
      %v2691 = vpop.xlane.xlu0 %2690
      %v2692 = vsub.f32 %v2670, %v2685
      %v2693 = vsub.f32 %v2673, %v2688
      %v2694 = vsub.f32 %v2678, %v2691
      %v2695 = vmul.f32 %v2692, 1.442695
      %v2696 = vpow.pop %v2695
      %v2697 = vmul.f32 %v2693, 1.442695
      %v2698 = vpow.pop %v2697
      %v2699 = vmul.f32 %v2694, 1.442695
      %v2700 = vpow.pop %v2699
      %v2701 = vsel %vm1706, %v2696, 0.0
      %2702 = vadd.xlane.f32.xlu0 %v2701
      %v2703 = vpop.xlane.xlu0 %2702
      %v2704 = vsel %vm1706, %v2698, 0.0
      %2705 = vadd.xlane.f32.xlu0 %v2704
      %v2706 = vpop.xlane.xlu0 %2705
      %v2707 = vsel %vm1706, %v2700, 0.0
      %2708 = vadd.xlane.f32.xlu0 %v2707
      %v2709 = vpop.xlane.xlu0 %2708
      %v2710 = vrcp.pop %v2703
      %v2711 = vrcp.pop %v2706
      %v2712 = vrcp.pop %v2709
      %v2713 = vpack.c.bf16 %v2698, %v2696
      %v2714 = vpack.c.bf16 %v2700, %v2700
      %v2718 = vunpack.c.l.b16 %v2604
      %v2719 = vunpack.c.l.b16 %v2605
      %v2720 = vunpack.c.l.b16 %v2606
      %v2721 = vpack.c.b16 %v2719, %v2718
      %v2722 = vpack.c.b16 %v2720, %v2720
      %v2725 = vsel %vm1706, %v2713, 0
      %v2728 = vsel %vm1706, %v2714, 0
      %v2731 = vsel %vm1754, %v2722, 0
      %2733 = vmatprep.subr.bf16.mxu0 0
      %2734 = vmatpush1.bf16.msra.mxu0 0
      %2735 = vmatprep.subr.bf16.mxu0 0
      %2736 = vmatpush1.bf16.msra.mxu0 0
      %2737 = vmatprep.subr.bf16.mxu0 0
      %2738 = vmatpush1.bf16.msra.mxu0 0
      %2739 = vmatprep.subr.bf16.mxu0 0
      %2740 = vmatpush1.bf16.msra.mxu0 0
      %2741 = vmatprep.subr.bf16.mxu0 0
      %2742 = vmatpush1.bf16.msra.mxu0 0
      %2743 = vmatprep.subr.bf16.mxu0 0
      %2744 = vmatpush1.bf16.msra.mxu0 0
      %2745 = vmatprep.subr.bf16.mxu0 0
      %2746 = vmatpush1.bf16.msra.mxu0 %v2731
      %2747 = vmatprep.subr.bf16.mxu0 0
      %2748 = vmatpush1.bf16.msra.mxu0 %v2721
      %2749 = vmatprep.subr.bf16.mxu0 0
      %2750 = vmatpush2.bf16.msra.mxu0 0
      %2751 = vmatprep.subr.bf16.mxu0 0
      %2752 = vmatpush2.bf16.msra.mxu0 0
      %2753 = vmatprep.subr.bf16.mxu0 0
      %2754 = vmatpush2.bf16.msra.mxu0 0
      %2755 = vmatprep.subr.bf16.mxu0 0
      %2756 = vmatpush2.bf16.msra.mxu0 0
      %2757 = vmatprep.subr.bf16.mxu0 0
      %2758 = vmatpush2.bf16.msra.mxu0 0
      %2759 = vmatprep.subr.bf16.mxu0 0
      %2760 = vmatpush2.bf16.msra.mxu0 0
      %2761 = vmatprep.subr.bf16.mxu0 0
      %2762 = vmatpush2.bf16.msra.mxu0 0
      %2763 = vmatprep.subr.bf16.mxu0 0
      %2764 = vmatpush2.bf16.msra.mxu0 0
      %2765 = vmatprep.mubr.bf16.mxu0 0
      %2766 = vmatmul.mubr.bf16.gmra.mxu0 %v2725
      %v2767 = vpop.f32.mrf.mxu0
      %v2768 = vadd.f32 0.0, %v2767
      %v2769 = vpop.f32.mrf.mxu0
      %v2770 = vpop.f32.mrf.mxu0
      %v2771 = vadd.f32 0.0, %v2770
      %v2772 = vpop.f32.mrf.mxu0
      %2773 = vmatprep.mubr.bf16.mxu0 0
      %2774 = vmatmul.mubr.bf16.gmra.mxu0 %v2728
      %v2775 = vpop.f32.mrf.mxu0
      %v2776 = vadd.f32 0.0, %v2775
      %v2777 = vpop.f32.mrf.mxu0
      %v2778 = vpop.f32.mrf.mxu0
      %v2779 = vpop.f32.mrf.mxu0
      %2780 = vdwg.mxu0
      %v2781 = vmul.f32 %v2768, %v2710
      %v2782 = vmul.f32 %v2771, %v2711
      %v2783 = vmul.f32 %v2776, %v2712
      %v2784 = vpack.c.bf16 %v2782, %v2781
      %v2785 = vpack.c.bf16 %v2783, %v2783
      %2786 = vrot.lane.b32.xlu0 %v2613, 96
      %v2787 = vpop.permute.xlu0 %2786
      %2788 = vrot.lane.b32.xlu0 %v2614, 96
      %v2789 = vpop.permute.xlu0 %2788
      %2790 = vrot.lane.b32.xlu0 %v2621, 96
      %v2791 = vpop.permute.xlu0 %2790
      %2792 = vrot.lane.b32.xlu0 %v2622, 96
      %v2793 = vpop.permute.xlu0 %2792
      %v2795 = vsel %vm1645, %v2787, 0
      %v2798 = vsel %vm1645, %v2789, 0
      %v2801 = vsel %vm1645, %v2791, 0
      %v2804 = vsel %vm1645, %v2793, 0
      %2806 = vmatprep.subr.bf16.mxu0 0
      %2807 = vmatpush1.bf16.xpose.msra.mxu0 0
      %2808 = vmatprep.subr.bf16.mxu0 0
      %2809 = vmatpush1.bf16.xpose.msra.mxu0 0
      %2810 = vmatprep.subr.bf16.mxu0 0
      %2811 = vmatpush1.bf16.xpose.msra.mxu0 0
      %2812 = vmatprep.subr.bf16.mxu0 0
      %2813 = vmatpush1.bf16.xpose.msra.mxu0 0
      %2814 = vmatprep.subr.bf16.mxu0 0
      %2815 = vmatpush1.bf16.xpose.msra.mxu0 0
      %2816 = vmatprep.subr.bf16.mxu0 0
      %2817 = vmatpush1.bf16.xpose.msra.mxu0 0
      %2818 = vmatprep.subr.bf16.mxu0 0
      %2819 = vmatpush1.bf16.xpose.msra.mxu0 %v2804
      %2820 = vmatprep.subr.bf16.mxu0 0
      %2821 = vmatpush1.bf16.xpose.msra.mxu0 %v2801
      %2822 = vmatprep.subr.bf16.mxu0 0
      %2823 = vmatpush2.bf16.xpose.msra.mxu0 0
      %2824 = vmatprep.subr.bf16.mxu0 0
      %2825 = vmatpush2.bf16.xpose.msra.mxu0 0
      %2826 = vmatprep.subr.bf16.mxu0 0
      %2827 = vmatpush2.bf16.xpose.msra.mxu0 0
      %2828 = vmatprep.subr.bf16.mxu0 0
      %2829 = vmatpush2.bf16.xpose.msra.mxu0 0
      %2830 = vmatprep.subr.bf16.mxu0 0
      %2831 = vmatpush2.bf16.xpose.msra.mxu0 0
      %2832 = vmatprep.subr.bf16.mxu0 0
      %2833 = vmatpush2.bf16.xpose.msra.mxu0 0
      %2834 = vmatprep.subr.bf16.mxu0 0
      %2835 = vmatpush2.bf16.xpose.msra.mxu0 0
      %2836 = vmatprep.subr.bf16.mxu0 0
      %2837 = vmatpush2.bf16.xpose.msra.mxu0 0
      %2838 = vmatprep.mubr.bf16.mxu0 0
      %2839 = vmatmul.mubr.bf16.gmra.mxu0 %v2795
      %v2840 = vpop.f32.mrf.mxu0
      %v2841 = vadd.f32 %v1627, %v2840
      %v2842 = vpop.f32.mrf.mxu0
      %v2843 = vpop.f32.mrf.mxu0
      %v2844 = vadd.f32 %v1627, %v2843
      %v2845 = vpop.f32.mrf.mxu0
      %2846 = vmatprep.mubr.bf16.mxu0 0
      %2847 = vmatmul.mubr.bf16.gmra.mxu0 %v2798
      %v2848 = vpop.f32.mrf.mxu0
      %v2849 = vadd.f32 %v1627, %v2848
      %v2850 = vpop.f32.mrf.mxu0
      %v2851 = vpop.f32.mrf.mxu0
      %v2852 = vpop.f32.mrf.mxu0
      %2853 = vdwg.mxu0
      %v2854 = vsel %vm1706, %v2841, -inf
      %2855 = vmax.xlane.f32.xlu0 %v2854
      %v2856 = vpop.xlane.xlu0 %2855
      %v2857 = vsel %vm1706, %v2844, -inf
      %2858 = vmax.xlane.f32.xlu0 %v2857
      %v2859 = vpop.xlane.xlu0 %2858
      %v2860 = vsel %vm1706, %v2849, -inf
      %2861 = vmax.xlane.f32.xlu0 %v2860
      %v2862 = vpop.xlane.xlu0 %2861
      %v2863 = vsub.f32 %v2841, %v2856
      %v2864 = vsub.f32 %v2844, %v2859
      %v2865 = vsub.f32 %v2849, %v2862
      %v2866 = vmul.f32 %v2863, 1.442695
      %v2867 = vpow.pop %v2866
      %v2868 = vmul.f32 %v2864, 1.442695
      %v2869 = vpow.pop %v2868
      %v2870 = vmul.f32 %v2865, 1.442695
      %v2871 = vpow.pop %v2870
      %v2872 = vsel %vm1706, %v2867, 0.0
      %2873 = vadd.xlane.f32.xlu0 %v2872
      %v2874 = vpop.xlane.xlu0 %2873
      %v2875 = vsel %vm1706, %v2869, 0.0
      %2876 = vadd.xlane.f32.xlu0 %v2875
      %v2877 = vpop.xlane.xlu0 %2876
      %v2878 = vsel %vm1706, %v2871, 0.0
      %2879 = vadd.xlane.f32.xlu0 %v2878
      %v2880 = vpop.xlane.xlu0 %2879
      %v2881 = vrcp.pop %v2874
      %v2882 = vrcp.pop %v2877
      %v2883 = vrcp.pop %v2880
      %v2884 = vpack.c.bf16 %v2869, %v2867
      %v2885 = vpack.c.bf16 %v2871, %v2871
      %2886 = vrot.lane.b32.xlu0 %v2721, 96
      %v2887 = vpop.permute.xlu0 %2886
      %2888 = vrot.lane.b32.xlu0 %v2722, 96
      %v2889 = vpop.permute.xlu0 %2888
      %v2892 = vsel %vm1706, %v2884, 0
      %v2895 = vsel %vm1706, %v2885, 0
      %v2898 = vsel %vm1754, %v2889, 0
      %2900 = vmatprep.subr.bf16.mxu0 0
      %2901 = vmatpush1.bf16.msra.mxu0 0
      %2902 = vmatprep.subr.bf16.mxu0 0
      %2903 = vmatpush1.bf16.msra.mxu0 0
      %2904 = vmatprep.subr.bf16.mxu0 0
      %2905 = vmatpush1.bf16.msra.mxu0 0
      %2906 = vmatprep.subr.bf16.mxu0 0
      %2907 = vmatpush1.bf16.msra.mxu0 0
      %2908 = vmatprep.subr.bf16.mxu0 0
      %2909 = vmatpush1.bf16.msra.mxu0 0
      %2910 = vmatprep.subr.bf16.mxu0 0
      %2911 = vmatpush1.bf16.msra.mxu0 0
      %2912 = vmatprep.subr.bf16.mxu0 0
      %2913 = vmatpush1.bf16.msra.mxu0 %v2898
      %2914 = vmatprep.subr.bf16.mxu0 0
      %2915 = vmatpush1.bf16.msra.mxu0 %v2887
      %2916 = vmatprep.subr.bf16.mxu0 0
      %2917 = vmatpush2.bf16.msra.mxu0 0
      %2918 = vmatprep.subr.bf16.mxu0 0
      %2919 = vmatpush2.bf16.msra.mxu0 0
      %2920 = vmatprep.subr.bf16.mxu0 0
      %2921 = vmatpush2.bf16.msra.mxu0 0
      %2922 = vmatprep.subr.bf16.mxu0 0
      %2923 = vmatpush2.bf16.msra.mxu0 0
      %2924 = vmatprep.subr.bf16.mxu0 0
      %2925 = vmatpush2.bf16.msra.mxu0 0
      %2926 = vmatprep.subr.bf16.mxu0 0
      %2927 = vmatpush2.bf16.msra.mxu0 0
      %2928 = vmatprep.subr.bf16.mxu0 0
      %2929 = vmatpush2.bf16.msra.mxu0 0
      %2930 = vmatprep.subr.bf16.mxu0 0
      %2931 = vmatpush2.bf16.msra.mxu0 0
      %2932 = vmatprep.mubr.bf16.mxu0 0
      %2933 = vmatmul.mubr.bf16.gmra.mxu0 %v2892
      %v2934 = vpop.f32.mrf.mxu0
      %v2935 = vadd.f32 0.0, %v2934
      %v2936 = vpop.f32.mrf.mxu0
      %v2937 = vpop.f32.mrf.mxu0
      %v2938 = vadd.f32 0.0, %v2937
      %v2939 = vpop.f32.mrf.mxu0
      %2940 = vmatprep.mubr.bf16.mxu0 0
      %2941 = vmatmul.mubr.bf16.gmra.mxu0 %v2895
      %v2942 = vpop.f32.mrf.mxu0
      %v2943 = vadd.f32 0.0, %v2942
      %v2944 = vpop.f32.mrf.mxu0
      %v2945 = vpop.f32.mrf.mxu0
      %v2946 = vpop.f32.mrf.mxu0
      %2947 = vdwg.mxu0
      %v2948 = vmul.f32 %v2935, %v2881
      %v2949 = vmul.f32 %v2938, %v2882
      %v2950 = vmul.f32 %v2943, %v2883
      %v2951 = vpack.c.bf16 %v2949, %v2948
      %v2952 = vpack.c.bf16 %v2950, %v2950
      %v2954 = vsel %vm1645, %v2951, 0
      %v2957 = vsel %vm1645, %v2952, 0
      %2959 = vmatprep.subr.bf16.mxu0 0
      %2960 = vmatpush1.bf16.msra.mxu0 0
      %2961 = vmatprep.subr.bf16.mxu0 0
      %2962 = vmatpush1.bf16.msra.mxu0 0
      %2963 = vmatprep.subr.bf16.mxu0 0
      %2964 = vmatpush1.bf16.msra.mxu0 0
      %2965 = vmatprep.subr.bf16.mxu0 0
      %2966 = vmatpush1.bf16.msra.mxu0 0
      %2967 = vmatprep.subr.bf16.mxu0 0
      %2968 = vmatpush1.bf16.msra.mxu0 0
      %2969 = vmatprep.subr.bf16.mxu0 0
      %2970 = vmatpush1.bf16.msra.mxu0 0
      %2971 = vmatprep.subr.bf16.mxu0 0
      %2972 = vmatpush1.bf16.msra.mxu0 %v1995
      %2973 = vmatprep.subr.bf16.mxu0 0
      %2974 = vmatpush1.bf16.msra.mxu0 %v1994
      %2975 = vmatprep.subr.bf16.mxu0 0
      %2976 = vmatpush2.bf16.msra.mxu0 0
      %2977 = vmatprep.subr.bf16.mxu0 0
      %2978 = vmatpush2.bf16.msra.mxu0 0
      %2979 = vmatprep.subr.bf16.mxu0 0
      %2980 = vmatpush2.bf16.msra.mxu0 0
      %2981 = vmatprep.subr.bf16.mxu0 0
      %2982 = vmatpush2.bf16.msra.mxu0 0
      %2983 = vmatprep.subr.bf16.mxu0 0
      %2984 = vmatpush2.bf16.msra.mxu0 0
      %2985 = vmatprep.subr.bf16.mxu0 0
      %2986 = vmatpush2.bf16.msra.mxu0 0
      %2987 = vmatprep.subr.bf16.mxu0 0
      %2988 = vmatpush2.bf16.msra.mxu0 0
      %2989 = vmatprep.subr.bf16.mxu0 0
      %2990 = vmatpush2.bf16.msra.mxu0 0
      %2991 = vmatprep.mubr.bf16.mxu0 0
      %2992 = vmatmul.mubr.bf16.gmra.mxu0 %v2954
      %v2993 = vpop.f32.mrf.mxu0
      %v2994 = vadd.f32 0.0, %v2993
      %v2995 = vpop.f32.mrf.mxu0
      %v2996 = vpop.f32.mrf.mxu0
      %v2997 = vadd.f32 0.0, %v2996
      %v2998 = vpop.f32.mrf.mxu0
      %2999 = vmatprep.mubr.bf16.mxu0 0
      %3000 = vmatmul.mubr.bf16.gmra.mxu0 %v2957
      %v3001 = vpop.f32.mrf.mxu0
      %v3002 = vadd.f32 0.0, %v3001
      %v3003 = vpop.f32.mrf.mxu0
      %v3004 = vpop.f32.mrf.mxu0
      %v3005 = vpop.f32.mrf.mxu0
      %3006 = vdwg.mxu0
      %v3008 = vsel %vm1645, %v2784, 0
      %v3011 = vsel %vm1645, %v2785, 0
      %3013 = vmatprep.subr.bf16.mxu0 0
      %3014 = vmatpush1.bf16.msra.mxu0 0
      %3015 = vmatprep.subr.bf16.mxu0 0
      %3016 = vmatpush1.bf16.msra.mxu0 0
      %3017 = vmatprep.subr.bf16.mxu0 0
      %3018 = vmatpush1.bf16.msra.mxu0 0
      %3019 = vmatprep.subr.bf16.mxu0 0
      %3020 = vmatpush1.bf16.msra.mxu0 0
      %3021 = vmatprep.subr.bf16.mxu0 0
      %3022 = vmatpush1.bf16.msra.mxu0 0
      %3023 = vmatprep.subr.bf16.mxu0 0
      %3024 = vmatpush1.bf16.msra.mxu0 0
      %3025 = vmatprep.subr.bf16.mxu0 0
      %3026 = vmatpush1.bf16.msra.mxu0 %v2061
      %3027 = vmatprep.subr.bf16.mxu0 0
      %3028 = vmatpush1.bf16.msra.mxu0 %v2060
      %3029 = vmatprep.subr.bf16.mxu0 0
      %3030 = vmatpush2.bf16.msra.mxu0 0
      %3031 = vmatprep.subr.bf16.mxu0 0
      %3032 = vmatpush2.bf16.msra.mxu0 0
      %3033 = vmatprep.subr.bf16.mxu0 0
      %3034 = vmatpush2.bf16.msra.mxu0 0
      %3035 = vmatprep.subr.bf16.mxu0 0
      %3036 = vmatpush2.bf16.msra.mxu0 0
      %3037 = vmatprep.subr.bf16.mxu0 0
      %3038 = vmatpush2.bf16.msra.mxu0 0
      %3039 = vmatprep.subr.bf16.mxu0 0
      %3040 = vmatpush2.bf16.msra.mxu0 0
      %3041 = vmatprep.subr.bf16.mxu0 0
      %3042 = vmatpush2.bf16.msra.mxu0 0
      %3043 = vmatprep.subr.bf16.mxu0 0
      %3044 = vmatpush2.bf16.msra.mxu0 0
      %3045 = vmatprep.mubr.bf16.mxu0 0
      %3046 = vmatmul.mubr.bf16.gmra.mxu0 %v3008
      %v3047 = vpop.f32.mrf.mxu0
      %v3048 = vadd.f32 %v2994, %v3047
      %v3049 = vpop.f32.mrf.mxu0
      %v3050 = vpop.f32.mrf.mxu0
      %v3051 = vadd.f32 %v2997, %v3050
      %v3052 = vpop.f32.mrf.mxu0
      %3053 = vmatprep.mubr.bf16.mxu0 0
      %3054 = vmatmul.mubr.bf16.gmra.mxu0 %v3011
      %v3055 = vpop.f32.mrf.mxu0
      %v3056 = vadd.f32 %v3002, %v3055
      %v3057 = vpop.f32.mrf.mxu0
      %v3058 = vpop.f32.mrf.mxu0
      %v3059 = vpop.f32.mrf.mxu0
      %3060 = vdwg.mxu0
      %3061 = vrot.lane.b32.xlu0 %v2613, 64
      %v3062 = vpop.permute.xlu0 %3061
      %3063 = vrot.lane.b32.xlu0 %v2614, 64
      %v3064 = vpop.permute.xlu0 %3063
      %3065 = vrot.lane.b32.xlu0 %v2621, 64
      %v3066 = vpop.permute.xlu0 %3065
      %3067 = vrot.lane.b32.xlu0 %v2622, 64
      %v3068 = vpop.permute.xlu0 %3067
      %v3070 = vsel %vm1645, %v3062, 0
      %v3073 = vsel %vm1645, %v3064, 0
      %v3076 = vsel %vm1645, %v3066, 0
      %v3079 = vsel %vm1645, %v3068, 0
      %3081 = vmatprep.subr.bf16.mxu0 0
      %3082 = vmatpush1.bf16.xpose.msra.mxu0 0
      %3083 = vmatprep.subr.bf16.mxu0 0
      %3084 = vmatpush1.bf16.xpose.msra.mxu0 0
      %3085 = vmatprep.subr.bf16.mxu0 0
      %3086 = vmatpush1.bf16.xpose.msra.mxu0 0
      %3087 = vmatprep.subr.bf16.mxu0 0
      %3088 = vmatpush1.bf16.xpose.msra.mxu0 0
      %3089 = vmatprep.subr.bf16.mxu0 0
      %3090 = vmatpush1.bf16.xpose.msra.mxu0 0
      %3091 = vmatprep.subr.bf16.mxu0 0
      %3092 = vmatpush1.bf16.xpose.msra.mxu0 0
      %3093 = vmatprep.subr.bf16.mxu0 0
      %3094 = vmatpush1.bf16.xpose.msra.mxu0 %v3079
      %3095 = vmatprep.subr.bf16.mxu0 0
      %3096 = vmatpush1.bf16.xpose.msra.mxu0 %v3076
      %3097 = vmatprep.subr.bf16.mxu0 0
      %3098 = vmatpush2.bf16.xpose.msra.mxu0 0
      %3099 = vmatprep.subr.bf16.mxu0 0
      %3100 = vmatpush2.bf16.xpose.msra.mxu0 0
      %3101 = vmatprep.subr.bf16.mxu0 0
      %3102 = vmatpush2.bf16.xpose.msra.mxu0 0
      %3103 = vmatprep.subr.bf16.mxu0 0
      %3104 = vmatpush2.bf16.xpose.msra.mxu0 0
      %3105 = vmatprep.subr.bf16.mxu0 0
      %3106 = vmatpush2.bf16.xpose.msra.mxu0 0
      %3107 = vmatprep.subr.bf16.mxu0 0
      %3108 = vmatpush2.bf16.xpose.msra.mxu0 0
      %3109 = vmatprep.subr.bf16.mxu0 0
      %3110 = vmatpush2.bf16.xpose.msra.mxu0 0
      %3111 = vmatprep.subr.bf16.mxu0 0
      %3112 = vmatpush2.bf16.xpose.msra.mxu0 0
      %3113 = vmatprep.mubr.bf16.mxu0 0
      %3114 = vmatmul.mubr.bf16.gmra.mxu0 %v3070
      %v3115 = vpop.f32.mrf.mxu0
      %v3116 = vadd.f32 %v1627, %v3115
      %v3117 = vpop.f32.mrf.mxu0
      %v3118 = vpop.f32.mrf.mxu0
      %v3119 = vadd.f32 %v1627, %v3118
      %v3120 = vpop.f32.mrf.mxu0
      %3121 = vmatprep.mubr.bf16.mxu0 0
      %3122 = vmatmul.mubr.bf16.gmra.mxu0 %v3073
      %v3123 = vpop.f32.mrf.mxu0
      %v3124 = vadd.f32 %v1627, %v3123
      %v3125 = vpop.f32.mrf.mxu0
      %v3126 = vpop.f32.mrf.mxu0
      %v3127 = vpop.f32.mrf.mxu0
      %3128 = vdwg.mxu0
      %v3129 = vsel %vm1706, %v3116, -inf
      %3130 = vmax.xlane.f32.xlu0 %v3129
      %v3131 = vpop.xlane.xlu0 %3130
      %v3132 = vsel %vm1706, %v3119, -inf
      %3133 = vmax.xlane.f32.xlu0 %v3132
      %v3134 = vpop.xlane.xlu0 %3133
      %v3135 = vsel %vm1706, %v3124, -inf
      %3136 = vmax.xlane.f32.xlu0 %v3135
      %v3137 = vpop.xlane.xlu0 %3136
      %v3138 = vsub.f32 %v3116, %v3131
      %v3139 = vsub.f32 %v3119, %v3134
      %v3140 = vsub.f32 %v3124, %v3137
      %v3141 = vmul.f32 %v3138, 1.442695
      %v3142 = vpow.pop %v3141
      %v3143 = vmul.f32 %v3139, 1.442695
      %v3144 = vpow.pop %v3143
      %v3145 = vmul.f32 %v3140, 1.442695
      %v3146 = vpow.pop %v3145
      %v3147 = vsel %vm1706, %v3142, 0.0
      %3148 = vadd.xlane.f32.xlu0 %v3147
      %v3149 = vpop.xlane.xlu0 %3148
      %v3150 = vsel %vm1706, %v3144, 0.0
      %3151 = vadd.xlane.f32.xlu0 %v3150
      %v3152 = vpop.xlane.xlu0 %3151
      %v3153 = vsel %vm1706, %v3146, 0.0
      %3154 = vadd.xlane.f32.xlu0 %v3153
      %v3155 = vpop.xlane.xlu0 %3154
      %v3156 = vrcp.pop %v3149
      %v3157 = vrcp.pop %v3152
      %v3158 = vrcp.pop %v3155
      %v3159 = vpack.c.bf16 %v3144, %v3142
      %v3160 = vpack.c.bf16 %v3146, %v3146
      %3161 = vrot.lane.b32.xlu0 %v2721, 64
      %v3162 = vpop.permute.xlu0 %3161
      %3163 = vrot.lane.b32.xlu0 %v2722, 64
      %v3164 = vpop.permute.xlu0 %3163
      %v3167 = vsel %vm1706, %v3159, 0
      %v3170 = vsel %vm1706, %v3160, 0
      %v3173 = vsel %vm1754, %v3164, 0
      %3175 = vmatprep.subr.bf16.mxu0 0
      %3176 = vmatpush1.bf16.msra.mxu0 0
      %3177 = vmatprep.subr.bf16.mxu0 0
      %3178 = vmatpush1.bf16.msra.mxu0 0
      %3179 = vmatprep.subr.bf16.mxu0 0
      %3180 = vmatpush1.bf16.msra.mxu0 0
      %3181 = vmatprep.subr.bf16.mxu0 0
      %3182 = vmatpush1.bf16.msra.mxu0 0
      %3183 = vmatprep.subr.bf16.mxu0 0
      %3184 = vmatpush1.bf16.msra.mxu0 0
      %3185 = vmatprep.subr.bf16.mxu0 0
      %3186 = vmatpush1.bf16.msra.mxu0 0
      %3187 = vmatprep.subr.bf16.mxu0 0
      %3188 = vmatpush1.bf16.msra.mxu0 %v3173
      %3189 = vmatprep.subr.bf16.mxu0 0
      %3190 = vmatpush1.bf16.msra.mxu0 %v3162
      %3191 = vmatprep.subr.bf16.mxu0 0
      %3192 = vmatpush2.bf16.msra.mxu0 0
      %3193 = vmatprep.subr.bf16.mxu0 0
      %3194 = vmatpush2.bf16.msra.mxu0 0
      %3195 = vmatprep.subr.bf16.mxu0 0
      %3196 = vmatpush2.bf16.msra.mxu0 0
      %3197 = vmatprep.subr.bf16.mxu0 0
      %3198 = vmatpush2.bf16.msra.mxu0 0
      %3199 = vmatprep.subr.bf16.mxu0 0
      %3200 = vmatpush2.bf16.msra.mxu0 0
      %3201 = vmatprep.subr.bf16.mxu0 0
      %3202 = vmatpush2.bf16.msra.mxu0 0
      %3203 = vmatprep.subr.bf16.mxu0 0
      %3204 = vmatpush2.bf16.msra.mxu0 0
      %3205 = vmatprep.subr.bf16.mxu0 0
      %3206 = vmatpush2.bf16.msra.mxu0 0
      %3207 = vmatprep.mubr.bf16.mxu0 0
      %3208 = vmatmul.mubr.bf16.gmra.mxu0 %v3167
      %v3209 = vpop.f32.mrf.mxu0
      %v3210 = vadd.f32 0.0, %v3209
      %v3211 = vpop.f32.mrf.mxu0
      %v3212 = vpop.f32.mrf.mxu0
      %v3213 = vadd.f32 0.0, %v3212
      %v3214 = vpop.f32.mrf.mxu0
      %3215 = vmatprep.mubr.bf16.mxu0 0
      %3216 = vmatmul.mubr.bf16.gmra.mxu0 %v3170
      %v3217 = vpop.f32.mrf.mxu0
      %v3218 = vadd.f32 0.0, %v3217
      %v3219 = vpop.f32.mrf.mxu0
      %v3220 = vpop.f32.mrf.mxu0
      %v3221 = vpop.f32.mrf.mxu0
      %3222 = vdwg.mxu0
      %v3223 = vmul.f32 %v3210, %v3156
      %v3224 = vmul.f32 %v3213, %v3157
      %v3225 = vmul.f32 %v3218, %v3158
      %v3226 = vpack.c.bf16 %v3224, %v3223
      %v3227 = vpack.c.bf16 %v3225, %v3225
      %v3229 = vsel %vm1645, %v3226, 0
      %v3232 = vsel %vm1645, %v3227, 0
      %3234 = vmatprep.subr.bf16.mxu0 0
      %3235 = vmatpush1.bf16.msra.mxu0 0
      %3236 = vmatprep.subr.bf16.mxu0 0
      %3237 = vmatpush1.bf16.msra.mxu0 0
      %3238 = vmatprep.subr.bf16.mxu0 0
      %3239 = vmatpush1.bf16.msra.mxu0 0
      %3240 = vmatprep.subr.bf16.mxu0 0
      %3241 = vmatpush1.bf16.msra.mxu0 0
      %3242 = vmatprep.subr.bf16.mxu0 0
      %3243 = vmatpush1.bf16.msra.mxu0 0
      %3244 = vmatprep.subr.bf16.mxu0 0
      %3245 = vmatpush1.bf16.msra.mxu0 0
      %3246 = vmatprep.subr.bf16.mxu0 0
      %3247 = vmatpush1.bf16.msra.mxu0 %v2298
      %3248 = vmatprep.subr.bf16.mxu0 0
      %3249 = vmatpush1.bf16.msra.mxu0 %v2297
      %3250 = vmatprep.subr.bf16.mxu0 0
      %3251 = vmatpush2.bf16.msra.mxu0 0
      %3252 = vmatprep.subr.bf16.mxu0 0
      %3253 = vmatpush2.bf16.msra.mxu0 0
      %3254 = vmatprep.subr.bf16.mxu0 0
      %3255 = vmatpush2.bf16.msra.mxu0 0
      %3256 = vmatprep.subr.bf16.mxu0 0
      %3257 = vmatpush2.bf16.msra.mxu0 0
      %3258 = vmatprep.subr.bf16.mxu0 0
      %3259 = vmatpush2.bf16.msra.mxu0 0
      %3260 = vmatprep.subr.bf16.mxu0 0
      %3261 = vmatpush2.bf16.msra.mxu0 0
      %3262 = vmatprep.subr.bf16.mxu0 0
      %3263 = vmatpush2.bf16.msra.mxu0 0
      %3264 = vmatprep.subr.bf16.mxu0 0
      %3265 = vmatpush2.bf16.msra.mxu0 0
      %3266 = vmatprep.mubr.bf16.mxu0 0
      %3267 = vmatmul.mubr.bf16.gmra.mxu0 %v3229
      %v3268 = vpop.f32.mrf.mxu0
      %v3269 = vadd.f32 0.0, %v3268
      %v3270 = vpop.f32.mrf.mxu0
      %v3271 = vpop.f32.mrf.mxu0
      %v3272 = vadd.f32 0.0, %v3271
      %v3273 = vpop.f32.mrf.mxu0
      %3274 = vmatprep.mubr.bf16.mxu0 0
      %3275 = vmatmul.mubr.bf16.gmra.mxu0 %v3232
      %v3276 = vpop.f32.mrf.mxu0
      %v3277 = vadd.f32 0.0, %v3276
      %v3278 = vpop.f32.mrf.mxu0
      %v3279 = vpop.f32.mrf.mxu0
      %v3280 = vpop.f32.mrf.mxu0
      %3281 = vdwg.mxu0
      %v3282 = vadd.f32 %v3048, %v3269
      %v3283 = vadd.f32 %v3051, %v3272
      %v3284 = vadd.f32 %v3056, %v3277
      %3285 = vrot.lane.b32.xlu0 %v2613, 32
      %v3286 = vpop.permute.xlu0 %3285
      %3287 = vrot.lane.b32.xlu0 %v2614, 32
      %v3288 = vpop.permute.xlu0 %3287
      %3289 = vrot.lane.b32.xlu0 %v2621, 32
      %v3290 = vpop.permute.xlu0 %3289
      %3291 = vrot.lane.b32.xlu0 %v2622, 32
      %v3292 = vpop.permute.xlu0 %3291
      %v3294 = vsel %vm1645, %v3286, 0
      %v3297 = vsel %vm1645, %v3288, 0
      %v3300 = vsel %vm1645, %v3290, 0
      %v3303 = vsel %vm1645, %v3292, 0
      %3305 = vmatprep.subr.bf16.mxu0 0
      %3306 = vmatpush1.bf16.xpose.msra.mxu0 0
      %3307 = vmatprep.subr.bf16.mxu0 0
      %3308 = vmatpush1.bf16.xpose.msra.mxu0 0
      %3309 = vmatprep.subr.bf16.mxu0 0
      %3310 = vmatpush1.bf16.xpose.msra.mxu0 0
      %3311 = vmatprep.subr.bf16.mxu0 0
      %3312 = vmatpush1.bf16.xpose.msra.mxu0 0
      %3313 = vmatprep.subr.bf16.mxu0 0
      %3314 = vmatpush1.bf16.xpose.msra.mxu0 0
      %3315 = vmatprep.subr.bf16.mxu0 0
      %3316 = vmatpush1.bf16.xpose.msra.mxu0 0
      %3317 = vmatprep.subr.bf16.mxu0 0
      %3318 = vmatpush1.bf16.xpose.msra.mxu0 %v3303
      %3319 = vmatprep.subr.bf16.mxu0 0
      %3320 = vmatpush1.bf16.xpose.msra.mxu0 %v3300
      %3321 = vmatprep.subr.bf16.mxu0 0
      %3322 = vmatpush2.bf16.xpose.msra.mxu0 0
      %3323 = vmatprep.subr.bf16.mxu0 0
      %3324 = vmatpush2.bf16.xpose.msra.mxu0 0
      %3325 = vmatprep.subr.bf16.mxu0 0
      %3326 = vmatpush2.bf16.xpose.msra.mxu0 0
      %3327 = vmatprep.subr.bf16.mxu0 0
      %3328 = vmatpush2.bf16.xpose.msra.mxu0 0
      %3329 = vmatprep.subr.bf16.mxu0 0
      %3330 = vmatpush2.bf16.xpose.msra.mxu0 0
      %3331 = vmatprep.subr.bf16.mxu0 0
      %3332 = vmatpush2.bf16.xpose.msra.mxu0 0
      %3333 = vmatprep.subr.bf16.mxu0 0
      %3334 = vmatpush2.bf16.xpose.msra.mxu0 0
      %3335 = vmatprep.subr.bf16.mxu0 0
      %3336 = vmatpush2.bf16.xpose.msra.mxu0 0
      %3337 = vmatprep.mubr.bf16.mxu0 0
      %3338 = vmatmul.mubr.bf16.gmra.mxu0 %v3294
      %v3339 = vpop.f32.mrf.mxu0
      %v3340 = vadd.f32 %v1627, %v3339
      %v3341 = vpop.f32.mrf.mxu0
      %v3342 = vpop.f32.mrf.mxu0
      %v3343 = vadd.f32 %v1627, %v3342
      %v3344 = vpop.f32.mrf.mxu0
      %3345 = vmatprep.mubr.bf16.mxu0 0
      %3346 = vmatmul.mubr.bf16.gmra.mxu0 %v3297
      %v3347 = vpop.f32.mrf.mxu0
      %v3348 = vadd.f32 %v1627, %v3347
      %v3349 = vpop.f32.mrf.mxu0
      %v3350 = vpop.f32.mrf.mxu0
      %v3351 = vpop.f32.mrf.mxu0
      %3352 = vdwg.mxu0
      %v3353 = vsel %vm1706, %v3340, -inf
      %3354 = vmax.xlane.f32.xlu0 %v3353
      %v3355 = vpop.xlane.xlu0 %3354
      %v3356 = vsel %vm1706, %v3343, -inf
      %3357 = vmax.xlane.f32.xlu0 %v3356
      %v3358 = vpop.xlane.xlu0 %3357
      %v3359 = vsel %vm1706, %v3348, -inf
      %3360 = vmax.xlane.f32.xlu0 %v3359
      %v3361 = vpop.xlane.xlu0 %3360
      %v3362 = vsub.f32 %v3340, %v3355
      %v3363 = vsub.f32 %v3343, %v3358
      %v3364 = vsub.f32 %v3348, %v3361
      %v3365 = vmul.f32 %v3362, 1.442695
      %v3366 = vpow.pop %v3365
      %v3367 = vmul.f32 %v3363, 1.442695
      %v3368 = vpow.pop %v3367
      %v3369 = vmul.f32 %v3364, 1.442695
      %v3370 = vpow.pop %v3369
      %v3371 = vsel %vm1706, %v3366, 0.0
      %3372 = vadd.xlane.f32.xlu0 %v3371
      %v3373 = vpop.xlane.xlu0 %3372
      %v3374 = vsel %vm1706, %v3368, 0.0
      %3375 = vadd.xlane.f32.xlu0 %v3374
      %v3376 = vpop.xlane.xlu0 %3375
      %v3377 = vsel %vm1706, %v3370, 0.0
      %3378 = vadd.xlane.f32.xlu0 %v3377
      %v3379 = vpop.xlane.xlu0 %3378
      %v3380 = vrcp.pop %v3373
      %v3381 = vrcp.pop %v3376
      %v3382 = vrcp.pop %v3379
      %v3383 = vpack.c.bf16 %v3368, %v3366
      %v3384 = vpack.c.bf16 %v3370, %v3370
      %3385 = vrot.lane.b32.xlu0 %v2721, 32
      %v3386 = vpop.permute.xlu0 %3385
      %3387 = vrot.lane.b32.xlu0 %v2722, 32
      %v3388 = vpop.permute.xlu0 %3387
      %v3391 = vsel %vm1706, %v3383, 0
      %v3394 = vsel %vm1706, %v3384, 0
      %v3397 = vsel %vm1754, %v3388, 0
      %3399 = vmatprep.subr.bf16.mxu0 0
      %3400 = vmatpush1.bf16.msra.mxu0 0
      %3401 = vmatprep.subr.bf16.mxu0 0
      %3402 = vmatpush1.bf16.msra.mxu0 0
      %3403 = vmatprep.subr.bf16.mxu0 0
      %3404 = vmatpush1.bf16.msra.mxu0 0
      %3405 = vmatprep.subr.bf16.mxu0 0
      %3406 = vmatpush1.bf16.msra.mxu0 0
      %3407 = vmatprep.subr.bf16.mxu0 0
      %3408 = vmatpush1.bf16.msra.mxu0 0
      %3409 = vmatprep.subr.bf16.mxu0 0
      %3410 = vmatpush1.bf16.msra.mxu0 0
      %3411 = vmatprep.subr.bf16.mxu0 0
      %3412 = vmatpush1.bf16.msra.mxu0 %v3397
      %3413 = vmatprep.subr.bf16.mxu0 0
      %3414 = vmatpush1.bf16.msra.mxu0 %v3386
      %3415 = vmatprep.subr.bf16.mxu0 0
      %3416 = vmatpush2.bf16.msra.mxu0 0
      %3417 = vmatprep.subr.bf16.mxu0 0
      %3418 = vmatpush2.bf16.msra.mxu0 0
      %3419 = vmatprep.subr.bf16.mxu0 0
      %3420 = vmatpush2.bf16.msra.mxu0 0
      %3421 = vmatprep.subr.bf16.mxu0 0
      %3422 = vmatpush2.bf16.msra.mxu0 0
      %3423 = vmatprep.subr.bf16.mxu0 0
      %3424 = vmatpush2.bf16.msra.mxu0 0
      %3425 = vmatprep.subr.bf16.mxu0 0
      %3426 = vmatpush2.bf16.msra.mxu0 0
      %3427 = vmatprep.subr.bf16.mxu0 0
      %3428 = vmatpush2.bf16.msra.mxu0 0
      %3429 = vmatprep.subr.bf16.mxu0 0
      %3430 = vmatpush2.bf16.msra.mxu0 0
      %3431 = vmatprep.mubr.bf16.mxu0 0
      %3432 = vmatmul.mubr.bf16.gmra.mxu0 %v3391
      %v3433 = vpop.f32.mrf.mxu0
      %v3434 = vadd.f32 0.0, %v3433
      %v3435 = vpop.f32.mrf.mxu0
      %v3436 = vpop.f32.mrf.mxu0
      %v3437 = vadd.f32 0.0, %v3436
      %v3438 = vpop.f32.mrf.mxu0
      %3439 = vmatprep.mubr.bf16.mxu0 0
      %3440 = vmatmul.mubr.bf16.gmra.mxu0 %v3394
      %v3441 = vpop.f32.mrf.mxu0
      %v3442 = vadd.f32 0.0, %v3441
      %v3443 = vpop.f32.mrf.mxu0
      %v3444 = vpop.f32.mrf.mxu0
      %v3445 = vpop.f32.mrf.mxu0
      %3446 = vdwg.mxu0
      %v3447 = vmul.f32 %v3434, %v3380
      %v3448 = vmul.f32 %v3437, %v3381
      %v3449 = vmul.f32 %v3442, %v3382
      %v3450 = vpack.c.bf16 %v3448, %v3447
      %v3451 = vpack.c.bf16 %v3449, %v3449
      %v3453 = vsel %vm1645, %v3450, 0
      %v3456 = vsel %vm1645, %v3451, 0
      %3458 = vmatprep.subr.bf16.mxu0 0
      %3459 = vmatpush1.bf16.msra.mxu0 0
      %3460 = vmatprep.subr.bf16.mxu0 0
      %3461 = vmatpush1.bf16.msra.mxu0 0
      %3462 = vmatprep.subr.bf16.mxu0 0
      %3463 = vmatpush1.bf16.msra.mxu0 0
      %3464 = vmatprep.subr.bf16.mxu0 0
      %3465 = vmatpush1.bf16.msra.mxu0 0
      %3466 = vmatprep.subr.bf16.mxu0 0
      %3467 = vmatpush1.bf16.msra.mxu0 0
      %3468 = vmatprep.subr.bf16.mxu0 0
      %3469 = vmatpush1.bf16.msra.mxu0 0
      %3470 = vmatprep.subr.bf16.mxu0 0
      %3471 = vmatpush1.bf16.msra.mxu0 %v2538
      %3472 = vmatprep.subr.bf16.mxu0 0
      %3473 = vmatpush1.bf16.msra.mxu0 %v2537
      %3474 = vmatprep.subr.bf16.mxu0 0
      %3475 = vmatpush2.bf16.msra.mxu0 0
      %3476 = vmatprep.subr.bf16.mxu0 0
      %3477 = vmatpush2.bf16.msra.mxu0 0
      %3478 = vmatprep.subr.bf16.mxu0 0
      %3479 = vmatpush2.bf16.msra.mxu0 0
      %3480 = vmatprep.subr.bf16.mxu0 0
      %3481 = vmatpush2.bf16.msra.mxu0 0
      %3482 = vmatprep.subr.bf16.mxu0 0
      %3483 = vmatpush2.bf16.msra.mxu0 0
      %3484 = vmatprep.subr.bf16.mxu0 0
      %3485 = vmatpush2.bf16.msra.mxu0 0
      %3486 = vmatprep.subr.bf16.mxu0 0
      %3487 = vmatpush2.bf16.msra.mxu0 0
      %3488 = vmatprep.subr.bf16.mxu0 0
      %3489 = vmatpush2.bf16.msra.mxu0 0
      %3490 = vmatprep.mubr.bf16.mxu0 0
      %3491 = vmatmul.mubr.bf16.gmra.mxu0 %v3453
      %v3492 = vpop.f32.mrf.mxu0
      %v3493 = vadd.f32 0.0, %v3492
      %v3494 = vpop.f32.mrf.mxu0
      %v3495 = vpop.f32.mrf.mxu0
      %v3496 = vadd.f32 0.0, %v3495
      %v3497 = vpop.f32.mrf.mxu0
      %3498 = vmatprep.mubr.bf16.mxu0 0
      %3499 = vmatmul.mubr.bf16.gmra.mxu0 %v3456
      %v3500 = vpop.f32.mrf.mxu0
      %v3501 = vadd.f32 0.0, %v3500
      %v3502 = vpop.f32.mrf.mxu0
      %v3503 = vpop.f32.mrf.mxu0
      %v3504 = vpop.f32.mrf.mxu0
      %3505 = vdwg.mxu0
      %v3506 = vadd.f32 %v3282, %v3493
      %v3507 = vadd.f32 %v3283, %v3496
      %v3508 = vadd.f32 %v3284, %v3501
      %v3509 = vadd.f32 %v1142, %v2595
      %v3510 = vadd.f32 %v1143, %v2596
      %v3511 = vadd.f32 %v1144, %v2597
      %v3512 = vadd.f32 %v1145, %v3506
      %v3513 = vadd.f32 %v1146, %v3507
      %v3514 = vadd.f32 %v1147, %v3508
      %v3515 = vld [vmem:[%s817] sm:$0x1]
      %v3517 = vlaneseq
      %v3518 = vshrl.u32 %v3517, 7
      %v3519 = vsub.s32 0, %v3518
      %v3520 = vrot.slane %v3515, %v3519
      %v3522 = vadd.f32 %v3509, %v3520
      %v3523 = vadd.f32 %v3510, %v3520
      %v3524 = vadd.f32 %v3511, %v3520
      %v3525 = vadd.f32 %v3512, %v3520
      %v3526 = vadd.f32 %v3513, %v3520
      %v3527 = vadd.f32 %v3514, %v3520
      %v3528 = vld [vmem:[%s820] sm:$0x1]
      %v3529 = vld [vmem:[%s823] sm:$0x1]
      %3530 = vadd.xlane.f32.xlu0 %v3522
      %v3531 = vpop.xlane.xlu0 %3530
      %3532 = vadd.xlane.f32.xlu0 %v3523
      %v3533 = vpop.xlane.xlu0 %3532
      %3534 = vadd.xlane.f32.xlu0 %v3524
      %v3535 = vpop.xlane.xlu0 %3534
      %3536 = vadd.xlane.f32.xlu0 %v3525
      %v3537 = vpop.xlane.xlu0 %3536
      %3538 = vadd.xlane.f32.xlu0 %v3526
      %v3539 = vpop.xlane.xlu0 %3538
      %3540 = vadd.xlane.f32.xlu0 %v3527
      %v3541 = vpop.xlane.xlu0 %3540
      %v3542 = vmul.f32 %v3531, %v1162
      %v3543 = vmul.f32 %v3533, %v1162
      %v3544 = vmul.f32 %v3535, %v1162
      %v3545 = vmul.f32 %v3537, %v1162
      %v3546 = vmul.f32 %v3539, %v1162
      %v3547 = vmul.f32 %v3541, %v1162
      %v3548 = vsub.f32 %v3522, %v3542
      %v3549 = vsub.f32 %v3523, %v3543
      %v3550 = vsub.f32 %v3524, %v3544
      %v3551 = vsub.f32 %v3525, %v3545
      %v3552 = vsub.f32 %v3526, %v3546
      %v3553 = vsub.f32 %v3527, %v3547
      %v3554 = vmul.f32 %v3548, %v3548
      %v3555 = vmul.f32 %v3549, %v3549
      %v3556 = vmul.f32 %v3550, %v3550
      %v3557 = vmul.f32 %v3551, %v3551
      %v3558 = vmul.f32 %v3552, %v3552
      %v3559 = vmul.f32 %v3553, %v3553
      %3560 = vadd.xlane.f32.xlu0 %v3554
      %v3561 = vpop.xlane.xlu0 %3560
      %3562 = vadd.xlane.f32.xlu0 %v3555
      %v3563 = vpop.xlane.xlu0 %3562
      %3564 = vadd.xlane.f32.xlu0 %v3556
      %v3565 = vpop.xlane.xlu0 %3564
      %3566 = vadd.xlane.f32.xlu0 %v3557
      %v3567 = vpop.xlane.xlu0 %3566
      %3568 = vadd.xlane.f32.xlu0 %v3558
      %v3569 = vpop.xlane.xlu0 %3568
      %3570 = vadd.xlane.f32.xlu0 %v3559
      %v3571 = vpop.xlane.xlu0 %3570
      %v3572 = vmul.f32 %v3561, %v1162
      %v3573 = vmul.f32 %v3563, %v1162
      %v3574 = vmul.f32 %v3565, %v1162
      %v3575 = vmul.f32 %v3567, %v1162
      %v3576 = vmul.f32 %v3569, %v1162
      %v3577 = vmul.f32 %v3571, %v1162
      %v3578 = vadd.f32 %v3572, 1e-05
      %v3579 = vadd.f32 %v3573, 1e-05
      %v3580 = vadd.f32 %v3574, 1e-05
      %v3581 = vadd.f32 %v3575, 1e-05
      %v3582 = vadd.f32 %v3576, 1e-05
      %v3583 = vadd.f32 %v3577, 1e-05
      %v3584 = vrsqrt.pop %v3578
      %v3585 = vrsqrt.pop %v3579
      %v3586 = vrsqrt.pop %v3580
      %v3587 = vrsqrt.pop %v3581
      %v3588 = vrsqrt.pop %v3582
      %v3589 = vrsqrt.pop %v3583
      %v3590 = vmul.f32 %v3548, %v3584
      %v3591 = vmul.f32 %v3549, %v3585
      %v3592 = vmul.f32 %v3550, %v3586
      %v3593 = vmul.f32 %v3551, %v3587
      %v3594 = vmul.f32 %v3552, %v3588
      %v3595 = vmul.f32 %v3553, %v3589
      %v3597 = vlaneseq
      %v3598 = vshrl.u32 %v3597, 7
      %v3599 = vsub.s32 0, %v3598
      %v3600 = vrot.slane %v3528, %v3599
      %v3602 = vmul.f32 %v3590, %v3600
      %v3603 = vmul.f32 %v3591, %v3600
      %v3604 = vmul.f32 %v3592, %v3600
      %v3605 = vmul.f32 %v3593, %v3600
      %v3606 = vmul.f32 %v3594, %v3600
      %v3607 = vmul.f32 %v3595, %v3600
      %v3609 = vlaneseq
      %v3610 = vshrl.u32 %v3609, 7
      %v3611 = vsub.s32 0, %v3610
      %v3612 = vrot.slane %v3529, %v3611
      %v3614 = vadd.f32 %v3602, %v3612
      %v3615 = vadd.f32 %v3603, %v3612
      %v3616 = vadd.f32 %v3604, %v3612
      %v3617 = vadd.f32 %v3605, %v3612
      %v3618 = vadd.f32 %v3606, %v3612
      %v3619 = vadd.f32 %v3607, %v3612
      %v3620 = vpack.c.bf16 %v3615, %v3614
      %v3621 = vpack.c.bf16 %v3617, %v3616
      %v3622 = vpack.c.bf16 %v3619, %v3618
      %v3623 = vld [vmem:[%s828] sm:$0xff]
      %v3624 = vld [vmem:[%s828 + $0x8] sm:$0xff]
      %v3625 = vld [vmem:[%s828 + $0x10] sm:$0xff]
      %v3626 = vld [vmem:[%s828 + $0x18] sm:$0xff]
      %v3627 = vld [vmem:[%s828 + $0x20] sm:$0xff]
      %v3628 = vld [vmem:[%s828 + $0x28] sm:$0xff]
      %v3629 = vld [vmem:[%s828 + $0x30] sm:$0xff]
      %v3630 = vld [vmem:[%s828 + $0x38] sm:$0xff]
      %v3631 = vld [vmem:[%s828 + $0x40] sm:$0xff]
      %v3632 = vld [vmem:[%s828 + $0x48] sm:$0xff]
      %v3633 = vld [vmem:[%s828 + $0x50] sm:$0xff]
      %v3634 = vld [vmem:[%s828 + $0x58] sm:$0xff]
      %v3635 = vld [vmem:[%s828 + $0x60] sm:$0xff]
      %v3636 = vld [vmem:[%s828 + $0x68] sm:$0xff]
      %v3637 = vld [vmem:[%s828 + $0x70] sm:$0xff]
      %v3638 = vld [vmem:[%s828 + $0x78] sm:$0xff]
      %v3639 = vld [vmem:[%s828 + $0x80] sm:$0xff]
      %v3640 = vld [vmem:[%s828 + $0x88] sm:$0xff]
      %v3641 = vld [vmem:[%s828 + $0x90] sm:$0xff]
      %v3642 = vld [vmem:[%s828 + $0x98] sm:$0xff]
      %v3643 = vld [vmem:[%s828 + $0xa0] sm:$0xff]
      %v3644 = vld [vmem:[%s828 + $0xa8] sm:$0xff]
      %v3645 = vld [vmem:[%s828 + $0xb0] sm:$0xff]
      %v3646 = vld [vmem:[%s828 + $0xb8] sm:$0xff]
      %v3647 = vld [vmem:[%s828 + $0xc0] sm:$0xff]
      %v3648 = vld [vmem:[%s828 + $0xc8] sm:$0xff]
      %v3649 = vld [vmem:[%s828 + $0xd0] sm:$0xff]
      %v3650 = vld [vmem:[%s828 + $0xd8] sm:$0xff]
      %v3651 = vld [vmem:[%s828 + $0xe0] sm:$0xff]
      %v3652 = vld [vmem:[%s828 + $0xe8] sm:$0xff]
      %v3653 = vld [vmem:[%s828 + $0xf0] sm:$0xff]
      %v3654 = vld [vmem:[%s828 + $0xf8] sm:$0xff]
      %v3655 = vld [vmem:[%s832] sm:$0xf]
      %v3657 = vlaneseq
      %v3658 = vshrl.u32 %v3657, 7
      %v3659 = vsub.s32 0, %v3658
      %v3660 = vrot.slane %v3655, %v3659
      %v3661 = vlaneseq
      %v3662 = vshrl.u32 %v3661, 7
      %v3663 = vsub.s32 1, %v3662
      %v3664 = vrot.slane %v3655, %v3663
      %v3665 = vlaneseq
      %v3666 = vshrl.u32 %v3665, 7
      %v3667 = vsub.s32 2, %v3666
      %v3668 = vrot.slane %v3655, %v3667
      %v3669 = vlaneseq
      %v3670 = vshrl.u32 %v3669, 7
      %v3671 = vsub.s32 3, %v3670
      %v3672 = vrot.slane %v3655, %v3671
      %v3709 = vunpack.c.l.b16 %v3623
      %v3710 = vunpack.c.h.b16 %v3623
      %v3711 = vunpack.c.l.b16 %v3624
      %v3712 = vunpack.c.h.b16 %v3624
      %v3713 = vunpack.c.l.b16 %v3625
      %v3714 = vunpack.c.h.b16 %v3625
      %v3715 = vunpack.c.l.b16 %v3626
      %v3716 = vunpack.c.h.b16 %v3626
      %v3717 = vunpack.c.l.b16 %v3627
      %v3718 = vunpack.c.h.b16 %v3627
      %v3719 = vunpack.c.l.b16 %v3628
      %v3720 = vunpack.c.h.b16 %v3628
      %v3721 = vunpack.c.l.b16 %v3629
      %v3722 = vunpack.c.h.b16 %v3629
      %v3723 = vunpack.c.l.b16 %v3630
      %v3724 = vunpack.c.h.b16 %v3630
      %v3725 = vunpack.c.l.b16 %v3631
      %v3726 = vunpack.c.h.b16 %v3631
      %v3727 = vunpack.c.l.b16 %v3632
      %v3728 = vunpack.c.h.b16 %v3632
      %v3729 = vunpack.c.l.b16 %v3633
      %v3730 = vunpack.c.h.b16 %v3633
      %v3731 = vunpack.c.l.b16 %v3634
      %v3732 = vunpack.c.h.b16 %v3634
      %v3733 = vunpack.c.l.b16 %v3635
      %v3734 = vunpack.c.h.b16 %v3635
      %v3735 = vunpack.c.l.b16 %v3636
      %v3736 = vunpack.c.h.b16 %v3636
      %v3737 = vunpack.c.l.b16 %v3637
      %v3738 = vunpack.c.h.b16 %v3637
      %v3739 = vunpack.c.l.b16 %v3638
      %v3740 = vunpack.c.h.b16 %v3638
      %v3741 = vunpack.c.l.b16 %v3639
      %v3742 = vunpack.c.h.b16 %v3639
      %v3743 = vunpack.c.l.b16 %v3640
      %v3744 = vunpack.c.h.b16 %v3640
      %v3745 = vunpack.c.l.b16 %v3641
      %v3746 = vunpack.c.h.b16 %v3641
      %v3747 = vunpack.c.l.b16 %v3642
      %v3748 = vunpack.c.h.b16 %v3642
      %v3749 = vunpack.c.l.b16 %v3643
      %v3750 = vunpack.c.h.b16 %v3643
      %v3751 = vunpack.c.l.b16 %v3644
      %v3752 = vunpack.c.h.b16 %v3644
      %v3753 = vunpack.c.l.b16 %v3645
      %v3754 = vunpack.c.h.b16 %v3645
      %v3755 = vunpack.c.l.b16 %v3646
      %v3756 = vunpack.c.h.b16 %v3646
      %v3757 = vunpack.c.l.b16 %v3647
      %v3758 = vunpack.c.h.b16 %v3647
      %v3759 = vunpack.c.l.b16 %v3648
      %v3760 = vunpack.c.h.b16 %v3648
      %v3761 = vunpack.c.l.b16 %v3649
      %v3762 = vunpack.c.h.b16 %v3649
      %v3763 = vunpack.c.l.b16 %v3650
      %v3764 = vunpack.c.h.b16 %v3650
      %v3765 = vunpack.c.l.b16 %v3651
      %v3766 = vunpack.c.h.b16 %v3651
      %v3767 = vunpack.c.l.b16 %v3652
      %v3768 = vunpack.c.h.b16 %v3652
      %v3769 = vunpack.c.l.b16 %v3653
      %v3770 = vunpack.c.h.b16 %v3653
      %v3771 = vunpack.c.l.b16 %v3654
      %v3772 = vunpack.c.h.b16 %v3654
      %v3773 = vpack.c.b16 %v3713, %v3709
      %v3774 = vpack.c.b16 %v3714, %v3710
      %v3775 = vpack.c.b16 %v3715, %v3711
      %v3776 = vpack.c.b16 %v3716, %v3712
      %v3777 = vpack.c.b16 %v3721, %v3717
      %v3778 = vpack.c.b16 %v3722, %v3718
      %v3779 = vpack.c.b16 %v3723, %v3719
      %v3780 = vpack.c.b16 %v3724, %v3720
      %v3781 = vpack.c.b16 %v3729, %v3725
      %v3782 = vpack.c.b16 %v3730, %v3726
      %v3783 = vpack.c.b16 %v3731, %v3727
      %v3784 = vpack.c.b16 %v3732, %v3728
      %v3785 = vpack.c.b16 %v3737, %v3733
      %v3786 = vpack.c.b16 %v3738, %v3734
      %v3787 = vpack.c.b16 %v3739, %v3735
      %v3788 = vpack.c.b16 %v3740, %v3736
      %v3789 = vpack.c.b16 %v3745, %v3741
      %v3790 = vpack.c.b16 %v3746, %v3742
      %v3791 = vpack.c.b16 %v3747, %v3743
      %v3792 = vpack.c.b16 %v3748, %v3744
      %v3793 = vpack.c.b16 %v3753, %v3749
      %v3794 = vpack.c.b16 %v3754, %v3750
      %v3795 = vpack.c.b16 %v3755, %v3751
      %v3796 = vpack.c.b16 %v3756, %v3752
      %v3797 = vpack.c.b16 %v3761, %v3757
      %v3798 = vpack.c.b16 %v3762, %v3758
      %v3799 = vpack.c.b16 %v3763, %v3759
      %v3800 = vpack.c.b16 %v3764, %v3760
      %v3801 = vpack.c.b16 %v3769, %v3765
      %v3802 = vpack.c.b16 %v3770, %v3766
      %v3803 = vpack.c.b16 %v3771, %v3767
      %v3804 = vpack.c.b16 %v3772, %v3768
      %3837 = vmatprep.subr.bf16.mxu0 %v3802
      %3838 = vmatpush1.bf16.msra.mxu0 %v3801
      %3839 = vmatprep.subr.bf16.mxu0 %v3798
      %3840 = vmatpush1.bf16.msra.mxu0 %v3797
      %3841 = vmatprep.subr.bf16.mxu0 %v3794
      %3842 = vmatpush1.bf16.msra.mxu0 %v3793
      %3843 = vmatprep.subr.bf16.mxu0 %v3790
      %3844 = vmatpush1.bf16.msra.mxu0 %v3789
      %3845 = vmatprep.subr.bf16.mxu0 %v3786
      %3846 = vmatpush1.bf16.msra.mxu0 %v3785
      %3847 = vmatprep.subr.bf16.mxu0 %v3782
      %3848 = vmatpush1.bf16.msra.mxu0 %v3781
      %3849 = vmatprep.subr.bf16.mxu0 %v3778
      %3850 = vmatpush1.bf16.msra.mxu0 %v3777
      %3851 = vmatprep.subr.bf16.mxu0 %v3774
      %3852 = vmatpush1.bf16.msra.mxu0 %v3773
      %3853 = vmatprep.subr.bf16.mxu0 0
      %3854 = vmatpush2.bf16.msra.mxu0 0
      %3855 = vmatprep.subr.bf16.mxu0 0
      %3856 = vmatpush2.bf16.msra.mxu0 0
      %3857 = vmatprep.subr.bf16.mxu0 0
      %3858 = vmatpush2.bf16.msra.mxu0 0
      %3859 = vmatprep.subr.bf16.mxu0 0
      %3860 = vmatpush2.bf16.msra.mxu0 0
      %3861 = vmatprep.subr.bf16.mxu0 0
      %3862 = vmatpush2.bf16.msra.mxu0 0
      %3863 = vmatprep.subr.bf16.mxu0 0
      %3864 = vmatpush2.bf16.msra.mxu0 0
      %3865 = vmatprep.subr.bf16.mxu0 0
      %3866 = vmatpush2.bf16.msra.mxu0 0
      %3867 = vmatprep.subr.bf16.mxu0 0
      %3868 = vmatpush2.bf16.msra.mxu0 0
      %3869 = vmatprep.mubr.bf16.mxu0 0
      %3870 = vmatmul.mubr.bf16.gmra.mxu0 %v3620
      %v3871 = vpop.f32.mrf.mxu0
      %v3872 = vadd.f32 %v3660, %v3871
      %v3873 = vpop.f32.mrf.mxu0
      %v3874 = vadd.f32 %v3664, %v3873
      %v3875 = vpop.f32.mrf.mxu0
      %v3876 = vadd.f32 %v3660, %v3875
      %v3877 = vpop.f32.mrf.mxu0
      %v3878 = vadd.f32 %v3664, %v3877
      %3879 = vmatprep.mubr.bf16.mxu0 0
      %3880 = vmatmul.mubr.bf16.gmra.mxu0 %v3621
      %v3881 = vpop.f32.mrf.mxu0
      %v3882 = vadd.f32 %v3660, %v3881
      %v3883 = vpop.f32.mrf.mxu0
      %v3884 = vadd.f32 %v3664, %v3883
      %v3885 = vpop.f32.mrf.mxu0
      %v3886 = vadd.f32 %v3660, %v3885
      %v3887 = vpop.f32.mrf.mxu0
      %v3888 = vadd.f32 %v3664, %v3887
      %3889 = vmatprep.mubr.bf16.mxu0 0
      %3890 = vmatmul.mubr.bf16.gmra.mxu0 %v3622
      %v3891 = vpop.f32.mrf.mxu0
      %v3892 = vadd.f32 %v3660, %v3891
      %v3893 = vpop.f32.mrf.mxu0
      %v3894 = vadd.f32 %v3664, %v3893
      %v3895 = vpop.f32.mrf.mxu0
      %v3896 = vadd.f32 %v3660, %v3895
      %v3897 = vpop.f32.mrf.mxu0
      %v3898 = vadd.f32 %v3664, %v3897
      %3899 = vdwg.mxu0
      %3900 = vmatprep.subr.bf16.mxu0 %v3804
      %3901 = vmatpush1.bf16.msra.mxu0 %v3803
      %3902 = vmatprep.subr.bf16.mxu0 %v3800
      %3903 = vmatpush1.bf16.msra.mxu0 %v3799
      %3904 = vmatprep.subr.bf16.mxu0 %v3796
      %3905 = vmatpush1.bf16.msra.mxu0 %v3795
      %3906 = vmatprep.subr.bf16.mxu0 %v3792
      %3907 = vmatpush1.bf16.msra.mxu0 %v3791
      %3908 = vmatprep.subr.bf16.mxu0 %v3788
      %3909 = vmatpush1.bf16.msra.mxu0 %v3787
      %3910 = vmatprep.subr.bf16.mxu0 %v3784
      %3911 = vmatpush1.bf16.msra.mxu0 %v3783
      %3912 = vmatprep.subr.bf16.mxu0 %v3780
      %3913 = vmatpush1.bf16.msra.mxu0 %v3779
      %3914 = vmatprep.subr.bf16.mxu0 %v3776
      %3915 = vmatpush1.bf16.msra.mxu0 %v3775
      %3916 = vmatprep.subr.bf16.mxu0 0
      %3917 = vmatpush2.bf16.msra.mxu0 0
      %3918 = vmatprep.subr.bf16.mxu0 0
      %3919 = vmatpush2.bf16.msra.mxu0 0
      %3920 = vmatprep.subr.bf16.mxu0 0
      %3921 = vmatpush2.bf16.msra.mxu0 0
      %3922 = vmatprep.subr.bf16.mxu0 0
      %3923 = vmatpush2.bf16.msra.mxu0 0
      %3924 = vmatprep.subr.bf16.mxu0 0
      %3925 = vmatpush2.bf16.msra.mxu0 0
      %3926 = vmatprep.subr.bf16.mxu0 0
      %3927 = vmatpush2.bf16.msra.mxu0 0
      %3928 = vmatprep.subr.bf16.mxu0 0
      %3929 = vmatpush2.bf16.msra.mxu0 0
      %3930 = vmatprep.subr.bf16.mxu0 0
      %3931 = vmatpush2.bf16.msra.mxu0 0
      %3932 = vmatprep.mubr.bf16.mxu0 0
      %3933 = vmatmul.mubr.bf16.gmra.mxu0 %v3620
      %v3934 = vpop.f32.mrf.mxu0
      %v3935 = vadd.f32 %v3668, %v3934
      %v3936 = vpop.f32.mrf.mxu0
      %v3937 = vadd.f32 %v3672, %v3936
      %v3938 = vpop.f32.mrf.mxu0
      %v3939 = vadd.f32 %v3668, %v3938
      %v3940 = vpop.f32.mrf.mxu0
      %v3941 = vadd.f32 %v3672, %v3940
      %3942 = vmatprep.mubr.bf16.mxu0 0
      %3943 = vmatmul.mubr.bf16.gmra.mxu0 %v3621
      %v3944 = vpop.f32.mrf.mxu0
      %v3945 = vadd.f32 %v3668, %v3944
      %v3946 = vpop.f32.mrf.mxu0
      %v3947 = vadd.f32 %v3672, %v3946
      %v3948 = vpop.f32.mrf.mxu0
      %v3949 = vadd.f32 %v3668, %v3948
      %v3950 = vpop.f32.mrf.mxu0
      %v3951 = vadd.f32 %v3672, %v3950
      %3952 = vmatprep.mubr.bf16.mxu0 0
      %3953 = vmatmul.mubr.bf16.gmra.mxu0 %v3622
      %v3954 = vpop.f32.mrf.mxu0
      %v3955 = vadd.f32 %v3668, %v3954
      %v3956 = vpop.f32.mrf.mxu0
      %v3957 = vadd.f32 %v3672, %v3956
      %v3958 = vpop.f32.mrf.mxu0
      %v3959 = vadd.f32 %v3668, %v3958
      %v3960 = vpop.f32.mrf.mxu0
      %v3961 = vadd.f32 %v3672, %v3960
      %3962 = vdwg.mxu0
      %v3963 = vmul.f32 %v3872, 1.702
      %v3964 = vmul.f32 %v3874, 1.702
      %v3965 = vmul.f32 %v3935, 1.702
      %v3966 = vmul.f32 %v3937, 1.702
      %v3967 = vmul.f32 %v3876, 1.702
      %v3968 = vmul.f32 %v3878, 1.702
      %v3969 = vmul.f32 %v3939, 1.702
      %v3970 = vmul.f32 %v3941, 1.702
      %v3971 = vmul.f32 %v3882, 1.702
      %v3972 = vmul.f32 %v3884, 1.702
      %v3973 = vmul.f32 %v3945, 1.702
      %v3974 = vmul.f32 %v3947, 1.702
      %v3975 = vmul.f32 %v3886, 1.702
      %v3976 = vmul.f32 %v3888, 1.702
      %v3977 = vmul.f32 %v3949, 1.702
      %v3978 = vmul.f32 %v3951, 1.702
      %v3979 = vmul.f32 %v3892, 1.702
      %v3980 = vmul.f32 %v3894, 1.702
      %v3981 = vmul.f32 %v3955, 1.702
      %v3982 = vmul.f32 %v3957, 1.702
      %v3983 = vmul.f32 %v3896, 1.702
      %v3984 = vmul.f32 %v3898, 1.702
      %v3985 = vmul.f32 %v3959, 1.702
      %v3986 = vmul.f32 %v3961, 1.702
      %v3987 = vxor.u32 %v3963, 2147483648
      %v3988 = vxor.u32 %v3964, 2147483648
      %v3989 = vxor.u32 %v3965, 2147483648
      %v3990 = vxor.u32 %v3966, 2147483648
      %v3991 = vxor.u32 %v3967, 2147483648
      %v3992 = vxor.u32 %v3968, 2147483648
      %v3993 = vxor.u32 %v3969, 2147483648
      %v3994 = vxor.u32 %v3970, 2147483648
      %v3995 = vxor.u32 %v3971, 2147483648
      %v3996 = vxor.u32 %v3972, 2147483648
      %v3997 = vxor.u32 %v3973, 2147483648
      %v3998 = vxor.u32 %v3974, 2147483648
      %v3999 = vxor.u32 %v3975, 2147483648
      %v4000 = vxor.u32 %v3976, 2147483648
      %v4001 = vxor.u32 %v3977, 2147483648
      %v4002 = vxor.u32 %v3978, 2147483648
      %v4003 = vxor.u32 %v3979, 2147483648
      %v4004 = vxor.u32 %v3980, 2147483648
      %v4005 = vxor.u32 %v3981, 2147483648
      %v4006 = vxor.u32 %v3982, 2147483648
      %v4007 = vxor.u32 %v3983, 2147483648
      %v4008 = vxor.u32 %v3984, 2147483648
      %v4009 = vxor.u32 %v3985, 2147483648
      %v4010 = vxor.u32 %v3986, 2147483648
      %v4011 = vmul.f32 %v3987, 1.442695
      %v4012 = vpow.pop %v4011
      %v4013 = vmul.f32 %v3988, 1.442695
      %v4014 = vpow.pop %v4013
      %v4015 = vmul.f32 %v3989, 1.442695
      %v4016 = vpow.pop %v4015
      %v4017 = vmul.f32 %v3990, 1.442695
      %v4018 = vpow.pop %v4017
      %v4019 = vmul.f32 %v3991, 1.442695
      %v4020 = vpow.pop %v4019
      %v4021 = vmul.f32 %v3992, 1.442695
      %v4022 = vpow.pop %v4021
      %v4023 = vmul.f32 %v3993, 1.442695
      %v4024 = vpow.pop %v4023
      %v4025 = vmul.f32 %v3994, 1.442695
      %v4026 = vpow.pop %v4025
      %v4027 = vmul.f32 %v3995, 1.442695
      %v4028 = vpow.pop %v4027
      %v4029 = vmul.f32 %v3996, 1.442695
      %v4030 = vpow.pop %v4029
      %v4031 = vmul.f32 %v3997, 1.442695
      %v4032 = vpow.pop %v4031
      %v4033 = vmul.f32 %v3998, 1.442695
      %v4034 = vpow.pop %v4033
      %v4035 = vmul.f32 %v3999, 1.442695
      %v4036 = vpow.pop %v4035
      %v4037 = vmul.f32 %v4000, 1.442695
      %v4038 = vpow.pop %v4037
      %v4039 = vmul.f32 %v4001, 1.442695
      %v4040 = vpow.pop %v4039
      %v4041 = vmul.f32 %v4002, 1.442695
      %v4042 = vpow.pop %v4041
      %v4043 = vmul.f32 %v4003, 1.442695
      %v4044 = vpow.pop %v4043
      %v4045 = vmul.f32 %v4004, 1.442695
      %v4046 = vpow.pop %v4045
      %v4047 = vmul.f32 %v4005, 1.442695
      %v4048 = vpow.pop %v4047
      %v4049 = vmul.f32 %v4006, 1.442695
      %v4050 = vpow.pop %v4049
      %v4051 = vmul.f32 %v4007, 1.442695
      %v4052 = vpow.pop %v4051
      %v4053 = vmul.f32 %v4008, 1.442695
      %v4054 = vpow.pop %v4053
      %v4055 = vmul.f32 %v4009, 1.442695
      %v4056 = vpow.pop %v4055
      %v4057 = vmul.f32 %v4010, 1.442695
      %v4058 = vpow.pop %v4057
      %v4059 = vadd.f32 %v4012, 1.0
      %v4060 = vadd.f32 %v4014, 1.0
      %v4061 = vadd.f32 %v4016, 1.0
      %v4062 = vadd.f32 %v4018, 1.0
      %v4063 = vadd.f32 %v4020, 1.0
      %v4064 = vadd.f32 %v4022, 1.0
      %v4065 = vadd.f32 %v4024, 1.0
      %v4066 = vadd.f32 %v4026, 1.0
      %v4067 = vadd.f32 %v4028, 1.0
      %v4068 = vadd.f32 %v4030, 1.0
      %v4069 = vadd.f32 %v4032, 1.0
      %v4070 = vadd.f32 %v4034, 1.0
      %v4071 = vadd.f32 %v4036, 1.0
      %v4072 = vadd.f32 %v4038, 1.0
      %v4073 = vadd.f32 %v4040, 1.0
      %v4074 = vadd.f32 %v4042, 1.0
      %v4075 = vadd.f32 %v4044, 1.0
      %v4076 = vadd.f32 %v4046, 1.0
      %v4077 = vadd.f32 %v4048, 1.0
      %v4078 = vadd.f32 %v4050, 1.0
      %v4079 = vadd.f32 %v4052, 1.0
      %v4080 = vadd.f32 %v4054, 1.0
      %v4081 = vadd.f32 %v4056, 1.0
      %v4082 = vadd.f32 %v4058, 1.0
      %v4083 = vrcp.pop %v4059
      %v4084 = vmul.f32 1.0, %v4083
      %v4085 = vrcp.pop %v4060
      %v4086 = vmul.f32 1.0, %v4085
      %v4087 = vrcp.pop %v4061
      %v4088 = vmul.f32 1.0, %v4087
      %v4089 = vrcp.pop %v4062
      %v4090 = vmul.f32 1.0, %v4089
      %v4091 = vrcp.pop %v4063
      %v4092 = vmul.f32 1.0, %v4091
      %v4093 = vrcp.pop %v4064
      %v4094 = vmul.f32 1.0, %v4093
      %v4095 = vrcp.pop %v4065
      %v4096 = vmul.f32 1.0, %v4095
      %v4097 = vrcp.pop %v4066
      %v4098 = vmul.f32 1.0, %v4097
      %v4099 = vrcp.pop %v4067
      %v4100 = vmul.f32 1.0, %v4099
      %v4101 = vrcp.pop %v4068
      %v4102 = vmul.f32 1.0, %v4101
      %v4103 = vrcp.pop %v4069
      %v4104 = vmul.f32 1.0, %v4103
      %v4105 = vrcp.pop %v4070
      %v4106 = vmul.f32 1.0, %v4105
      %v4107 = vrcp.pop %v4071
      %v4108 = vmul.f32 1.0, %v4107
      %v4109 = vrcp.pop %v4072
      %v4110 = vmul.f32 1.0, %v4109
      %v4111 = vrcp.pop %v4073
      %v4112 = vmul.f32 1.0, %v4111
      %v4113 = vrcp.pop %v4074
      %v4114 = vmul.f32 1.0, %v4113
      %v4115 = vrcp.pop %v4075
      %v4116 = vmul.f32 1.0, %v4115
      %v4117 = vrcp.pop %v4076
      %v4118 = vmul.f32 1.0, %v4117
      %v4119 = vrcp.pop %v4077
      %v4120 = vmul.f32 1.0, %v4119
      %v4121 = vrcp.pop %v4078
      %v4122 = vmul.f32 1.0, %v4121
      %v4123 = vrcp.pop %v4079
      %v4124 = vmul.f32 1.0, %v4123
      %v4125 = vrcp.pop %v4080
      %v4126 = vmul.f32 1.0, %v4125
      %v4127 = vrcp.pop %v4081
      %v4128 = vmul.f32 1.0, %v4127
      %v4129 = vrcp.pop %v4082
      %v4130 = vmul.f32 1.0, %v4129
      %v4131 = vmul.f32 %v3872, %v4084
      %v4132 = vmul.f32 %v3874, %v4086
      %v4133 = vmul.f32 %v3935, %v4088
      %v4134 = vmul.f32 %v3937, %v4090
      %v4135 = vmul.f32 %v3876, %v4092
      %v4136 = vmul.f32 %v3878, %v4094
      %v4137 = vmul.f32 %v3939, %v4096
      %v4138 = vmul.f32 %v3941, %v4098
      %v4139 = vmul.f32 %v3882, %v4100
      %v4140 = vmul.f32 %v3884, %v4102
      %v4141 = vmul.f32 %v3945, %v4104
      %v4142 = vmul.f32 %v3947, %v4106
      %v4143 = vmul.f32 %v3886, %v4108
      %v4144 = vmul.f32 %v3888, %v4110
      %v4145 = vmul.f32 %v3949, %v4112
      %v4146 = vmul.f32 %v3951, %v4114
      %v4147 = vmul.f32 %v3892, %v4116
      %v4148 = vmul.f32 %v3894, %v4118
      %v4149 = vmul.f32 %v3955, %v4120
      %v4150 = vmul.f32 %v3957, %v4122
      %v4151 = vmul.f32 %v3896, %v4124
      %v4152 = vmul.f32 %v3898, %v4126
      %v4153 = vmul.f32 %v3959, %v4128
      %v4154 = vmul.f32 %v3961, %v4130
      %v4155 = vpack.c.bf16 %v4135, %v4131
      %v4156 = vpack.c.bf16 %v4136, %v4132
      %v4157 = vpack.c.bf16 %v4137, %v4133
      %v4158 = vpack.c.bf16 %v4138, %v4134
      %v4159 = vpack.c.bf16 %v4143, %v4139
      %v4160 = vpack.c.bf16 %v4144, %v4140
      %v4161 = vpack.c.bf16 %v4145, %v4141
      %v4162 = vpack.c.bf16 %v4146, %v4142
      %v4163 = vpack.c.bf16 %v4151, %v4147
      %v4164 = vpack.c.bf16 %v4152, %v4148
      %v4165 = vpack.c.bf16 %v4153, %v4149
      %v4166 = vpack.c.bf16 %v4154, %v4150
      %v4167 = vld [vmem:[%s837] sm:$0xf]
      %v4168 = vld [vmem:[%s837 + $0x4] sm:$0xf]
      %v4169 = vld [vmem:[%s837 + $0x8] sm:$0xf]
      %v4170 = vld [vmem:[%s837 + $0xc] sm:$0xf]
      %v4171 = vld [vmem:[%s837 + $0x10] sm:$0xf]
      %v4172 = vld [vmem:[%s837 + $0x14] sm:$0xf]
      %v4173 = vld [vmem:[%s837 + $0x18] sm:$0xf]
      %v4174 = vld [vmem:[%s837 + $0x1c] sm:$0xf]
      %v4175 = vld [vmem:[%s837 + $0x20] sm:$0xf]
      %v4176 = vld [vmem:[%s837 + $0x24] sm:$0xf]
      %v4177 = vld [vmem:[%s837 + $0x28] sm:$0xf]
      %v4178 = vld [vmem:[%s837 + $0x2c] sm:$0xf]
      %v4179 = vld [vmem:[%s837 + $0x30] sm:$0xf]
      %v4180 = vld [vmem:[%s837 + $0x34] sm:$0xf]
      %v4181 = vld [vmem:[%s837 + $0x38] sm:$0xf]
      %v4182 = vld [vmem:[%s837 + $0x3c] sm:$0xf]
      %v4183 = vld [vmem:[%s837 + $0x40] sm:$0xf]
      %v4184 = vld [vmem:[%s837 + $0x44] sm:$0xf]
      %v4185 = vld [vmem:[%s837 + $0x48] sm:$0xf]
      %v4186 = vld [vmem:[%s837 + $0x4c] sm:$0xf]
      %v4187 = vld [vmem:[%s837 + $0x50] sm:$0xf]
      %v4188 = vld [vmem:[%s837 + $0x54] sm:$0xf]
      %v4189 = vld [vmem:[%s837 + $0x58] sm:$0xf]
      %v4190 = vld [vmem:[%s837 + $0x5c] sm:$0xf]
      %v4191 = vld [vmem:[%s837 + $0x60] sm:$0xf]
      %v4192 = vld [vmem:[%s837 + $0x64] sm:$0xf]
      %v4193 = vld [vmem:[%s837 + $0x68] sm:$0xf]
      %v4194 = vld [vmem:[%s837 + $0x6c] sm:$0xf]
      %v4195 = vld [vmem:[%s837 + $0x70] sm:$0xf]
      %v4196 = vld [vmem:[%s837 + $0x74] sm:$0xf]
      %v4197 = vld [vmem:[%s837 + $0x78] sm:$0xf]
      %v4198 = vld [vmem:[%s837 + $0x7c] sm:$0xf]
      %v4199 = vld [vmem:[%s837 + $0x80] sm:$0xf]
      %v4200 = vld [vmem:[%s837 + $0x84] sm:$0xf]
      %v4201 = vld [vmem:[%s837 + $0x88] sm:$0xf]
      %v4202 = vld [vmem:[%s837 + $0x8c] sm:$0xf]
      %v4203 = vld [vmem:[%s837 + $0x90] sm:$0xf]
      %v4204 = vld [vmem:[%s837 + $0x94] sm:$0xf]
      %v4205 = vld [vmem:[%s837 + $0x98] sm:$0xf]
      %v4206 = vld [vmem:[%s837 + $0x9c] sm:$0xf]
      %v4207 = vld [vmem:[%s837 + $0xa0] sm:$0xf]
      %v4208 = vld [vmem:[%s837 + $0xa4] sm:$0xf]
      %v4209 = vld [vmem:[%s837 + $0xa8] sm:$0xf]
      %v4210 = vld [vmem:[%s837 + $0xac] sm:$0xf]
      %v4211 = vld [vmem:[%s837 + $0xb0] sm:$0xf]
      %v4212 = vld [vmem:[%s837 + $0xb4] sm:$0xf]
      %v4213 = vld [vmem:[%s837 + $0xb8] sm:$0xf]
      %v4214 = vld [vmem:[%s837 + $0xbc] sm:$0xf]
      %v4215 = vld [vmem:[%s837 + $0xc0] sm:$0xf]
      %v4216 = vld [vmem:[%s837 + $0xc4] sm:$0xf]
      %v4217 = vld [vmem:[%s837 + $0xc8] sm:$0xf]
      %v4218 = vld [vmem:[%s837 + $0xcc] sm:$0xf]
      %v4219 = vld [vmem:[%s837 + $0xd0] sm:$0xf]
      %v4220 = vld [vmem:[%s837 + $0xd4] sm:$0xf]
      %v4221 = vld [vmem:[%s837 + $0xd8] sm:$0xf]
      %v4222 = vld [vmem:[%s837 + $0xdc] sm:$0xf]
      %v4223 = vld [vmem:[%s837 + $0xe0] sm:$0xf]
      %v4224 = vld [vmem:[%s837 + $0xe4] sm:$0xf]
      %v4225 = vld [vmem:[%s837 + $0xe8] sm:$0xf]
      %v4226 = vld [vmem:[%s837 + $0xec] sm:$0xf]
      %v4227 = vld [vmem:[%s837 + $0xf0] sm:$0xf]
      %v4228 = vld [vmem:[%s837 + $0xf4] sm:$0xf]
      %v4229 = vld [vmem:[%s837 + $0xf8] sm:$0xf]
      %v4230 = vld [vmem:[%s837 + $0xfc] sm:$0xf]
      %v4231 = vld [vmem:[%s840] sm:$0x1]
      %v4233 = vlaneseq
      %v4234 = vshrl.u32 %v4233, 7
      %v4235 = vsub.s32 0, %v4234
      %v4236 = vrot.slane %v4231, %v4235
      %v4302 = vunpack.c.l.b16 %v4167
      %v4303 = vunpack.c.l.b16 %v4168
      %v4304 = vunpack.c.l.b16 %v4169
      %v4305 = vunpack.c.l.b16 %v4170
      %v4306 = vunpack.c.l.b16 %v4171
      %v4307 = vunpack.c.l.b16 %v4172
      %v4308 = vunpack.c.l.b16 %v4173
      %v4309 = vunpack.c.l.b16 %v4174
      %v4310 = vunpack.c.l.b16 %v4175
      %v4311 = vunpack.c.l.b16 %v4176
      %v4312 = vunpack.c.l.b16 %v4177
      %v4313 = vunpack.c.l.b16 %v4178
      %v4314 = vunpack.c.l.b16 %v4179
      %v4315 = vunpack.c.l.b16 %v4180
      %v4316 = vunpack.c.l.b16 %v4181
      %v4317 = vunpack.c.l.b16 %v4182
      %v4318 = vunpack.c.l.b16 %v4183
      %v4319 = vunpack.c.l.b16 %v4184
      %v4320 = vunpack.c.l.b16 %v4185
      %v4321 = vunpack.c.l.b16 %v4186
      %v4322 = vunpack.c.l.b16 %v4187
      %v4323 = vunpack.c.l.b16 %v4188
      %v4324 = vunpack.c.l.b16 %v4189
      %v4325 = vunpack.c.l.b16 %v4190
      %v4326 = vunpack.c.l.b16 %v4191
      %v4327 = vunpack.c.l.b16 %v4192
      %v4328 = vunpack.c.l.b16 %v4193
      %v4329 = vunpack.c.l.b16 %v4194
      %v4330 = vunpack.c.l.b16 %v4195
      %v4331 = vunpack.c.l.b16 %v4196
      %v4332 = vunpack.c.l.b16 %v4197
      %v4333 = vunpack.c.l.b16 %v4198
      %v4334 = vunpack.c.l.b16 %v4199
      %v4335 = vunpack.c.l.b16 %v4200
      %v4336 = vunpack.c.l.b16 %v4201
      %v4337 = vunpack.c.l.b16 %v4202
      %v4338 = vunpack.c.l.b16 %v4203
      %v4339 = vunpack.c.l.b16 %v4204
      %v4340 = vunpack.c.l.b16 %v4205
      %v4341 = vunpack.c.l.b16 %v4206
      %v4342 = vunpack.c.l.b16 %v4207
      %v4343 = vunpack.c.l.b16 %v4208
      %v4344 = vunpack.c.l.b16 %v4209
      %v4345 = vunpack.c.l.b16 %v4210
      %v4346 = vunpack.c.l.b16 %v4211
      %v4347 = vunpack.c.l.b16 %v4212
      %v4348 = vunpack.c.l.b16 %v4213
      %v4349 = vunpack.c.l.b16 %v4214
      %v4350 = vunpack.c.l.b16 %v4215
      %v4351 = vunpack.c.l.b16 %v4216
      %v4352 = vunpack.c.l.b16 %v4217
      %v4353 = vunpack.c.l.b16 %v4218
      %v4354 = vunpack.c.l.b16 %v4219
      %v4355 = vunpack.c.l.b16 %v4220
      %v4356 = vunpack.c.l.b16 %v4221
      %v4357 = vunpack.c.l.b16 %v4222
      %v4358 = vunpack.c.l.b16 %v4223
      %v4359 = vunpack.c.l.b16 %v4224
      %v4360 = vunpack.c.l.b16 %v4225
      %v4361 = vunpack.c.l.b16 %v4226
      %v4362 = vunpack.c.l.b16 %v4227
      %v4363 = vunpack.c.l.b16 %v4228
      %v4364 = vunpack.c.l.b16 %v4229
      %v4365 = vunpack.c.l.b16 %v4230
      %v4366 = vpack.c.b16 %v4303, %v4302
      %v4367 = vpack.c.b16 %v4305, %v4304
      %v4368 = vpack.c.b16 %v4307, %v4306
      %v4369 = vpack.c.b16 %v4309, %v4308
      %v4370 = vpack.c.b16 %v4311, %v4310
      %v4371 = vpack.c.b16 %v4313, %v4312
      %v4372 = vpack.c.b16 %v4315, %v4314
      %v4373 = vpack.c.b16 %v4317, %v4316
      %v4374 = vpack.c.b16 %v4319, %v4318
      %v4375 = vpack.c.b16 %v4321, %v4320
      %v4376 = vpack.c.b16 %v4323, %v4322
      %v4377 = vpack.c.b16 %v4325, %v4324
      %v4378 = vpack.c.b16 %v4327, %v4326
      %v4379 = vpack.c.b16 %v4329, %v4328
      %v4380 = vpack.c.b16 %v4331, %v4330
      %v4381 = vpack.c.b16 %v4333, %v4332
      %v4382 = vpack.c.b16 %v4335, %v4334
      %v4383 = vpack.c.b16 %v4337, %v4336
      %v4384 = vpack.c.b16 %v4339, %v4338
      %v4385 = vpack.c.b16 %v4341, %v4340
      %v4386 = vpack.c.b16 %v4343, %v4342
      %v4387 = vpack.c.b16 %v4345, %v4344
      %v4388 = vpack.c.b16 %v4347, %v4346
      %v4389 = vpack.c.b16 %v4349, %v4348
      %v4390 = vpack.c.b16 %v4351, %v4350
      %v4391 = vpack.c.b16 %v4353, %v4352
      %v4392 = vpack.c.b16 %v4355, %v4354
      %v4393 = vpack.c.b16 %v4357, %v4356
      %v4394 = vpack.c.b16 %v4359, %v4358
      %v4395 = vpack.c.b16 %v4361, %v4360
      %v4396 = vpack.c.b16 %v4363, %v4362
      %v4397 = vpack.c.b16 %v4365, %v4364
      %4430 = vmatprep.subr.bf16.mxu0 0
      %4431 = vmatpush1.bf16.msra.mxu0 %v4373
      %4432 = vmatprep.subr.bf16.mxu0 0
      %4433 = vmatpush1.bf16.msra.mxu0 %v4372
      %4434 = vmatprep.subr.bf16.mxu0 0
      %4435 = vmatpush1.bf16.msra.mxu0 %v4371
      %4436 = vmatprep.subr.bf16.mxu0 0
      %4437 = vmatpush1.bf16.msra.mxu0 %v4370
      %4438 = vmatprep.subr.bf16.mxu0 0
      %4439 = vmatpush1.bf16.msra.mxu0 %v4369
      %4440 = vmatprep.subr.bf16.mxu0 0
      %4441 = vmatpush1.bf16.msra.mxu0 %v4368
      %4442 = vmatprep.subr.bf16.mxu0 0
      %4443 = vmatpush1.bf16.msra.mxu0 %v4367
      %4444 = vmatprep.subr.bf16.mxu0 0
      %4445 = vmatpush1.bf16.msra.mxu0 %v4366
      %4446 = vmatprep.subr.bf16.mxu0 0
      %4447 = vmatpush2.bf16.msra.mxu0 %v4381
      %4448 = vmatprep.subr.bf16.mxu0 0
      %4449 = vmatpush2.bf16.msra.mxu0 %v4380
      %4450 = vmatprep.subr.bf16.mxu0 0
      %4451 = vmatpush2.bf16.msra.mxu0 %v4379
      %4452 = vmatprep.subr.bf16.mxu0 0
      %4453 = vmatpush2.bf16.msra.mxu0 %v4378
      %4454 = vmatprep.subr.bf16.mxu0 0
      %4455 = vmatpush2.bf16.msra.mxu0 %v4377
      %4456 = vmatprep.subr.bf16.mxu0 0
      %4457 = vmatpush2.bf16.msra.mxu0 %v4376
      %4458 = vmatprep.subr.bf16.mxu0 0
      %4459 = vmatpush2.bf16.msra.mxu0 %v4375
      %4460 = vmatprep.subr.bf16.mxu0 0
      %4461 = vmatpush2.bf16.msra.mxu0 %v4374
      %4462 = vmatprep.mubr.bf16.mxu0 %v4156
      %4463 = vmatmul.mubr.bf16.gmra.mxu0 %v4155
      %v4464 = vpop.f32.mrf.mxu0
      %v4465 = vadd.f32 %v4236, %v4464
      %v4466 = vpop.f32.mrf.mxu0
      %v4467 = vpop.f32.mrf.mxu0
      %v4468 = vadd.f32 %v4236, %v4467
      %v4469 = vpop.f32.mrf.mxu0
      %4470 = vmatprep.mubr.bf16.mxu0 %v4160
      %4471 = vmatmul.mubr.bf16.gmra.mxu0 %v4159
      %v4472 = vpop.f32.mrf.mxu0
      %v4473 = vadd.f32 %v4236, %v4472
      %v4474 = vpop.f32.mrf.mxu0
      %v4475 = vpop.f32.mrf.mxu0
      %v4476 = vadd.f32 %v4236, %v4475
      %v4477 = vpop.f32.mrf.mxu0
      %4478 = vmatprep.mubr.bf16.mxu0 %v4164
      %4479 = vmatmul.mubr.bf16.gmra.mxu0 %v4163
      %v4480 = vpop.f32.mrf.mxu0
      %v4481 = vadd.f32 %v4236, %v4480
      %v4482 = vpop.f32.mrf.mxu0
      %v4483 = vpop.f32.mrf.mxu0
      %v4484 = vadd.f32 %v4236, %v4483
      %v4485 = vpop.f32.mrf.mxu0
      %4486 = vdwg.mxu0
      %4487 = vmatprep.subr.bf16.mxu0 0
      %4488 = vmatpush1.bf16.msra.mxu0 %v4389
      %4489 = vmatprep.subr.bf16.mxu0 0
      %4490 = vmatpush1.bf16.msra.mxu0 %v4388
      %4491 = vmatprep.subr.bf16.mxu0 0
      %4492 = vmatpush1.bf16.msra.mxu0 %v4387
      %4493 = vmatprep.subr.bf16.mxu0 0
      %4494 = vmatpush1.bf16.msra.mxu0 %v4386
      %4495 = vmatprep.subr.bf16.mxu0 0
      %4496 = vmatpush1.bf16.msra.mxu0 %v4385
      %4497 = vmatprep.subr.bf16.mxu0 0
      %4498 = vmatpush1.bf16.msra.mxu0 %v4384
      %4499 = vmatprep.subr.bf16.mxu0 0
      %4500 = vmatpush1.bf16.msra.mxu0 %v4383
      %4501 = vmatprep.subr.bf16.mxu0 0
      %4502 = vmatpush1.bf16.msra.mxu0 %v4382
      %4503 = vmatprep.subr.bf16.mxu0 0
      %4504 = vmatpush2.bf16.msra.mxu0 %v4397
      %4505 = vmatprep.subr.bf16.mxu0 0
      %4506 = vmatpush2.bf16.msra.mxu0 %v4396
      %4507 = vmatprep.subr.bf16.mxu0 0
      %4508 = vmatpush2.bf16.msra.mxu0 %v4395
      %4509 = vmatprep.subr.bf16.mxu0 0
      %4510 = vmatpush2.bf16.msra.mxu0 %v4394
      %4511 = vmatprep.subr.bf16.mxu0 0
      %4512 = vmatpush2.bf16.msra.mxu0 %v4393
      %4513 = vmatprep.subr.bf16.mxu0 0
      %4514 = vmatpush2.bf16.msra.mxu0 %v4392
      %4515 = vmatprep.subr.bf16.mxu0 0
      %4516 = vmatpush2.bf16.msra.mxu0 %v4391
      %4517 = vmatprep.subr.bf16.mxu0 0
      %4518 = vmatpush2.bf16.msra.mxu0 %v4390
      %4519 = vmatprep.mubr.bf16.mxu0 %v4158
      %4520 = vmatmul.mubr.bf16.gmra.mxu0 %v4157
      %v4521 = vpop.f32.mrf.mxu0
      %v4522 = vadd.f32 %v4465, %v4521
      %v4523 = vpop.f32.mrf.mxu0
      %v4524 = vpop.f32.mrf.mxu0
      %v4525 = vadd.f32 %v4468, %v4524
      %v4526 = vpop.f32.mrf.mxu0
      %4527 = vmatprep.mubr.bf16.mxu0 %v4162
      %4528 = vmatmul.mubr.bf16.gmra.mxu0 %v4161
      %v4529 = vpop.f32.mrf.mxu0
      %v4530 = vadd.f32 %v4473, %v4529
      %v4531 = vpop.f32.mrf.mxu0
      %v4532 = vpop.f32.mrf.mxu0
      %v4533 = vadd.f32 %v4476, %v4532
      %v4534 = vpop.f32.mrf.mxu0
      %4535 = vmatprep.mubr.bf16.mxu0 %v4166
      %4536 = vmatmul.mubr.bf16.gmra.mxu0 %v4165
      %v4537 = vpop.f32.mrf.mxu0
      %v4538 = vadd.f32 %v4481, %v4537
      %v4539 = vpop.f32.mrf.mxu0
      %v4540 = vpop.f32.mrf.mxu0
      %v4541 = vadd.f32 %v4484, %v4540
      %v4542 = vpop.f32.mrf.mxu0
      %4543 = vdwg.mxu0
      %v4544 = vadd.f32 %v3522, %v4522
      %v4545 = vadd.f32 %v3523, %v4525
      %v4546 = vadd.f32 %v3524, %v4530
      %v4547 = vadd.f32 %v3525, %v4533
      %v4548 = vadd.f32 %v3526, %v4538
      %v4549 = vadd.f32 %v3527, %v4541
      %4550 = vst [vmem:[#allocation2] sm:$0xff] %v4544
      %4551 = vst [vmem:[#allocation2 + $0x8] sm:$0xff] %v4545
      %4552 = vst [vmem:[#allocation2 + $0x10] sm:$0xff] %v4546
      %4553 = vst [vmem:[#allocation2 + $0x18] sm:$0xff] %v4547
      %4554 = vst [vmem:[#allocation2 + $0x20] sm:$0xff] %v4548
      %4555 = vst [vmem:[#allocation2 + $0x28] sm:$0xff] %v4549
      %p4556 = scmp.eq.s32.totalorder %s36, 1
      // Predicated region
      $region105: #{clip_image_extractor_forward.1} parent=99 // pred_check
        %p4557 = pneg %p4556
      $region106: #{clip_image_extractor_forward.1} parent=99 // pred_check_branch
        %4559 = sbr.rel (%p4557) target = $region108
      $region107: #{clip_image_extractor_forward.1} parent=99 // pred_region
        %v4560 = vld [vmem:[%s18] sm:$0x1]
        %v4561 = vld [vmem:[%s19] sm:$0x1]
        %4562 = vadd.xlane.f32.xlu0 %v4544
        %v4563 = vpop.xlane.xlu0 %4562
        %4564 = vadd.xlane.f32.xlu0 %v4545
        %v4565 = vpop.xlane.xlu0 %4564
        %4566 = vadd.xlane.f32.xlu0 %v4546
        %v4567 = vpop.xlane.xlu0 %4566
        %4568 = vadd.xlane.f32.xlu0 %v4547
        %v4569 = vpop.xlane.xlu0 %4568
        %4570 = vadd.xlane.f32.xlu0 %v4548
        %v4571 = vpop.xlane.xlu0 %4570
        %4572 = vadd.xlane.f32.xlu0 %v4549
        %v4573 = vpop.xlane.xlu0 %4572
        %v4574 = vmul.f32 %v4563, %v1162
        %v4575 = vmul.f32 %v4565, %v1162
        %v4576 = vmul.f32 %v4567, %v1162
        %v4577 = vmul.f32 %v4569, %v1162
        %v4578 = vmul.f32 %v4571, %v1162
        %v4579 = vmul.f32 %v4573, %v1162
        %v4580 = vsub.f32 %v4544, %v4574
        %v4581 = vsub.f32 %v4545, %v4575
        %v4582 = vsub.f32 %v4546, %v4576
        %v4583 = vsub.f32 %v4547, %v4577
        %v4584 = vsub.f32 %v4548, %v4578
        %v4585 = vsub.f32 %v4549, %v4579
        %v4586 = vmul.f32 %v4580, %v4580
        %v4587 = vmul.f32 %v4581, %v4581
        %v4588 = vmul.f32 %v4582, %v4582
        %v4589 = vmul.f32 %v4583, %v4583
        %v4590 = vmul.f32 %v4584, %v4584
        %v4591 = vmul.f32 %v4585, %v4585
        %4592 = vadd.xlane.f32.xlu0 %v4586
        %v4593 = vpop.xlane.xlu0 %4592
        %4594 = vadd.xlane.f32.xlu0 %v4587
        %v4595 = vpop.xlane.xlu0 %4594
        %4596 = vadd.xlane.f32.xlu0 %v4588
        %v4597 = vpop.xlane.xlu0 %4596
        %4598 = vadd.xlane.f32.xlu0 %v4589
        %v4599 = vpop.xlane.xlu0 %4598
        %4600 = vadd.xlane.f32.xlu0 %v4590
        %v4601 = vpop.xlane.xlu0 %4600
        %4602 = vadd.xlane.f32.xlu0 %v4591
        %v4603 = vpop.xlane.xlu0 %4602
        %v4604 = vmul.f32 %v4593, %v1162
        %v4605 = vmul.f32 %v4595, %v1162
        %v4606 = vmul.f32 %v4597, %v1162
        %v4607 = vmul.f32 %v4599, %v1162
        %v4608 = vmul.f32 %v4601, %v1162
        %v4609 = vmul.f32 %v4603, %v1162
        %v4610 = vadd.f32 %v4604, 1e-05
        %v4611 = vadd.f32 %v4605, 1e-05
        %v4612 = vadd.f32 %v4606, 1e-05
        %v4613 = vadd.f32 %v4607, 1e-05
        %v4614 = vadd.f32 %v4608, 1e-05
        %v4615 = vadd.f32 %v4609, 1e-05
        %v4616 = vrsqrt.pop %v4610
        %v4617 = vrsqrt.pop %v4611
        %v4618 = vrsqrt.pop %v4612
        %v4619 = vrsqrt.pop %v4613
        %v4620 = vrsqrt.pop %v4614
        %v4621 = vrsqrt.pop %v4615
        %v4622 = vmul.f32 %v4580, %v4616
        %v4623 = vmul.f32 %v4581, %v4617
        %v4624 = vmul.f32 %v4582, %v4618
        %v4625 = vmul.f32 %v4583, %v4619
        %v4626 = vmul.f32 %v4584, %v4620
        %v4627 = vmul.f32 %v4585, %v4621
        %v4629 = vlaneseq
        %v4630 = vshrl.u32 %v4629, 7
        %v4631 = vsub.s32 0, %v4630
        %v4632 = vrot.slane %v4560, %v4631
        %v4634 = vmul.f32 %v4622, %v4632
        %v4635 = vmul.f32 %v4623, %v4632
        %v4636 = vmul.f32 %v4624, %v4632
        %v4637 = vmul.f32 %v4625, %v4632
        %v4638 = vmul.f32 %v4626, %v4632
        %v4639 = vmul.f32 %v4627, %v4632
        %v4641 = vlaneseq
        %v4642 = vshrl.u32 %v4641, 7
        %v4643 = vsub.s32 0, %v4642
        %v4644 = vrot.slane %v4561, %v4643
        %v4646 = vadd.f32 %v4634, %v4644
        %v4647 = vadd.f32 %v4635, %v4644
        %v4648 = vadd.f32 %v4636, %v4644
        %v4649 = vadd.f32 %v4637, %v4644
        %v4650 = vadd.f32 %v4638, %v4644
        %v4651 = vadd.f32 %v4639, %v4644
        %4652 = vst [vmem:[%s846] sm:$0xff] %v4646
        %4653 = vst [vmem:[%s846 + $0x8] sm:$0xff] %v4647
        %4654 = vst [vmem:[%s846 + $0x10] sm:$0xff] %v4648
        %4655 = vst [vmem:[%s846 + $0x18] sm:$0xff] %v4649
        %4656 = vst [vmem:[%s846 + $0x20] sm:$0xff] %v4650
        %4657 = vst [vmem:[%s846 + $0x28] sm:$0xff] %v4651
      $region108: #{clip_image_extractor_forward.1} parent=99 // pred_fallthru
        _
      %s4658 = smul.u32 2, %s35
      %p4659 = scmp.lt.s32.totalorder %s4658, 3
      %s4660 = scalar_select %p4659, %s4658, 3
      %s4661 = smul.addr %s4660, 3
      %s4662 = smul.addr %s4661, 8
      %s4663 = scalar_lea.vmem %s20, %s4662
      // Predicated region
      $region109: #{clip_image_extractor_forward.1} parent=99 // pred_check
        %p4664 = pneg %p546
      $region110: #{clip_image_extractor_forward.1} parent=99 // pred_check_branch
        %4666 = sbr.rel (%p4664) target = $region112
      $region111: #{clip_image_extractor_forward.1} parent=99 // pred_region
        %s4667 = smul.u32 2, %s35
      $region112: #{clip_image_extractor_forward.1} parent=99 // pred_fallthru
        _
    $region100: #{clip_image_extractor_forward.1} parent=5 // pred_fallthru
      _
    %p4668 = scmp.le.s32.totalorder 2, %s26
    // Predicated region
    $region113: #{clip_image_extractor_forward.1} parent=5 // pred_check
      %p4669 = pneg %p4668
    $region114: #{clip_image_extractor_forward.1} parent=5 // pred_check_branch
      %4671 = sbr.rel (%p4669) target = $region116
    $region115: #{clip_image_extractor_forward.1} parent=5 // pred_region
      %s4672 = ssub.s32 %s26, 2
      // Predicated region
      $region117: #{clip_image_extractor_forward.1} parent=115 // pred_check
        %p4673 = pneg %p552
      $region118: #{clip_image_extractor_forward.1} parent=115 // pred_check_branch
        %4675 = sbr.rel (%p4673) target = $region120
      $region119: #{clip_image_extractor_forward.1} parent=115 // pred_region
        %s4676 = smul.u32 2, %s37
        %p4677 = scmp.lt.s32.totalorder %s4676, 3
        %s4678 = scalar_select %p4677, %s4676, 3
        %s4679 = smul.addr %s4678, 3
        %s4680 = smul.addr %s4679, 8
        %s4681 = scalar_lea.vmem %s20, %s4680
      $region120: #{clip_image_extractor_forward.1} parent=115 // pred_fallthru
        _
    $region116: #{clip_image_extractor_forward.1} parent=5 // pred_fallthru
      _
  $region6: #{clip_image_extractor_forward.1} parent=0 // loop_footer
    %s30 = sadd.s32 1, %s26
  $region7: #{clip_image_extractor_forward.1} parent=0 // loop_footer_branch
    %25 = sbr.rel target = $region3
  $region8: #{clip_image_extractor_forward.1} parent=0 // loop_exit
    _

</llo_original>
